<compile_context>
chip_gen: v5e
topology: v5e:2x2
jax: 0.10.0
libtpu: 0.0.40
codegen_flags: <defaults>
</compile_context>

<pallas_src>
import jax
import jax.numpy as jnp
from jax import lax
from jax.experimental import pallas as pl
from jax.experimental.pallas import tpu as pltpu

_MXU_DTYPE = jnp.bfloat16   # MXU operand dtype; accumulation is always f32.


def _round_up(n, m):
    return ((n + m - 1) // m) * m


# ----------------------- host-side weight preparation ------------------------

def _band_stack(w, w_in, w_out):
    """Banded conv matrices, one per kernel row.

    w: (cout, cin, 5, 5).  Returns (5, w_in*cin, w_out*cout) with
      out[i, wi*cin + ci, wo*cout + co] = w[co, ci, i, wi - wo]  if 0<=wi-wo<5
    so a VALID 5x5 conv is  sum_i  A_i @ out[i]  where
      A_i[(ho,b), wi*cin+ci] = act[b, ci, ho+i, wi].
    """
    cout, cin, k, _ = w.shape
    j = jnp.arange(w_in)[:, None] - jnp.arange(w_out)[None, :]       # (w_in, w_out)
    valid = (j >= 0) & (j < k)
    vals = w[:, :, :, jnp.clip(j, 0, k - 1)]                         # (cout,cin,5,w_in,w_out)
    vals = jnp.where(valid[None, None, None], vals, 0.0)
    vals = vals.transpose(2, 3, 1, 4, 0)                             # (5, w_in, cin, w_out, cout)
    return vals.reshape(k, w_in * cin, w_out * cout).astype(_MXU_DTYPE)


def _pool_mat(c, w_in):
    """(w_in*c, (w_in//2)*c) matrix: 2x downsample along W with weight 0.25."""
    w_out = w_in // 2
    m = (jnp.arange(w_in)[:, None] // 2 == jnp.arange(w_out)[None, :])
    m = m.astype(jnp.float32) * 0.25
    pm = jnp.einsum("wq,cd->wcqd", m, jnp.eye(c, dtype=jnp.float32))
    return pm.reshape(w_in * c, w_out * c).astype(_MXU_DTYPE)


# --------------------------------- kernel ------------------------------------

def _lenet5_kernel(x_ref, w1_ref, b1_ref, w2_ref, b2_ref, w3_ref, b3_ref,
                   p1_ref, p2_ref, l1w_ref, l1b_ref, l2w_ref, l2b_ref, out_ref):
    tb = x_ref.shape[1]                      # images in this batch tile
    f32 = jnp.float32

    x = x_ref[...].astype(_MXU_DTYPE)        # (32, tb, 32): (h, b, w), single channel

    # ---- conv1 (1->6, 32->28) + tanh: 5 banded matmuls, M = 28*tb -----------
    o1 = jnp.zeros((28 * tb, 6 * 28), f32)
    for i in range(5):
        lhs = x[i:i + 28].reshape(28 * tb, 32)              # rows=(ho,b), lanes=w
        o1 = o1 + jnp.dot(lhs, w1_ref[i], preferred_element_type=f32)
    o1 = jnp.tanh(o1 + b1_ref[...])                         # lanes = wo*6 + co

    # ---- 2x2 avg-pool: H pair-add on rows, W pairs via one pool matmul ------
    o1 = o1.reshape(14, 2, tb, 6 * 28)
    s1 = (o1[:, 0] + o1[:, 1]).reshape(14 * tb, 6 * 28).astype(_MXU_DTYPE)
    a1 = jnp.dot(s1, p1_ref[...], preferred_element_type=f32)
    a1 = a1.astype(_MXU_DTYPE).reshape(14, tb, 6 * 14)      # (h, b, w*6+c), bf16 once

    # ---- conv2 (6->16, 14->10) + tanh ---------------------------------------
    o2 = jnp.zeros((10 * tb, 16 * 10), f32)
    for i in range(5):
        lhs = a1[i:i + 10].reshape(10 * tb, 6 * 14)
        o2 = o2 + jnp.dot(lhs, w2_ref[i], preferred_element_type=f32)
    o2 = jnp.tanh(o2 + b2_ref[...])

    o2 = o2.reshape(5, 2, tb, 16 * 10)
    s2 = (o2[:, 0] + o2[:, 1]).reshape(5 * tb, 16 * 10).astype(_MXU_DTYPE)
    a2 = jnp.dot(s2, p2_ref[...], preferred_element_type=f32)
    a2 = a2.astype(_MXU_DTYPE).reshape(5, tb, 16 * 5)       # (h, b, w*16+c)

    # ---- conv3 (16->120, 5->1) + tanh ---------------------------------------
    f3 = jnp.zeros((tb, 120), f32)
    for i in range(5):
        f3 = f3 + jnp.dot(a2[i], w3_ref[i], preferred_element_type=f32)
    f3 = jnp.tanh(f3 + b3_ref[...]).astype(_MXU_DTYPE)      # (tb, 120)

    # ---- batched FC layers ---------------------------------------------------
    h = jnp.tanh(jnp.dot(f3, l1w_ref[...], preferred_element_type=f32)
                 + l1b_ref[...])
    y = jnp.dot(h.astype(_MXU_DTYPE), l2w_ref[...],
                preferred_element_type=f32) + l2b_ref[...]  # (tb, 128)
    out_ref[...] = y


# ------------------------------ host wrapper ---------------------------------

@jax.jit
def lenet5_forward(params, x):
    """x: (B, 1, 32, 32) NCHW float32 -> logits (B, 62)."""
    B = x.shape[0]
    assert x.shape[1:] == (1, 32, 32)

    TB = 128 if B >= 128 else _round_up(B, 8)     # images per grid step
    B_pad = _round_up(B, TB)

    xi = x.reshape(B, 32, 32).astype(jnp.float32)
    if B_pad != B:
        xi = jnp.pad(xi, ((0, B_pad - B), (0, 0), (0, 0)))
    x_t = xi.transpose(1, 0, 2)                   # (32, B_pad, 32): (h, b, w)

    w1s = _band_stack(params["conv1_w"], 32, 28)  # (5,  32, 168)
    b1v = jnp.tile(params["conv1_b"], 28).reshape(1, 168).astype(jnp.float32)
    w2s = _band_stack(params["conv2_w"], 14, 10)  # (5,  84, 160)
    b2v = jnp.tile(params["conv2_b"], 10).reshape(1, 160).astype(jnp.float32)
    w3s = _band_stack(params["conv3_w"], 5, 1)    # (5,  80, 120)
    b3v = params["conv3_b"].reshape(1, 120).astype(jnp.float32)
    p1 = _pool_mat(6, 28)                         # (168, 84)
    p2 = _pool_mat(16, 10)                        # (160, 80)
    l1w = params["linear1_w"].T.astype(_MXU_DTYPE)               # (120, 84)
    l1b = params["linear1_b"].reshape(1, 84).astype(jnp.float32)
    l2w = jnp.zeros((84, 128), _MXU_DTYPE).at[:, :62].set(
        params["linear2_w"].T.astype(_MXU_DTYPE))                # lane-padded to 128
    l2b = jnp.zeros((1, 128), jnp.float32).at[0, :62].set(
        params["linear2_b"].astype(jnp.float32))

    weights = (w1s, b1v, w2s, b2v, w3s, b3v, p1, p2, l1w, l1b, l2w, l2b)

    def _resident(a):
        # Whole array, same block every step -> fetched once, stays in VMEM.
        return pl.BlockSpec(a.shape, lambda t, _n=a.ndim: (0,) * _n)

    out = pl.pallas_call(
        _lenet5_kernel,
        out_shape=jax.ShapeDtypeStruct((B_pad, 128), jnp.float32),
        grid_spec=pltpu.PrefetchScalarGridSpec(
            num_scalar_prefetch=0,
            grid=(B_pad // TB,),
            in_specs=[pl.BlockSpec((32, TB, 32), lambda t: (0, t, 0))]
                     + [_resident(w) for w in weights],
            out_specs=pl.BlockSpec((TB, 128), lambda t: (t, 0)),
        ),
        compiler_params=pltpu.CompilerParams(
            dimension_semantics=("parallel",),
            vmem_limit_bytes=48 * 1024 * 1024),
    )(x_t, *weights)

    return out[:B, :62]


# ------------------------------- parameters ----------------------------------

def init_params(key):
    ks = jax.random.split(key, 10)

    def u(k, shape, fan_in):
        bound = 1.0 / float(fan_in) ** 0.5
        return jax.random.uniform(k, shape, jnp.float32, -bound, bound)

    return {
        "conv1_w": u(ks[0], (6, 1, 5, 5), 1 * 5 * 5),
        "conv1_b": u(ks[1], (6,), 1 * 5 * 5),
        "conv2_w": u(ks[2], (16, 6, 5, 5), 6 * 5 * 5),
        "conv2_b": u(ks[3], (16,), 6 * 5 * 5),
        "conv3_w": u(ks[4], (120, 16, 5, 5), 16 * 5 * 5),
        "conv3_b": u(ks[5], (120,), 16 * 5 * 5),
        "linear1_w": u(ks[6], (84, 120), 120),
        "linear1_b": u(ks[7], (84,), 120),
        "linear2_w": u(ks[8], (62, 84), 84),
        "linear2_b": u(ks[9], (62,), 84),
    }


# ------------------------ pure-JAX reference (check) -------------------------

def _reference_forward(params, x):
    dn = ("NCHW", "OIHW", "NCHW")

    def conv(v, w, b):
        y = lax.conv_general_dilated(v, w, (1, 1), "VALID",
                                     dimension_numbers=dn)
        return jnp.tanh(y + b[None, :, None, None])

    def pool(v):
        B, C, H, W = v.shape
        return v.reshape(B, C, H // 2, 2, W // 2, 2).mean(axis=(3, 5))

    v = pool(conv(x, params["conv1_w"], params["conv1_b"]))
    v = pool(conv(v, params["conv2_w"], params["conv2_b"]))
    v = conv(v, params["conv3_w"], params["conv3_b"]).reshape(x.shape[0], -1)
    v = jnp.tanh(v @ params["linear1_w"].T + params["linear1_b"])
    return v @ params["linear2_w"].T + params["linear2_b"]


# ----------------------------------- main ------------------------------------

if __name__ == "__main__":
    key = jax.random.PRNGKey(0)
    pkey, xkey = jax.random.split(key)
    params = init_params(pkey)
    # LeNet-5 needs 32x32 single-channel input so conv3 reduces 5x5 -> 1x1.
    x = jax.random.normal(xkey, (2, 1, 32, 32), dtype=jnp.float32)

    out = lenet5_forward(params, x)
    jax.block_until_ready(out)
    assert out.shape == (2, 62) and out.dtype == jnp.float32

    ref = jax.jit(_reference_forward)(params, x)
    max_err = float(jnp.max(jnp.abs(out - ref)))
    assert max_err < 5e-2, f"mismatch vs reference: max_err={max_err}"

    print("KERNEL_OK")
</pallas_src>

<mosaic_0001>
module attributes {stable_mosaic.version = 11 : i64} {
  func.func @_lenet5_kernel(%arg0: i32, %arg1: memref<32x8x32xf32, #tpu.memory_space<vmem>>, %arg2: memref<5x32x168xbf16, #tpu.memory_space<vmem>>, %arg3: memref<1x168xf32, #tpu.memory_space<vmem>>, %arg4: memref<5x84x160xbf16, #tpu.memory_space<vmem>>, %arg5: memref<1x160xf32, #tpu.memory_space<vmem>>, %arg6: memref<5x80x120xbf16, #tpu.memory_space<vmem>>, %arg7: memref<1x120xf32, #tpu.memory_space<vmem>>, %arg8: memref<168x84xbf16, #tpu.memory_space<vmem>>, %arg9: memref<160x80xbf16, #tpu.memory_space<vmem>>, %arg10: memref<120x84xbf16, #tpu.memory_space<vmem>>, %arg11: memref<1x84xf32, #tpu.memory_space<vmem>>, %arg12: memref<84x128xbf16, #tpu.memory_space<vmem>>, %arg13: memref<1x128xf32, #tpu.memory_space<vmem>>, %arg14: memref<8x128xf32, #tpu.memory_space<vmem>>) attributes {dimension_semantics = [#tpu.dimension_semantics<parallel>], iteration_bounds = array<i64: 1>, scalar_prefetch = 0 : i64, scratch_operands = 0 : i64, tpu.core_type = #tpu.core_type<tc>, window_params = [{transform_indices = @transform_0, window_bounds = array<i64: 32, 8, 32>}, {pipeline_mode = #tpu.pipeline_mode<synchronous>, transform_indices = @transform_1, window_bounds = array<i64: 5, 32, 168>}, {pipeline_mode = #tpu.pipeline_mode<synchronous>, transform_indices = @transform_2, window_bounds = array<i64: 1, 168>}, {pipeline_mode = #tpu.pipeline_mode<synchronous>, transform_indices = @transform_3, window_bounds = array<i64: 5, 84, 160>}, {pipeline_mode = #tpu.pipeline_mode<synchronous>, transform_indices = @transform_4, window_bounds = array<i64: 1, 160>}, {pipeline_mode = #tpu.pipeline_mode<synchronous>, transform_indices = @transform_5, window_bounds = array<i64: 5, 80, 120>}, {pipeline_mode = #tpu.pipeline_mode<synchronous>, transform_indices = @transform_6, window_bounds = array<i64: 1, 120>}, {pipeline_mode = #tpu.pipeline_mode<synchronous>, transform_indices = @transform_7, window_bounds = array<i64: 168, 84>}, {pipeline_mode = #tpu.pipeline_mode<synchronous>, transform_indices = @transform_8, window_bounds = array<i64: 160, 80>}, {pipeline_mode = #tpu.pipeline_mode<synchronous>, transform_indices = @transform_9, window_bounds = array<i64: 120, 84>}, {pipeline_mode = #tpu.pipeline_mode<synchronous>, transform_indices = @transform_10, window_bounds = array<i64: 1, 84>}, {pipeline_mode = #tpu.pipeline_mode<synchronous>, transform_indices = @transform_11, window_bounds = array<i64: 84, 128>}, {pipeline_mode = #tpu.pipeline_mode<synchronous>, transform_indices = @transform_12, window_bounds = array<i64: 1, 128>}, {transform_indices = @transform_13, window_bounds = array<i64: 8, 128>}]} {
    %c0 = arith.constant 0 : index
    %c0_0 = arith.constant 0 : index
    %c0_1 = arith.constant 0 : index
    %0 = vector.load %arg1[%c0, %c0_0, %c0_1] : memref<32x8x32xf32, #tpu.memory_space<vmem>>, vector<32x8x32xf32>
    %1 = arith.truncf %0 : vector<32x8x32xf32> to vector<32x8x32xbf16>
    %cst = arith.constant 0.000000e+00 : f32
    %2 = vector.broadcast %cst : f32 to vector<224x168xf32>
    %3 = vector.extract_strided_slice %1 {offsets = [0, 0, 0], sizes = [28, 8, 32], strides = [1, 1, 1]} : vector<32x8x32xbf16> to vector<28x8x32xbf16>
    %4 = vector.shape_cast %3 : vector<28x8x32xbf16> to vector<224x32xbf16>
    %c0_2 = arith.constant 0 : index
    %c0_3 = arith.constant 0 : index
    %c0_4 = arith.constant 0 : index
    %5 = vector.load %arg2[%c0_2, %c0_3, %c0_4] : memref<5x32x168xbf16, #tpu.memory_space<vmem>>, vector<1x32x168xbf16>
    %6 = vector.shape_cast %5 : vector<1x32x168xbf16> to vector<32x168xbf16>
    %cst_5 = arith.constant dense<0.000000e+00> : vector<224x168xf32>
    %7 = tpu.matmul %4, %6, %cst_5 {dimension_numbers = #tpu.dot_dimension_numbers<[1], [0], [0], [1], [0, 0, 1, 1], [], []>} : vector<224x32xbf16>, vector<32x168xbf16>, vector<224x168xf32> -> vector<224x168xf32>
    %8 = arith.addf %2, %7 : vector<224x168xf32>
    %9 = vector.extract_strided_slice %1 {offsets = [1, 0, 0], sizes = [28, 8, 32], strides = [1, 1, 1]} : vector<32x8x32xbf16> to vector<28x8x32xbf16>
    %10 = vector.shape_cast %9 : vector<28x8x32xbf16> to vector<224x32xbf16>
    %c1 = arith.constant 1 : index
    %c0_6 = arith.constant 0 : index
    %c0_7 = arith.constant 0 : index
    %11 = vector.load %arg2[%c1, %c0_6, %c0_7] : memref<5x32x168xbf16, #tpu.memory_space<vmem>>, vector<1x32x168xbf16>
    %12 = vector.shape_cast %11 : vector<1x32x168xbf16> to vector<32x168xbf16>
    %cst_8 = arith.constant dense<0.000000e+00> : vector<224x168xf32>
    %13 = tpu.matmul %10, %12, %cst_8 {dimension_numbers = #tpu.dot_dimension_numbers<[1], [0], [0], [1], [0, 0, 1, 1], [], []>} : vector<224x32xbf16>, vector<32x168xbf16>, vector<224x168xf32> -> vector<224x168xf32>
    %14 = arith.addf %8, %13 : vector<224x168xf32>
    %15 = vector.extract_strided_slice %1 {offsets = [2, 0, 0], sizes = [28, 8, 32], strides = [1, 1, 1]} : vector<32x8x32xbf16> to vector<28x8x32xbf16>
    %16 = vector.shape_cast %15 : vector<28x8x32xbf16> to vector<224x32xbf16>
    %c2 = arith.constant 2 : index
    %c0_9 = arith.constant 0 : index
    %c0_10 = arith.constant 0 : index
    %17 = vector.load %arg2[%c2, %c0_9, %c0_10] : memref<5x32x168xbf16, #tpu.memory_space<vmem>>, vector<1x32x168xbf16>
    %18 = vector.shape_cast %17 : vector<1x32x168xbf16> to vector<32x168xbf16>
    %cst_11 = arith.constant dense<0.000000e+00> : vector<224x168xf32>
    %19 = tpu.matmul %16, %18, %cst_11 {dimension_numbers = #tpu.dot_dimension_numbers<[1], [0], [0], [1], [0, 0, 1, 1], [], []>} : vector<224x32xbf16>, vector<32x168xbf16>, vector<224x168xf32> -> vector<224x168xf32>
    %20 = arith.addf %14, %19 : vector<224x168xf32>
    %21 = vector.extract_strided_slice %1 {offsets = [3, 0, 0], sizes = [28, 8, 32], strides = [1, 1, 1]} : vector<32x8x32xbf16> to vector<28x8x32xbf16>
    %22 = vector.shape_cast %21 : vector<28x8x32xbf16> to vector<224x32xbf16>
    %c3 = arith.constant 3 : index
    %c0_12 = arith.constant 0 : index
    %c0_13 = arith.constant 0 : index
    %23 = vector.load %arg2[%c3, %c0_12, %c0_13] : memref<5x32x168xbf16, #tpu.memory_space<vmem>>, vector<1x32x168xbf16>
    %24 = vector.shape_cast %23 : vector<1x32x168xbf16> to vector<32x168xbf16>
    %cst_14 = arith.constant dense<0.000000e+00> : vector<224x168xf32>
    %25 = tpu.matmul %22, %24, %cst_14 {dimension_numbers = #tpu.dot_dimension_numbers<[1], [0], [0], [1], [0, 0, 1, 1], [], []>} : vector<224x32xbf16>, vector<32x168xbf16>, vector<224x168xf32> -> vector<224x168xf32>
    %26 = arith.addf %20, %25 : vector<224x168xf32>
    %27 = vector.extract_strided_slice %1 {offsets = [4, 0, 0], sizes = [28, 8, 32], strides = [1, 1, 1]} : vector<32x8x32xbf16> to vector<28x8x32xbf16>
    %28 = vector.shape_cast %27 : vector<28x8x32xbf16> to vector<224x32xbf16>
    %c4 = arith.constant 4 : index
    %c0_15 = arith.constant 0 : index
    %c0_16 = arith.constant 0 : index
    %29 = vector.load %arg2[%c4, %c0_15, %c0_16] : memref<5x32x168xbf16, #tpu.memory_space<vmem>>, vector<1x32x168xbf16>
    %30 = vector.shape_cast %29 : vector<1x32x168xbf16> to vector<32x168xbf16>
    %cst_17 = arith.constant dense<0.000000e+00> : vector<224x168xf32>
    %31 = tpu.matmul %28, %30, %cst_17 {dimension_numbers = #tpu.dot_dimension_numbers<[1], [0], [0], [1], [0, 0, 1, 1], [], []>} : vector<224x32xbf16>, vector<32x168xbf16>, vector<224x168xf32> -> vector<224x168xf32>
    %32 = arith.addf %26, %31 : vector<224x168xf32>
    %c0_18 = arith.constant 0 : index
    %c0_19 = arith.constant 0 : index
    %33 = vector.load %arg3[%c0_18, %c0_19] : memref<1x168xf32, #tpu.memory_space<vmem>>, vector<1x168xf32>
    %34 = vector.broadcast %33 : vector<1x168xf32> to vector<224x168xf32>
    %35 = arith.addf %32, %34 : vector<224x168xf32>
    %36 = math.tanh %35 : vector<224x168xf32>
    %37 = vector.shape_cast %36 : vector<224x168xf32> to vector<14x2x8x168xf32>
    %38 = vector.extract_strided_slice %37 {offsets = [0, 0, 0, 0], sizes = [14, 1, 8, 168], strides = [1, 1, 1, 1]} : vector<14x2x8x168xf32> to vector<14x1x8x168xf32>
    %39 = vector.shape_cast %38 : vector<14x1x8x168xf32> to vector<14x8x168xf32>
    %40 = vector.extract_strided_slice %37 {offsets = [0, 1, 0, 0], sizes = [14, 1, 8, 168], strides = [1, 1, 1, 1]} : vector<14x2x8x168xf32> to vector<14x1x8x168xf32>
    %41 = vector.shape_cast %40 : vector<14x1x8x168xf32> to vector<14x8x168xf32>
    %42 = arith.addf %39, %41 : vector<14x8x168xf32>
    %43 = vector.shape_cast %42 : vector<14x8x168xf32> to vector<112x168xf32>
    %44 = arith.truncf %43 : vector<112x168xf32> to vector<112x168xbf16>
    %c0_20 = arith.constant 0 : index
    %c0_21 = arith.constant 0 : index
    %45 = vector.load %arg8[%c0_20, %c0_21] : memref<168x84xbf16, #tpu.memory_space<vmem>>, vector<168x84xbf16>
    %cst_22 = arith.constant dense<0.000000e+00> : vector<112x84xf32>
    %46 = tpu.matmul %44, %45, %cst_22 {dimension_numbers = #tpu.dot_dimension_numbers<[1], [0], [0], [1], [0, 0, 1, 1], [], []>} : vector<112x168xbf16>, vector<168x84xbf16>, vector<112x84xf32> -> vector<112x84xf32>
    %47 = arith.truncf %46 : vector<112x84xf32> to vector<112x84xbf16>
    %48 = vector.shape_cast %47 : vector<112x84xbf16> to vector<14x8x84xbf16>
    %cst_23 = arith.constant 0.000000e+00 : f32
    %49 = vector.broadcast %cst_23 : f32 to vector<80x160xf32>
    %50 = vector.extract_strided_slice %48 {offsets = [0, 0, 0], sizes = [10, 8, 84], strides = [1, 1, 1]} : vector<14x8x84xbf16> to vector<10x8x84xbf16>
    %51 = vector.shape_cast %50 : vector<10x8x84xbf16> to vector<80x84xbf16>
    %c0_24 = arith.constant 0 : index
    %c0_25 = arith.constant 0 : index
    %c0_26 = arith.constant 0 : index
    %52 = vector.load %arg4[%c0_24, %c0_25, %c0_26] : memref<5x84x160xbf16, #tpu.memory_space<vmem>>, vector<1x84x160xbf16>
    %53 = vector.shape_cast %52 : vector<1x84x160xbf16> to vector<84x160xbf16>
    %cst_27 = arith.constant dense<0.000000e+00> : vector<80x160xf32>
    %54 = tpu.matmul %51, %53, %cst_27 {dimension_numbers = #tpu.dot_dimension_numbers<[1], [0], [0], [1], [0, 0, 1, 1], [], []>} : vector<80x84xbf16>, vector<84x160xbf16>, vector<80x160xf32> -> vector<80x160xf32>
    %55 = arith.addf %49, %54 : vector<80x160xf32>
    %56 = vector.extract_strided_slice %48 {offsets = [1, 0, 0], sizes = [10, 8, 84], strides = [1, 1, 1]} : vector<14x8x84xbf16> to vector<10x8x84xbf16>
    %57 = vector.shape_cast %56 : vector<10x8x84xbf16> to vector<80x84xbf16>
    %c1_28 = arith.constant 1 : index
    %c0_29 = arith.constant 0 : index
    %c0_30 = arith.constant 0 : index
    %58 = vector.load %arg4[%c1_28, %c0_29, %c0_30] : memref<5x84x160xbf16, #tpu.memory_space<vmem>>, vector<1x84x160xbf16>
    %59 = vector.shape_cast %58 : vector<1x84x160xbf16> to vector<84x160xbf16>
    %cst_31 = arith.constant dense<0.000000e+00> : vector<80x160xf32>
    %60 = tpu.matmul %57, %59, %cst_31 {dimension_numbers = #tpu.dot_dimension_numbers<[1], [0], [0], [1], [0, 0, 1, 1], [], []>} : vector<80x84xbf16>, vector<84x160xbf16>, vector<80x160xf32> -> vector<80x160xf32>
    %61 = arith.addf %55, %60 : vector<80x160xf32>
    %62 = vector.extract_strided_slice %48 {offsets = [2, 0, 0], sizes = [10, 8, 84], strides = [1, 1, 1]} : vector<14x8x84xbf16> to vector<10x8x84xbf16>
    %63 = vector.shape_cast %62 : vector<10x8x84xbf16> to vector<80x84xbf16>
    %c2_32 = arith.constant 2 : index
    %c0_33 = arith.constant 0 : index
    %c0_34 = arith.constant 0 : index
    %64 = vector.load %arg4[%c2_32, %c0_33, %c0_34] : memref<5x84x160xbf16, #tpu.memory_space<vmem>>, vector<1x84x160xbf16>
    %65 = vector.shape_cast %64 : vector<1x84x160xbf16> to vector<84x160xbf16>
    %cst_35 = arith.constant dense<0.000000e+00> : vector<80x160xf32>
    %66 = tpu.matmul %63, %65, %cst_35 {dimension_numbers = #tpu.dot_dimension_numbers<[1], [0], [0], [1], [0, 0, 1, 1], [], []>} : vector<80x84xbf16>, vector<84x160xbf16>, vector<80x160xf32> -> vector<80x160xf32>
    %67 = arith.addf %61, %66 : vector<80x160xf32>
    %68 = vector.extract_strided_slice %48 {offsets = [3, 0, 0], sizes = [10, 8, 84], strides = [1, 1, 1]} : vector<14x8x84xbf16> to vector<10x8x84xbf16>
    %69 = vector.shape_cast %68 : vector<10x8x84xbf16> to vector<80x84xbf16>
    %c3_36 = arith.constant 3 : index
    %c0_37 = arith.constant 0 : index
    %c0_38 = arith.constant 0 : index
    %70 = vector.load %arg4[%c3_36, %c0_37, %c0_38] : memref<5x84x160xbf16, #tpu.memory_space<vmem>>, vector<1x84x160xbf16>
    %71 = vector.shape_cast %70 : vector<1x84x160xbf16> to vector<84x160xbf16>
    %cst_39 = arith.constant dense<0.000000e+00> : vector<80x160xf32>
    %72 = tpu.matmul %69, %71, %cst_39 {dimension_numbers = #tpu.dot_dimension_numbers<[1], [0], [0], [1], [0, 0, 1, 1], [], []>} : vector<80x84xbf16>, vector<84x160xbf16>, vector<80x160xf32> -> vector<80x160xf32>
    %73 = arith.addf %67, %72 : vector<80x160xf32>
    %74 = vector.extract_strided_slice %48 {offsets = [4, 0, 0], sizes = [10, 8, 84], strides = [1, 1, 1]} : vector<14x8x84xbf16> to vector<10x8x84xbf16>
    %75 = vector.shape_cast %74 : vector<10x8x84xbf16> to vector<80x84xbf16>
    %c4_40 = arith.constant 4 : index
    %c0_41 = arith.constant 0 : index
    %c0_42 = arith.constant 0 : index
    %76 = vector.load %arg4[%c4_40, %c0_41, %c0_42] : memref<5x84x160xbf16, #tpu.memory_space<vmem>>, vector<1x84x160xbf16>
    %77 = vector.shape_cast %76 : vector<1x84x160xbf16> to vector<84x160xbf16>
    %cst_43 = arith.constant dense<0.000000e+00> : vector<80x160xf32>
    %78 = tpu.matmul %75, %77, %cst_43 {dimension_numbers = #tpu.dot_dimension_numbers<[1], [0], [0], [1], [0, 0, 1, 1], [], []>} : vector<80x84xbf16>, vector<84x160xbf16>, vector<80x160xf32> -> vector<80x160xf32>
    %79 = arith.addf %73, %78 : vector<80x160xf32>
    %c0_44 = arith.constant 0 : index
    %c0_45 = arith.constant 0 : index
    %80 = vector.load %arg5[%c0_44, %c0_45] : memref<1x160xf32, #tpu.memory_space<vmem>>, vector<1x160xf32>
    %81 = vector.broadcast %80 : vector<1x160xf32> to vector<80x160xf32>
    %82 = arith.addf %79, %81 : vector<80x160xf32>
    %83 = math.tanh %82 : vector<80x160xf32>
    %84 = vector.shape_cast %83 : vector<80x160xf32> to vector<5x2x8x160xf32>
    %85 = vector.extract_strided_slice %84 {offsets = [0, 0, 0, 0], sizes = [5, 1, 8, 160], strides = [1, 1, 1, 1]} : vector<5x2x8x160xf32> to vector<5x1x8x160xf32>
    %86 = vector.shape_cast %85 : vector<5x1x8x160xf32> to vector<5x8x160xf32>
    %87 = vector.extract_strided_slice %84 {offsets = [0, 1, 0, 0], sizes = [5, 1, 8, 160], strides = [1, 1, 1, 1]} : vector<5x2x8x160xf32> to vector<5x1x8x160xf32>
    %88 = vector.shape_cast %87 : vector<5x1x8x160xf32> to vector<5x8x160xf32>
    %89 = arith.addf %86, %88 : vector<5x8x160xf32>
    %90 = vector.shape_cast %89 : vector<5x8x160xf32> to vector<40x160xf32>
    %91 = arith.truncf %90 : vector<40x160xf32> to vector<40x160xbf16>
    %c0_46 = arith.constant 0 : index
    %c0_47 = arith.constant 0 : index
    %92 = vector.load %arg9[%c0_46, %c0_47] : memref<160x80xbf16, #tpu.memory_space<vmem>>, vector<160x80xbf16>
    %cst_48 = arith.constant dense<0.000000e+00> : vector<40x80xf32>
    %93 = tpu.matmul %91, %92, %cst_48 {dimension_numbers = #tpu.dot_dimension_numbers<[1], [0], [0], [1], [0, 0, 1, 1], [], []>} : vector<40x160xbf16>, vector<160x80xbf16>, vector<40x80xf32> -> vector<40x80xf32>
    %94 = arith.truncf %93 : vector<40x80xf32> to vector<40x80xbf16>
    %95 = vector.shape_cast %94 : vector<40x80xbf16> to vector<5x8x80xbf16>
    %cst_49 = arith.constant 0.000000e+00 : f32
    %96 = vector.broadcast %cst_49 : f32 to vector<8x120xf32>
    %97 = vector.extract_strided_slice %95 {offsets = [0, 0, 0], sizes = [1, 8, 80], strides = [1, 1, 1]} : vector<5x8x80xbf16> to vector<1x8x80xbf16>
    %98 = vector.shape_cast %97 : vector<1x8x80xbf16> to vector<8x80xbf16>
    %c0_50 = arith.constant 0 : index
    %c0_51 = arith.constant 0 : index
    %c0_52 = arith.constant 0 : index
    %99 = vector.load %arg6[%c0_50, %c0_51, %c0_52] : memref<5x80x120xbf16, #tpu.memory_space<vmem>>, vector<1x80x120xbf16>
    %100 = vector.shape_cast %99 : vector<1x80x120xbf16> to vector<80x120xbf16>
    %cst_53 = arith.constant dense<0.000000e+00> : vector<8x120xf32>
    %101 = tpu.matmul %98, %100, %cst_53 {dimension_numbers = #tpu.dot_dimension_numbers<[1], [0], [0], [1], [0, 0, 1, 1], [], []>} : vector<8x80xbf16>, vector<80x120xbf16>, vector<8x120xf32> -> vector<8x120xf32>
    %102 = arith.addf %96, %101 : vector<8x120xf32>
    %103 = vector.extract_strided_slice %95 {offsets = [1, 0, 0], sizes = [1, 8, 80], strides = [1, 1, 1]} : vector<5x8x80xbf16> to vector<1x8x80xbf16>
    %104 = vector.shape_cast %103 : vector<1x8x80xbf16> to vector<8x80xbf16>
    %c1_54 = arith.constant 1 : index
    %c0_55 = arith.constant 0 : index
    %c0_56 = arith.constant 0 : index
    %105 = vector.load %arg6[%c1_54, %c0_55, %c0_56] : memref<5x80x120xbf16, #tpu.memory_space<vmem>>, vector<1x80x120xbf16>
    %106 = vector.shape_cast %105 : vector<1x80x120xbf16> to vector<80x120xbf16>
    %cst_57 = arith.constant dense<0.000000e+00> : vector<8x120xf32>
    %107 = tpu.matmul %104, %106, %cst_57 {dimension_numbers = #tpu.dot_dimension_numbers<[1], [0], [0], [1], [0, 0, 1, 1], [], []>} : vector<8x80xbf16>, vector<80x120xbf16>, vector<8x120xf32> -> vector<8x120xf32>
    %108 = arith.addf %102, %107 : vector<8x120xf32>
    %109 = vector.extract_strided_slice %95 {offsets = [2, 0, 0], sizes = [1, 8, 80], strides = [1, 1, 1]} : vector<5x8x80xbf16> to vector<1x8x80xbf16>
    %110 = vector.shape_cast %109 : vector<1x8x80xbf16> to vector<8x80xbf16>
    %c2_58 = arith.constant 2 : index
    %c0_59 = arith.constant 0 : index
    %c0_60 = arith.constant 0 : index
    %111 = vector.load %arg6[%c2_58, %c0_59, %c0_60] : memref<5x80x120xbf16, #tpu.memory_space<vmem>>, vector<1x80x120xbf16>
    %112 = vector.shape_cast %111 : vector<1x80x120xbf16> to vector<80x120xbf16>
    %cst_61 = arith.constant dense<0.000000e+00> : vector<8x120xf32>
    %113 = tpu.matmul %110, %112, %cst_61 {dimension_numbers = #tpu.dot_dimension_numbers<[1], [0], [0], [1], [0, 0, 1, 1], [], []>} : vector<8x80xbf16>, vector<80x120xbf16>, vector<8x120xf32> -> vector<8x120xf32>
    %114 = arith.addf %108, %113 : vector<8x120xf32>
    %115 = vector.extract_strided_slice %95 {offsets = [3, 0, 0], sizes = [1, 8, 80], strides = [1, 1, 1]} : vector<5x8x80xbf16> to vector<1x8x80xbf16>
    %116 = vector.shape_cast %115 : vector<1x8x80xbf16> to vector<8x80xbf16>
    %c3_62 = arith.constant 3 : index
    %c0_63 = arith.constant 0 : index
    %c0_64 = arith.constant 0 : index
    %117 = vector.load %arg6[%c3_62, %c0_63, %c0_64] : memref<5x80x120xbf16, #tpu.memory_space<vmem>>, vector<1x80x120xbf16>
    %118 = vector.shape_cast %117 : vector<1x80x120xbf16> to vector<80x120xbf16>
    %cst_65 = arith.constant dense<0.000000e+00> : vector<8x120xf32>
    %119 = tpu.matmul %116, %118, %cst_65 {dimension_numbers = #tpu.dot_dimension_numbers<[1], [0], [0], [1], [0, 0, 1, 1], [], []>} : vector<8x80xbf16>, vector<80x120xbf16>, vector<8x120xf32> -> vector<8x120xf32>
    %120 = arith.addf %114, %119 : vector<8x120xf32>
    %121 = vector.extract_strided_slice %95 {offsets = [4, 0, 0], sizes = [1, 8, 80], strides = [1, 1, 1]} : vector<5x8x80xbf16> to vector<1x8x80xbf16>
    %122 = vector.shape_cast %121 : vector<1x8x80xbf16> to vector<8x80xbf16>
    %c4_66 = arith.constant 4 : index
    %c0_67 = arith.constant 0 : index
    %c0_68 = arith.constant 0 : index
    %123 = vector.load %arg6[%c4_66, %c0_67, %c0_68] : memref<5x80x120xbf16, #tpu.memory_space<vmem>>, vector<1x80x120xbf16>
    %124 = vector.shape_cast %123 : vector<1x80x120xbf16> to vector<80x120xbf16>
    %cst_69 = arith.constant dense<0.000000e+00> : vector<8x120xf32>
    %125 = tpu.matmul %122, %124, %cst_69 {dimension_numbers = #tpu.dot_dimension_numbers<[1], [0], [0], [1], [0, 0, 1, 1], [], []>} : vector<8x80xbf16>, vector<80x120xbf16>, vector<8x120xf32> -> vector<8x120xf32>
    %126 = arith.addf %120, %125 : vector<8x120xf32>
    %c0_70 = arith.constant 0 : index
    %c0_71 = arith.constant 0 : index
    %127 = vector.load %arg7[%c0_70, %c0_71] : memref<1x120xf32, #tpu.memory_space<vmem>>, vector<1x120xf32>
    %128 = vector.broadcast %127 : vector<1x120xf32> to vector<8x120xf32>
    %129 = arith.addf %126, %128 : vector<8x120xf32>
    %130 = math.tanh %129 : vector<8x120xf32>
    %131 = arith.truncf %130 : vector<8x120xf32> to vector<8x120xbf16>
    %c0_72 = arith.constant 0 : index
    %c0_73 = arith.constant 0 : index
    %132 = vector.load %arg10[%c0_72, %c0_73] : memref<120x84xbf16, #tpu.memory_space<vmem>>, vector<120x84xbf16>
    %cst_74 = arith.constant dense<0.000000e+00> : vector<8x84xf32>
    %133 = tpu.matmul %131, %132, %cst_74 {dimension_numbers = #tpu.dot_dimension_numbers<[1], [0], [0], [1], [0, 0, 1, 1], [], []>} : vector<8x120xbf16>, vector<120x84xbf16>, vector<8x84xf32> -> vector<8x84xf32>
    %c0_75 = arith.constant 0 : index
    %c0_76 = arith.constant 0 : index
    %134 = vector.load %arg11[%c0_75, %c0_76] : memref<1x84xf32, #tpu.memory_space<vmem>>, vector<1x84xf32>
    %135 = vector.broadcast %134 : vector<1x84xf32> to vector<8x84xf32>
    %136 = arith.addf %133, %135 : vector<8x84xf32>
    %137 = math.tanh %136 : vector<8x84xf32>
    %138 = arith.truncf %137 : vector<8x84xf32> to vector<8x84xbf16>
    %c0_77 = arith.constant 0 : index
    %c0_78 = arith.constant 0 : index
    %139 = vector.load %arg12[%c0_77, %c0_78] : memref<84x128xbf16, #tpu.memory_space<vmem>>, vector<84x128xbf16>
    %cst_79 = arith.constant dense<0.000000e+00> : vector<8x128xf32>
    %140 = tpu.matmul %138, %139, %cst_79 {dimension_numbers = #tpu.dot_dimension_numbers<[1], [0], [0], [1], [0, 0, 1, 1], [], []>} : vector<8x84xbf16>, vector<84x128xbf16>, vector<8x128xf32> -> vector<8x128xf32>
    %c0_80 = arith.constant 0 : index
    %c0_81 = arith.constant 0 : index
    %141 = vector.load %arg13[%c0_80, %c0_81] : memref<1x128xf32, #tpu.memory_space<vmem>>, vector<1x128xf32>
    %142 = vector.broadcast %141 : vector<1x128xf32> to vector<8x128xf32>
    %143 = arith.addf %140, %142 : vector<8x128xf32>
    %c0_82 = arith.constant 0 : index
    %c0_83 = arith.constant 0 : index
    %144 = vector.load %arg14[%c0_82, %c0_83] : memref<8x128xf32, #tpu.memory_space<vmem>>, vector<8x128xf32>
    tpu.vector_store %arg14[%c0_82, %c0_83], %143 {strides = array<i32>} : memref<8x128xf32, #tpu.memory_space<vmem>>, vector<8x128xf32>,
    return
  }
  func.func @transform_0(%arg0: i32) -> (i32, i32, i32) {
    %c0_i32 = arith.constant 0 : i32
    %c0_i32_0 = arith.constant 0 : i32
    %c0_i32_1 = arith.constant 0 : i32
    return %c0_i32, %arg0, %c0_i32_0 : i32, i32, i32
  }
  func.func @transform_1(%arg0: i32) -> (i32, i32, i32) {
    %c0_i32 = arith.constant 0 : i32
    %c0_i32_0 = arith.constant 0 : i32
    %c0_i32_1 = arith.constant 0 : i32
    %c0_i32_2 = arith.constant 0 : i32
    return %c0_i32, %c0_i32_0, %c0_i32_1 : i32, i32, i32
  }
  func.func @transform_2(%arg0: i32) -> (i32, i32) {
    %c0_i32 = arith.constant 0 : i32
    %c0_i32_0 = arith.constant 0 : i32
    %c0_i32_1 = arith.constant 0 : i32
    return %c0_i32, %c0_i32_0 : i32, i32
  }
  func.func @transform_3(%arg0: i32) -> (i32, i32, i32) {
    %c0_i32 = arith.constant 0 : i32
    %c0_i32_0 = arith.constant 0 : i32
    %c0_i32_1 = arith.constant 0 : i32
    %c0_i32_2 = arith.constant 0 : i32
    return %c0_i32, %c0_i32_0, %c0_i32_1 : i32, i32, i32
  }
  func.func @transform_4(%arg0: i32) -> (i32, i32) {
    %c0_i32 = arith.constant 0 : i32
    %c0_i32_0 = arith.constant 0 : i32
    %c0_i32_1 = arith.constant 0 : i32
    return %c0_i32, %c0_i32_0 : i32, i32
  }
  func.func @transform_5(%arg0: i32) -> (i32, i32, i32) {
    %c0_i32 = arith.constant 0 : i32
    %c0_i32_0 = arith.constant 0 : i32
    %c0_i32_1 = arith.constant 0 : i32
    %c0_i32_2 = arith.constant 0 : i32
    return %c0_i32, %c0_i32_0, %c0_i32_1 : i32, i32, i32
  }
  func.func @transform_6(%arg0: i32) -> (i32, i32) {
    %c0_i32 = arith.constant 0 : i32
    %c0_i32_0 = arith.constant 0 : i32
    %c0_i32_1 = arith.constant 0 : i32
    return %c0_i32, %c0_i32_0 : i32, i32
  }
  func.func @transform_7(%arg0: i32) -> (i32, i32) {
    %c0_i32 = arith.constant 0 : i32
    %c0_i32_0 = arith.constant 0 : i32
    %c0_i32_1 = arith.constant 0 : i32
    return %c0_i32, %c0_i32_0 : i32, i32
  }
  func.func @transform_8(%arg0: i32) -> (i32, i32) {
    %c0_i32 = arith.constant 0 : i32
    %c0_i32_0 = arith.constant 0 : i32
    %c0_i32_1 = arith.constant 0 : i32
    return %c0_i32, %c0_i32_0 : i32, i32
  }
  func.func @transform_9(%arg0: i32) -> (i32, i32) {
    %c0_i32 = arith.constant 0 : i32
    %c0_i32_0 = arith.constant 0 : i32
    %c0_i32_1 = arith.constant 0 : i32
    return %c0_i32, %c0_i32_0 : i32, i32
  }
  func.func @transform_10(%arg0: i32) -> (i32, i32) {
    %c0_i32 = arith.constant 0 : i32
    %c0_i32_0 = arith.constant 0 : i32
    %c0_i32_1 = arith.constant 0 : i32
    return %c0_i32, %c0_i32_0 : i32, i32
  }
  func.func @transform_11(%arg0: i32) -> (i32, i32) {
    %c0_i32 = arith.constant 0 : i32
    %c0_i32_0 = arith.constant 0 : i32
    %c0_i32_1 = arith.constant 0 : i32
    return %c0_i32, %c0_i32_0 : i32, i32
  }
  func.func @transform_12(%arg0: i32) -> (i32, i32) {
    %c0_i32 = arith.constant 0 : i32
    %c0_i32_0 = arith.constant 0 : i32
    %c0_i32_1 = arith.constant 0 : i32
    return %c0_i32, %c0_i32_0 : i32, i32
  }
  func.func @transform_13(%arg0: i32) -> (i32, i32) {
    %c0_i32 = arith.constant 0 : i32
    %c0_i32_0 = arith.constant 0 : i32
    return %arg0, %c0_i32 : i32, i32
  }
}

</mosaic_0001>

<llo_original>
// kernel: tile.13
$region0: #{tile.13}
  #allocation0 [shape = 's32[1]{0}', space=sflag, size = 0x4, scoped, tag = 'scoped memory for tile.13']
  %s0 = inlined_call_operand.vmem [shape: f32[6], index: 0, kind: input, shape index: {}]
  %s1 = inlined_call_operand.vmem [shape: f32[28,6], index: 1, kind: output, shape index: {}]
  // Predicated region
  $region2: #{tile.13} parent=0 // pred_check
    _
  $region3: #{tile.13} parent=0 // pred_check_branch
    %3 = sbr.rel (0) target = $region5
  $region4: #{tile.13} parent=0 // pred_region
    _
  $region5: #{tile.13} parent=0 // pred_fallthru
    _
  %v4 = vld [vmem:[%s0] ss:$0 sm:$0xff]
  %5 = vst [vmem:[%s1] sm:$0xff] %v4
  %s6 = scalar_lea.vmem %s1, 8
  %7 = vst [vmem:[%s6] sm:$0xff] %v4
  %s8 = scalar_lea.vmem %s1, 16
  %9 = vst [vmem:[%s8] sm:$0xff] %v4
  %s10 = scalar_lea.vmem %s1, 24
  %11 = vst [vmem:[%s10] sm:$0xff] %v4

// kernel: tile.14
$region0: #{tile.14}
  %s0 = inlined_call_operand.vmem [shape: f32[28,6], index: 0, kind: input, shape index: {}]
  %s1 = inlined_call_operand.vmem [shape: f32[1,168], index: 1, kind: output, shape index: {}]
  $region1: #{tile.14} parent=0
    #allocation0 [shape = 'u8[8192]{0}', space=vmem, size = 0x2000, scoped, tag = 'scoped mem for output reshape']
    %v2 = vld [vmem:[%s0] sm:$0x1]
    %vm3 = vcmask 48128
    %4 = vst.msk [vmem:[#allocation0] sm:$0x1] %vm3, %v2
    %s5 = scalar_lea.vmem %s0, 21
    %v6 = vld [vmem:[%s5] sm:$0x1]
    %s7 = scalar_lea.vmem %s0, 21
    %v8 = vld [vmem:[%s7] sm:$0x1]
    %vm9 = vcmask 15360
    %v10 = vsel %vm9, %v8, %v6
    %11 = vrot.lane.b32.xlu0 %v10, 126
    %v12 = vpop.permute.xlu0 %11
    %vm13 = vcmask 31744
    %s14 = scalar_lea.vmem [#allocation0], 8
    %15 = vst.msk [vmem:[%s14] sm:$0x1] %vm13, %v12
    %vm16 = vcmask 1048560
    %17 = vst.msk [vmem:[#allocation0] sm:$0x1] %vm16, %v12
    %s18 = scalar_lea.vmem %s0, 20
    %v19 = vld [vmem:[%s18] sm:$0x1]
    %20 = vrot.lane.b32.xlu0 %v19, 120
    %v21 = vpop.permute.xlu0 %20
    %vm22 = vcmask 1032128
    %23 = vst.msk [vmem:[#allocation0] sm:$0x1] %vm22, %v21
    %s24 = scalar_lea.vmem %s0, 19
    %v25 = vld [vmem:[%s24] sm:$0x1]
    %26 = vrot.lane.b32.xlu0 %v25, 114
    %v27 = vpop.permute.xlu0 %26
    %vm28 = vcmask 982928
    %29 = vst.msk [vmem:[#allocation0] sm:$0x1] %vm28, %v27
    %s30 = scalar_lea.vmem %s0, 18
    %v31 = vld [vmem:[%s30] sm:$0x1]
    %32 = vrot.lane.b32.xlu0 %v31, 108
    %v33 = vpop.permute.xlu0 %32
    %vm34 = vcmask 933728
    %35 = vst.msk [vmem:[#allocation0] sm:$0x1] %vm34, %v33
    %s36 = scalar_lea.vmem %s0, 17
    %v37 = vld [vmem:[%s36] sm:$0x1]
    %38 = vrot.lane.b32.xlu0 %v37, 102
    %v39 = vpop.permute.xlu0 %38
    %vm40 = vcmask 884528
    %41 = vst.msk [vmem:[#allocation0] sm:$0x1] %vm40, %v39
    %s42 = scalar_lea.vmem %s0, 16
    %v43 = vld [vmem:[%s42] sm:$0x1]
    %44 = vrot.lane.b32.xlu0 %v43, 96
    %v45 = vpop.permute.xlu0 %44
    %vm46 = vcmask 835328
    %47 = vst.msk [vmem:[#allocation0] sm:$0x1] %vm46, %v45
    %s48 = scalar_lea.vmem %s0, 15
    %v49 = vld [vmem:[%s48] sm:$0x1]
    %50 = vrot.lane.b32.xlu0 %v49, 90
    %v51 = vpop.permute.xlu0 %50
    %vm52 = vcmask 786128
    %53 = vst.msk [vmem:[#allocation0] sm:$0x1] %vm52, %v51
    %s54 = scalar_lea.vmem %s0, 14
    %v55 = vld [vmem:[%s54] sm:$0x1]
    %56 = vrot.lane.b32.xlu0 %v55, 84
    %v57 = vpop.permute.xlu0 %56
    %vm58 = vcmask 736928
    %59 = vst.msk [vmem:[#allocation0] sm:$0x1] %vm58, %v57
    %s60 = scalar_lea.vmem %s0, 13
    %v61 = vld [vmem:[%s60] sm:$0x1]
    %62 = vrot.lane.b32.xlu0 %v61, 78
    %v63 = vpop.permute.xlu0 %62
    %vm64 = vcmask 687728
    %65 = vst.msk [vmem:[#allocation0] sm:$0x1] %vm64, %v63
    %s66 = scalar_lea.vmem %s0, 12
    %v67 = vld [vmem:[%s66] sm:$0x1]
    %68 = vrot.lane.b32.xlu0 %v67, 72
    %v69 = vpop.permute.xlu0 %68
    %vm70 = vcmask 638528
    %71 = vst.msk [vmem:[#allocation0] sm:$0x1] %vm70, %v69
    %s72 = scalar_lea.vmem %s0, 11
    %v73 = vld [vmem:[%s72] sm:$0x1]
    %74 = vrot.lane.b32.xlu0 %v73, 66
    %v75 = vpop.permute.xlu0 %74
    %vm76 = vcmask 589328
    %77 = vst.msk [vmem:[#allocation0] sm:$0x1] %vm76, %v75
    %s78 = scalar_lea.vmem %s0, 10
    %v79 = vld [vmem:[%s78] sm:$0x1]
    %80 = vrot.lane.b32.xlu0 %v79, 60
    %v81 = vpop.permute.xlu0 %80
    %vm82 = vcmask 540128
    %83 = vst.msk [vmem:[#allocation0] sm:$0x1] %vm82, %v81
    %s84 = scalar_lea.vmem %s0, 9
    %v85 = vld [vmem:[%s84] sm:$0x1]
    %86 = vrot.lane.b32.xlu0 %v85, 54
    %v87 = vpop.permute.xlu0 %86
    %vm88 = vcmask 490928
    %89 = vst.msk [vmem:[#allocation0] sm:$0x1] %vm88, %v87
    %s90 = scalar_lea.vmem %s0, 8
    %v91 = vld [vmem:[%s90] sm:$0x1]
    %92 = vrot.lane.b32.xlu0 %v91, 48
    %v93 = vpop.permute.xlu0 %92
    %vm94 = vcmask 441728
    %95 = vst.msk [vmem:[#allocation0] sm:$0x1] %vm94, %v93
    %s96 = scalar_lea.vmem %s0, 7
    %v97 = vld [vmem:[%s96] sm:$0x1]
    %98 = vrot.lane.b32.xlu0 %v97, 42
    %v99 = vpop.permute.xlu0 %98
    %vm100 = vcmask 392528
    %101 = vst.msk [vmem:[#allocation0] sm:$0x1] %vm100, %v99
    %s102 = scalar_lea.vmem %s0, 6
    %v103 = vld [vmem:[%s102] sm:$0x1]
    %104 = vrot.lane.b32.xlu0 %v103, 36
    %v105 = vpop.permute.xlu0 %104
    %vm106 = vcmask 343328
    %107 = vst.msk [vmem:[#allocation0] sm:$0x1] %vm106, %v105
    %s108 = scalar_lea.vmem %s0, 27
    %v109 = vld [vmem:[%s108] sm:$0x1]
    %110 = vrot.lane.b32.xlu0 %v109, 34
    %v111 = vpop.permute.xlu0 %110
    %vm112 = vcmask 326928
    %s113 = scalar_lea.vmem [#allocation0], 8
    %114 = vst.msk [vmem:[%s113] sm:$0x1] %vm112, %v111
    %s115 = scalar_lea.vmem %s0, 5
    %v116 = vld [vmem:[%s115] sm:$0x1]
    %117 = vrot.lane.b32.xlu0 %v116, 30
    %v118 = vpop.permute.xlu0 %117
    %vm119 = vcmask 294128
    %120 = vst.msk [vmem:[#allocation0] sm:$0x1] %vm119, %v118
    %s121 = scalar_lea.vmem %s0, 26
    %v122 = vld [vmem:[%s121] sm:$0x1]
    %123 = vrot.lane.b32.xlu0 %v122, 28
    %v124 = vpop.permute.xlu0 %123
    %vm125 = vcmask 277728
    %s126 = scalar_lea.vmem [#allocation0], 8
    %127 = vst.msk [vmem:[%s126] sm:$0x1] %vm125, %v124
    %s128 = scalar_lea.vmem %s0, 4
    %v129 = vld [vmem:[%s128] sm:$0x1]
    %130 = vrot.lane.b32.xlu0 %v129, 24
    %v131 = vpop.permute.xlu0 %130
    %vm132 = vcmask 244928
    %133 = vst.msk [vmem:[#allocation0] sm:$0x1] %vm132, %v131
    %s134 = scalar_lea.vmem %s0, 25
    %v135 = vld [vmem:[%s134] sm:$0x1]
    %136 = vrot.lane.b32.xlu0 %v135, 22
    %v137 = vpop.permute.xlu0 %136
    %vm138 = vcmask 228528
    %s139 = scalar_lea.vmem [#allocation0], 8
    %140 = vst.msk [vmem:[%s139] sm:$0x1] %vm138, %v137
    %s141 = scalar_lea.vmem %s0, 3
    %v142 = vld [vmem:[%s141] sm:$0x1]
    %143 = vrot.lane.b32.xlu0 %v142, 18
    %v144 = vpop.permute.xlu0 %143
    %vm145 = vcmask 195728
    %146 = vst.msk [vmem:[#allocation0] sm:$0x1] %vm145, %v144
    %s147 = scalar_lea.vmem %s0, 24
    %v148 = vld [vmem:[%s147] sm:$0x1]
    %149 = vrot.lane.b32.xlu0 %v148, 16
    %v150 = vpop.permute.xlu0 %149
    %vm151 = vcmask 179328
    %s152 = scalar_lea.vmem [#allocation0], 8
    %153 = vst.msk [vmem:[%s152] sm:$0x1] %vm151, %v150
    %s154 = scalar_lea.vmem %s0, 2
    %v155 = vld [vmem:[%s154] sm:$0x1]
    %156 = vrot.lane.b32.xlu0 %v155, 12
    %v157 = vpop.permute.xlu0 %156
    %vm158 = vcmask 146528
    %159 = vst.msk [vmem:[#allocation0] sm:$0x1] %vm158, %v157
    %s160 = scalar_lea.vmem %s0, 23
    %v161 = vld [vmem:[%s160] sm:$0x1]
    %162 = vrot.lane.b32.xlu0 %v161, 10
    %v163 = vpop.permute.xlu0 %162
    %vm164 = vcmask 130128
    %s165 = scalar_lea.vmem [#allocation0], 8
    %166 = vst.msk [vmem:[%s165] sm:$0x1] %vm164, %v163
    %s167 = scalar_lea.vmem %s0, 1
    %v168 = vld [vmem:[%s167] sm:$0x1]
    %169 = vrot.lane.b32.xlu0 %v168, 6
    %v170 = vpop.permute.xlu0 %169
    %vm171 = vcmask 97328
    %172 = vst.msk [vmem:[#allocation0] sm:$0x1] %vm171, %v170
    %s173 = scalar_lea.vmem %s0, 22
    %v174 = vld [vmem:[%s173] sm:$0x1]
    %175 = vrot.lane.b32.xlu0 %v174, 4
    %v176 = vpop.permute.xlu0 %175
    %vm177 = vcmask 80928
    %s178 = scalar_lea.vmem [#allocation0], 8
    %179 = vst.msk [vmem:[%s178] sm:$0x1] %vm177, %v176
    %s181 = ssub.s32 2, 1
    %v182 = vld [vmem:[#allocation0] sm:%s181]
    %s184 = ssub.s32 2, 1
    %185 = vst [vmem:[%s1] sm:%s184] %v182
    %s186 = scalar_lea.vmem [#allocation0], 8
    %v187 = vld [vmem:[%s186] sm:%s181]
    %s189 = ssub.s32 2, 1
    %s190 = scalar_lea.vmem %s1, 1
    %191 = vst [vmem:[%s190] sm:%s189] %v187

// kernel: tile.18
$region0: #{tile.18}
  #allocation0 [shape = 's32[1]{0}', space=sflag, size = 0x4, scoped, tag = 'scoped memory for tile.18']
  %s0 = inlined_call_operand.vmem [shape: f32[16], index: 0, kind: input, shape index: {}]
  %s1 = inlined_call_operand.vmem [shape: f32[10,16], index: 1, kind: output, shape index: {}]
  // Predicated region
  $region2: #{tile.18} parent=0 // pred_check
    _
  $region3: #{tile.18} parent=0 // pred_check_branch
    %3 = sbr.rel (0) target = $region5
  $region4: #{tile.18} parent=0 // pred_region
    _
  $region5: #{tile.18} parent=0 // pred_fallthru
    _
  %v4 = vld [vmem:[%s0] ss:$0 sm:$0xff]
  %5 = vst [vmem:[%s1] sm:$0xff] %v4
  %s6 = scalar_lea.vmem %s1, 8
  %7 = vst [vmem:[%s6] sm:$0xff] %v4

// kernel: tile.19
$region0: #{tile.19}
  %s0 = inlined_call_operand.vmem [shape: f32[10,16], index: 0, kind: input, shape index: {}]
  %s1 = inlined_call_operand.vmem [shape: f32[1,160], index: 1, kind: output, shape index: {}]
  $region1: #{tile.19} parent=0
    #allocation0 [shape = 'u8[8192]{0}', space=vmem, size = 0x2000, scoped, tag = 'scoped mem for output reshape']
    %s2 = smov 3
    %v3 = vld [vmem:[%s0] ss:$8 sm:%s2]
    %vm4 = vcmask 130048
    %5 = vst.msk [vmem:[#allocation0] ss:$8 sm:$0x3] %vm4, %v3
    %s6 = scalar_lea.vmem %s0, 7
    %v7 = vld [vmem:[%s6] sm:$0x1]
    %8 = vrot.lane.b32.xlu0 %v7, 112
    %v9 = vpop.permute.xlu0 %8
    %vm10 = vcmask 1048448
    %11 = vst.msk [vmem:[#allocation0] sm:$0x1] %vm10, %v9
    %s12 = scalar_lea.vmem %s0, 6
    %v13 = vld [vmem:[%s12] sm:$0x1]
    %14 = vrot.lane.b32.xlu0 %v13, 96
    %v15 = vpop.permute.xlu0 %14
    %vm16 = vcmask 917248
    %17 = vst.msk [vmem:[#allocation0] sm:$0x1] %vm16, %v15
    %s18 = scalar_lea.vmem %s0, 5
    %v19 = vld [vmem:[%s18] sm:$0x1]
    %20 = vrot.lane.b32.xlu0 %v19, 80
    %v21 = vpop.permute.xlu0 %20
    %vm22 = vcmask 786048
    %23 = vst.msk [vmem:[#allocation0] sm:$0x1] %vm22, %v21
    %s24 = scalar_lea.vmem %s0, 4
    %v25 = vld [vmem:[%s24] sm:$0x1]
    %26 = vrot.lane.b32.xlu0 %v25, 64
    %v27 = vpop.permute.xlu0 %26
    %vm28 = vcmask 654848
    %29 = vst.msk [vmem:[#allocation0] sm:$0x1] %vm28, %v27
    %s30 = scalar_lea.vmem %s0, 3
    %v31 = vld [vmem:[%s30] sm:$0x1]
    %32 = vrot.lane.b32.xlu0 %v31, 48
    %v33 = vpop.permute.xlu0 %32
    %vm34 = vcmask 523648
    %35 = vst.msk [vmem:[#allocation0] sm:$0x1] %vm34, %v33
    %s36 = scalar_lea.vmem %s0, 2
    %v37 = vld [vmem:[%s36] sm:$0x1]
    %38 = vrot.lane.b32.xlu0 %v37, 32
    %v39 = vpop.permute.xlu0 %38
    %vm40 = vcmask 392448
    %41 = vst.msk [vmem:[#allocation0] sm:$0x1] %vm40, %v39
    %s42 = scalar_lea.vmem %s0, 1
    %s43 = smov 3
    %v44 = vld [vmem:[%s42] ss:$8 sm:%s43]
    %45 = vrot.lane.b32.xlu0 %v44, 16
    %v46 = vpop.permute.xlu0 %45
    %vm47 = vcmask 261248
    %48 = vst.msk [vmem:[#allocation0] ss:$8 sm:$0x3] %vm47, %v46
    %s50 = ssub.s32 2, 1
    %v51 = vld [vmem:[#allocation0] sm:%s50]
    %s53 = ssub.s32 2, 1
    %54 = vst [vmem:[%s1] sm:%s53] %v51
    %s55 = scalar_lea.vmem [#allocation0], 8
    %v56 = vld [vmem:[%s55] sm:%s50]
    %s58 = ssub.s32 2, 1
    %s59 = scalar_lea.vmem %s1, 1
    %60 = vst [vmem:[%s59] sm:%s58] %v56

// kernel: lenet5_forward.1
$region0: #{lenet5_forward.1}
  #allocation0 [shape = 'u32[]', space=smem, size = 0x4, offset = 0x4, fixed_abs, tag = 'smem constant byte address 0x4 - core index']
  #allocation1 [shape = 'u32[72,128]{1,0:T(1,128)}', space=vmem, size = 0x9000, scoped, tag = 'internal scratch']
  %s0 = inlined_call_operand.vmem [shape: f32[32,8,32], index: 0, kind: input, shape index: {}]
  %s1 = inlined_call_operand.vmem [shape: bf16[5,32,168], index: 1, kind: input, shape index: {}]
  %s2 = inlined_call_operand.vmem [shape: f32[1,168], index: 2, kind: input, shape index: {}]
  %s3 = inlined_call_operand.vmem [shape: bf16[5,84,160], index: 3, kind: input, shape index: {}]
  %s4 = inlined_call_operand.vmem [shape: f32[1,160], index: 4, kind: input, shape index: {}]
  %s5 = inlined_call_operand.vmem [shape: bf16[5,80,120], index: 5, kind: input, shape index: {}]
  %s6 = inlined_call_operand.vmem [shape: f32[1,120], index: 6, kind: input, shape index: {}]
  %s7 = inlined_call_operand.vmem [shape: bf16[168,84], index: 7, kind: input, shape index: {}]
  %s8 = inlined_call_operand.vmem [shape: bf16[160,80], index: 8, kind: input, shape index: {}]
  %s9 = inlined_call_operand.vmem [shape: bf16[120,84], index: 9, kind: input, shape index: {}]
  %s10 = inlined_call_operand.vmem [shape: f32[1,84], index: 10, kind: input, shape index: {}]
  %s11 = inlined_call_operand.vmem [shape: bf16[84,128], index: 11, kind: input, shape index: {}]
  %s12 = inlined_call_operand.vmem [shape: f32[1,128], index: 12, kind: input, shape index: {}]
  %s13 = inlined_call_operand.vmem [shape: f32[8,128], index: 13, kind: output, shape index: {}]
  %s14 = sld [smem:[#allocation0]]
  $region62: #{lenet5_forward.1} parent=0
    _
  %s16 = ssub.s32 1, %s14
  %s17 = scalar_select 0, %s16, %s14
  // Predicated region
  $region2: #{lenet5_forward.1} parent=0 // pred_check
    _
  $region3: #{lenet5_forward.1} parent=0 // pred_check_branch
    %19 = sbr.rel (0) target = $region5
  $region4: #{lenet5_forward.1} parent=0 // pred_region
    _
  $region5: #{lenet5_forward.1} parent=0 // pred_fallthru
    _
  // Predicated region
  $region6: #{lenet5_forward.1} parent=0 // pred_check
    _
  $region7: #{lenet5_forward.1} parent=0 // pred_check_branch
    %21 = sbr.rel (0) target = $region9
  $region8: #{lenet5_forward.1} parent=0 // pred_region
    _
  $region9: #{lenet5_forward.1} parent=0 // pred_fallthru
    _
  // Predicated region
  $region10: #{lenet5_forward.1} parent=0 // pred_check
    _
  $region11: #{lenet5_forward.1} parent=0 // pred_check_branch
    %23 = sbr.rel (0) target = $region13
  $region12: #{lenet5_forward.1} parent=0 // pred_region
    _
  $region13: #{lenet5_forward.1} parent=0 // pred_fallthru
    _
  // Predicated region
  $region14: #{lenet5_forward.1} parent=0 // pred_check
    _
  $region15: #{lenet5_forward.1} parent=0 // pred_check_branch
    %25 = sbr.rel (0) target = $region17
  $region16: #{lenet5_forward.1} parent=0 // pred_region
    _
  $region17: #{lenet5_forward.1} parent=0 // pred_fallthru
    _
  // Predicated region
  $region18: #{lenet5_forward.1} parent=0 // pred_check
    _
  $region19: #{lenet5_forward.1} parent=0 // pred_check_branch
    %27 = sbr.rel (0) target = $region21
  $region20: #{lenet5_forward.1} parent=0 // pred_region
    _
  $region21: #{lenet5_forward.1} parent=0 // pred_fallthru
    _
  // Predicated region
  $region22: #{lenet5_forward.1} parent=0 // pred_check
    _
  $region23: #{lenet5_forward.1} parent=0 // pred_check_branch
    %29 = sbr.rel (0) target = $region25
  $region24: #{lenet5_forward.1} parent=0 // pred_region
    _
  $region25: #{lenet5_forward.1} parent=0 // pred_fallthru
    _
  // Predicated region
  $region26: #{lenet5_forward.1} parent=0 // pred_check
    _
  $region27: #{lenet5_forward.1} parent=0 // pred_check_branch
    %31 = sbr.rel (0) target = $region29
  $region28: #{lenet5_forward.1} parent=0 // pred_region
    _
  $region29: #{lenet5_forward.1} parent=0 // pred_fallthru
    _
  // Predicated region
  $region30: #{lenet5_forward.1} parent=0 // pred_check
    _
  $region31: #{lenet5_forward.1} parent=0 // pred_check_branch
    %33 = sbr.rel (0) target = $region33
  $region32: #{lenet5_forward.1} parent=0 // pred_region
    _
  $region33: #{lenet5_forward.1} parent=0 // pred_fallthru
    _
  // Predicated region
  $region34: #{lenet5_forward.1} parent=0 // pred_check
    _
  $region35: #{lenet5_forward.1} parent=0 // pred_check_branch
    %35 = sbr.rel (0) target = $region37
  $region36: #{lenet5_forward.1} parent=0 // pred_region
    _
  $region37: #{lenet5_forward.1} parent=0 // pred_fallthru
    _
  // Predicated region
  $region38: #{lenet5_forward.1} parent=0 // pred_check
    _
  $region39: #{lenet5_forward.1} parent=0 // pred_check_branch
    %37 = sbr.rel (0) target = $region41
  $region40: #{lenet5_forward.1} parent=0 // pred_region
    _
  $region41: #{lenet5_forward.1} parent=0 // pred_fallthru
    _
  // Predicated region
  $region42: #{lenet5_forward.1} parent=0 // pred_check
    _
  $region43: #{lenet5_forward.1} parent=0 // pred_check_branch
    %39 = sbr.rel (0) target = $region45
  $region44: #{lenet5_forward.1} parent=0 // pred_region
    _
  $region45: #{lenet5_forward.1} parent=0 // pred_fallthru
    _
  // Predicated region
  $region46: #{lenet5_forward.1} parent=0 // pred_check
    _
  $region47: #{lenet5_forward.1} parent=0 // pred_check_branch
    %41 = sbr.rel (0) target = $region49
  $region48: #{lenet5_forward.1} parent=0 // pred_region
    _
  $region49: #{lenet5_forward.1} parent=0 // pred_fallthru
    _
  // Predicated region
  $region50: #{lenet5_forward.1} parent=0 // pred_check
    _
  $region51: #{lenet5_forward.1} parent=0 // pred_check_branch
    %43 = sbr.rel (0) target = $region53
  $region52: #{lenet5_forward.1} parent=0 // pred_region
    _
  $region53: #{lenet5_forward.1} parent=0 // pred_fallthru
    _
  %v45 = vld [vmem:[%s0] sm:$0xff]
  %v46 = vld [vmem:[%s0 + $0x8] sm:$0xff]
  %v47 = vld [vmem:[%s0 + $0x10] sm:$0xff]
  %v48 = vld [vmem:[%s0 + $0x18] sm:$0xff]
  %v49 = vld [vmem:[%s0 + $0x20] sm:$0xff]
  %v50 = vld [vmem:[%s0 + $0x28] sm:$0xff]
  %v51 = vld [vmem:[%s0 + $0x30] sm:$0xff]
  %v52 = vld [vmem:[%s0 + $0x38] sm:$0xff]
  %v53 = vld [vmem:[%s0 + $0x40] sm:$0xff]
  %v54 = vld [vmem:[%s0 + $0x48] sm:$0xff]
  %v55 = vld [vmem:[%s0 + $0x50] sm:$0xff]
  %v56 = vld [vmem:[%s0 + $0x58] sm:$0xff]
  %v57 = vld [vmem:[%s0 + $0x60] sm:$0xff]
  %v58 = vld [vmem:[%s0 + $0x68] sm:$0xff]
  %v59 = vld [vmem:[%s0 + $0x70] sm:$0xff]
  %v60 = vld [vmem:[%s0 + $0x78] sm:$0xff]
  %v61 = vld [vmem:[%s0 + $0x80] sm:$0xff]
  %v62 = vld [vmem:[%s0 + $0x88] sm:$0xff]
  %v63 = vld [vmem:[%s0 + $0x90] sm:$0xff]
  %v64 = vld [vmem:[%s0 + $0x98] sm:$0xff]
  %v65 = vld [vmem:[%s0 + $0xa0] sm:$0xff]
  %v66 = vld [vmem:[%s0 + $0xa8] sm:$0xff]
  %v67 = vld [vmem:[%s0 + $0xb0] sm:$0xff]
  %v68 = vld [vmem:[%s0 + $0xb8] sm:$0xff]
  %v69 = vld [vmem:[%s0 + $0xc0] sm:$0xff]
  %v70 = vld [vmem:[%s0 + $0xc8] sm:$0xff]
  %v71 = vld [vmem:[%s0 + $0xd0] sm:$0xff]
  %v72 = vld [vmem:[%s0 + $0xd8] sm:$0xff]
  %v73 = vld [vmem:[%s0 + $0xe0] sm:$0xff]
  %v74 = vld [vmem:[%s0 + $0xe8] sm:$0xff]
  %v75 = vld [vmem:[%s0 + $0xf0] sm:$0xff]
  %v76 = vld [vmem:[%s0 + $0xf8] sm:$0xff]
  %v77 = vpack.c.bf16 %v45, %v45
  %v78 = vpack.c.bf16 %v46, %v46
  %v79 = vpack.c.bf16 %v47, %v47
  %v80 = vpack.c.bf16 %v48, %v48
  %v81 = vpack.c.bf16 %v49, %v49
  %v82 = vpack.c.bf16 %v50, %v50
  %v83 = vpack.c.bf16 %v51, %v51
  %v84 = vpack.c.bf16 %v52, %v52
  %v85 = vpack.c.bf16 %v53, %v53
  %v86 = vpack.c.bf16 %v54, %v54
  %v87 = vpack.c.bf16 %v55, %v55
  %v88 = vpack.c.bf16 %v56, %v56
  %v89 = vpack.c.bf16 %v57, %v57
  %v90 = vpack.c.bf16 %v58, %v58
  %v91 = vpack.c.bf16 %v59, %v59
  %v92 = vpack.c.bf16 %v60, %v60
  %v93 = vpack.c.bf16 %v61, %v61
  %v94 = vpack.c.bf16 %v62, %v62
  %v95 = vpack.c.bf16 %v63, %v63
  %v96 = vpack.c.bf16 %v64, %v64
  %v97 = vpack.c.bf16 %v65, %v65
  %v98 = vpack.c.bf16 %v66, %v66
  %v99 = vpack.c.bf16 %v67, %v67
  %v100 = vpack.c.bf16 %v68, %v68
  %v101 = vpack.c.bf16 %v69, %v69
  %v102 = vpack.c.bf16 %v70, %v70
  %v103 = vpack.c.bf16 %v71, %v71
  %v104 = vpack.c.bf16 %v72, %v72
  %v105 = vpack.c.bf16 %v73, %v73
  %v106 = vpack.c.bf16 %v74, %v74
  %v107 = vpack.c.bf16 %v75, %v75
  %v108 = vpack.c.bf16 %v76, %v76
  %v109 = vld [vmem:[%s1] sm:$0xff]
  %v110 = vld [vmem:[%s1 + $0x8] sm:$0xff]
  %v111 = vld [vmem:[%s1 + $0x10] sm:$0xff]
  %v112 = vld [vmem:[%s1 + $0x18] sm:$0xff]
  %s113 = scalar_lea.vmem %s1, 32
  %v114 = vld [vmem:[%s113] sm:$0xff]
  %v115 = vld [vmem:[%s113 + $0x8] sm:$0xff]
  %v116 = vld [vmem:[%s113 + $0x10] sm:$0xff]
  %v117 = vld [vmem:[%s113 + $0x18] sm:$0xff]
  %v146 = vunpack.c.l.b16 %v78
  %v147 = vunpack.c.l.b16 %v79
  %v148 = vunpack.c.l.b16 %v80
  %v149 = vunpack.c.l.b16 %v81
  %v150 = vunpack.c.l.b16 %v82
  %v151 = vunpack.c.l.b16 %v83
  %v152 = vunpack.c.l.b16 %v84
  %v153 = vunpack.c.l.b16 %v85
  %v154 = vunpack.c.l.b16 %v86
  %v155 = vunpack.c.l.b16 %v87
  %v156 = vunpack.c.l.b16 %v88
  %v157 = vunpack.c.l.b16 %v89
  %v158 = vunpack.c.l.b16 %v90
  %v159 = vunpack.c.l.b16 %v91
  %v160 = vunpack.c.l.b16 %v92
  %v161 = vunpack.c.l.b16 %v93
  %v162 = vunpack.c.l.b16 %v94
  %v163 = vunpack.c.l.b16 %v95
  %v164 = vunpack.c.l.b16 %v96
  %v165 = vunpack.c.l.b16 %v97
  %v166 = vunpack.c.l.b16 %v98
  %v167 = vunpack.c.l.b16 %v99
  %v168 = vunpack.c.l.b16 %v100
  %v169 = vunpack.c.l.b16 %v101
  %v170 = vunpack.c.l.b16 %v102
  %v171 = vunpack.c.l.b16 %v103
  %v172 = vunpack.c.l.b16 %v104
  %v173 = vunpack.c.l.b16 %v105
  %v174 = vpack.c.b16 %v147, %v146
  %v175 = vpack.c.b16 %v149, %v148
  %v176 = vpack.c.b16 %v151, %v150
  %v177 = vpack.c.b16 %v153, %v152
  %v178 = vpack.c.b16 %v155, %v154
  %v179 = vpack.c.b16 %v157, %v156
  %v180 = vpack.c.b16 %v159, %v158
  %v181 = vpack.c.b16 %v161, %v160
  %v182 = vpack.c.b16 %v163, %v162
  %v183 = vpack.c.b16 %v165, %v164
  %v184 = vpack.c.b16 %v167, %v166
  %v185 = vpack.c.b16 %v169, %v168
  %v186 = vpack.c.b16 %v171, %v170
  %v187 = vpack.c.b16 %v173, %v172
  %v192 = vunpack.c.l.b16 %v114
  %v193 = vunpack.c.h.b16 %v114
  %v194 = vunpack.c.l.b16 %v115
  %v195 = vunpack.c.h.b16 %v115
  %v196 = vunpack.c.l.b16 %v116
  %v197 = vunpack.c.h.b16 %v116
  %v198 = vunpack.c.l.b16 %v117
  %v199 = vunpack.c.h.b16 %v117
  %v200 = vpack.c.b16 %v194, %v192
  %v201 = vpack.c.b16 %v195, %v193
  %v202 = vpack.c.b16 %v198, %v196
  %v203 = vpack.c.b16 %v199, %v197
  %vm208 = vcmask 261120
  %v210 = vsel %vm208, %v174, 0
  %v213 = vsel %vm208, %v175, 0
  %v216 = vsel %vm208, %v176, 0
  %v219 = vsel %vm208, %v177, 0
  %v222 = vsel %vm208, %v178, 0
  %v225 = vsel %vm208, %v179, 0
  %v228 = vsel %vm208, %v180, 0
  %v231 = vsel %vm208, %v181, 0
  %v234 = vsel %vm208, %v182, 0
  %v237 = vsel %vm208, %v183, 0
  %v240 = vsel %vm208, %v184, 0
  %v243 = vsel %vm208, %v185, 0
  %v246 = vsel %vm208, %v186, 0
  %v249 = vsel %vm208, %v187, 0
  %251 = vmatpush.bf16.msra.mxu0 0
  %252 = vmatpush.bf16.msra.mxu0 0
  %253 = vmatpush.bf16.msra.mxu0 0
  %254 = vmatpush.bf16.msra.mxu0 0
  %255 = vmatpush.bf16.msra.mxu0 0
  %256 = vmatpush.bf16.msra.mxu0 0
  %257 = vmatpush.bf16.msra.mxu0 %v202
  %258 = vmatpush.bf16.msra.mxu0 %v200
  %259 = vmatmul.bf16.gmra.mxu0 %v210
  %v260 = vpop.f32.mrf.mxu0
  %v261 = vadd.f32 0.0, %v260
  %v262 = vpop.f32.mrf.mxu0
  %v263 = vadd.f32 0.0, %v262
  %264 = vmatmul.bf16.gmra.mxu0 %v213
  %v265 = vpop.f32.mrf.mxu0
  %v266 = vadd.f32 0.0, %v265
  %v267 = vpop.f32.mrf.mxu0
  %v268 = vadd.f32 0.0, %v267
  %269 = vmatmul.bf16.gmra.mxu0 %v216
  %v270 = vpop.f32.mrf.mxu0
  %v271 = vadd.f32 0.0, %v270
  %v272 = vpop.f32.mrf.mxu0
  %v273 = vadd.f32 0.0, %v272
  %274 = vmatmul.bf16.gmra.mxu0 %v219
  %v275 = vpop.f32.mrf.mxu0
  %v276 = vadd.f32 0.0, %v275
  %v277 = vpop.f32.mrf.mxu0
  %v278 = vadd.f32 0.0, %v277
  %279 = vmatmul.bf16.gmra.mxu0 %v222
  %v280 = vpop.f32.mrf.mxu0
  %v281 = vadd.f32 0.0, %v280
  %v282 = vpop.f32.mrf.mxu0
  %v283 = vadd.f32 0.0, %v282
  %284 = vmatmul.bf16.gmra.mxu0 %v225
  %v285 = vpop.f32.mrf.mxu0
  %v286 = vadd.f32 0.0, %v285
  %v287 = vpop.f32.mrf.mxu0
  %v288 = vadd.f32 0.0, %v287
  %289 = vmatmul.bf16.gmra.mxu0 %v228
  %v290 = vpop.f32.mrf.mxu0
  %v291 = vadd.f32 0.0, %v290
  %v292 = vpop.f32.mrf.mxu0
  %v293 = vadd.f32 0.0, %v292
  %294 = vmatmul.bf16.gmra.mxu0 %v231
  %v295 = vpop.f32.mrf.mxu0
  %v296 = vadd.f32 0.0, %v295
  %v297 = vpop.f32.mrf.mxu0
  %v298 = vadd.f32 0.0, %v297
  %299 = vmatmul.bf16.gmra.mxu0 %v234
  %v300 = vpop.f32.mrf.mxu0
  %v301 = vadd.f32 0.0, %v300
  %v302 = vpop.f32.mrf.mxu0
  %v303 = vadd.f32 0.0, %v302
  %304 = vmatmul.bf16.gmra.mxu0 %v237
  %v305 = vpop.f32.mrf.mxu0
  %v306 = vadd.f32 0.0, %v305
  %v307 = vpop.f32.mrf.mxu0
  %v308 = vadd.f32 0.0, %v307
  %309 = vmatmul.bf16.gmra.mxu0 %v240
  %v310 = vpop.f32.mrf.mxu0
  %v311 = vadd.f32 0.0, %v310
  %v312 = vpop.f32.mrf.mxu0
  %v313 = vadd.f32 0.0, %v312
  %314 = vmatmul.bf16.gmra.mxu0 %v243
  %v315 = vpop.f32.mrf.mxu0
  %v316 = vadd.f32 0.0, %v315
  %v317 = vpop.f32.mrf.mxu0
  %v318 = vadd.f32 0.0, %v317
  %319 = vmatmul.bf16.gmra.mxu0 %v246
  %v320 = vpop.f32.mrf.mxu0
  %v321 = vadd.f32 0.0, %v320
  %v322 = vpop.f32.mrf.mxu0
  %v323 = vadd.f32 0.0, %v322
  %324 = vmatmul.bf16.gmra.mxu0 %v249
  %v325 = vpop.f32.mrf.mxu0
  %v326 = vadd.f32 0.0, %v325
  %v327 = vpop.f32.mrf.mxu0
  %v328 = vadd.f32 0.0, %v327
  %329 = vdwg.mxu0
  %330 = vmatpush.bf16.msra.mxu0 0
  %331 = vmatpush.bf16.msra.mxu0 0
  %332 = vmatpush.bf16.msra.mxu0 0
  %333 = vmatpush.bf16.msra.mxu0 0
  %334 = vmatpush.bf16.msra.mxu0 0
  %335 = vmatpush.bf16.msra.mxu0 0
  %336 = vmatpush.bf16.msra.mxu0 %v203
  %337 = vmatpush.bf16.msra.mxu0 %v201
  %338 = vmatmul.bf16.gmra.mxu0 %v210
  %v339 = vpop.f32.mrf.mxu0
  %v340 = vadd.f32 0.0, %v339
  %v341 = vpop.f32.mrf.mxu0
  %v342 = vadd.f32 0.0, %v341
  %343 = vmatmul.bf16.gmra.mxu0 %v213
  %v344 = vpop.f32.mrf.mxu0
  %v345 = vadd.f32 0.0, %v344
  %v346 = vpop.f32.mrf.mxu0
  %v347 = vadd.f32 0.0, %v346
  %348 = vmatmul.bf16.gmra.mxu0 %v216
  %v349 = vpop.f32.mrf.mxu0
  %v350 = vadd.f32 0.0, %v349
  %v351 = vpop.f32.mrf.mxu0
  %v352 = vadd.f32 0.0, %v351
  %353 = vmatmul.bf16.gmra.mxu0 %v219
  %v354 = vpop.f32.mrf.mxu0
  %v355 = vadd.f32 0.0, %v354
  %v356 = vpop.f32.mrf.mxu0
  %v357 = vadd.f32 0.0, %v356
  %358 = vmatmul.bf16.gmra.mxu0 %v222
  %v359 = vpop.f32.mrf.mxu0
  %v360 = vadd.f32 0.0, %v359
  %v361 = vpop.f32.mrf.mxu0
  %v362 = vadd.f32 0.0, %v361
  %363 = vmatmul.bf16.gmra.mxu0 %v225
  %v364 = vpop.f32.mrf.mxu0
  %v365 = vadd.f32 0.0, %v364
  %v366 = vpop.f32.mrf.mxu0
  %v367 = vadd.f32 0.0, %v366
  %368 = vmatmul.bf16.gmra.mxu0 %v228
  %v369 = vpop.f32.mrf.mxu0
  %v370 = vadd.f32 0.0, %v369
  %v371 = vpop.f32.mrf.mxu0
  %v372 = vadd.f32 0.0, %v371
  %373 = vmatmul.bf16.gmra.mxu0 %v231
  %v374 = vpop.f32.mrf.mxu0
  %v375 = vadd.f32 0.0, %v374
  %v376 = vpop.f32.mrf.mxu0
  %v377 = vadd.f32 0.0, %v376
  %378 = vmatmul.bf16.gmra.mxu0 %v234
  %v379 = vpop.f32.mrf.mxu0
  %v380 = vadd.f32 0.0, %v379
  %v381 = vpop.f32.mrf.mxu0
  %v382 = vadd.f32 0.0, %v381
  %383 = vmatmul.bf16.gmra.mxu0 %v237
  %v384 = vpop.f32.mrf.mxu0
  %v385 = vadd.f32 0.0, %v384
  %v386 = vpop.f32.mrf.mxu0
  %v387 = vadd.f32 0.0, %v386
  %388 = vmatmul.bf16.gmra.mxu0 %v240
  %v389 = vpop.f32.mrf.mxu0
  %v390 = vadd.f32 0.0, %v389
  %v391 = vpop.f32.mrf.mxu0
  %v392 = vadd.f32 0.0, %v391
  %393 = vmatmul.bf16.gmra.mxu0 %v243
  %v394 = vpop.f32.mrf.mxu0
  %v395 = vadd.f32 0.0, %v394
  %v396 = vpop.f32.mrf.mxu0
  %v397 = vadd.f32 0.0, %v396
  %398 = vmatmul.bf16.gmra.mxu0 %v246
  %v399 = vpop.f32.mrf.mxu0
  %v400 = vadd.f32 0.0, %v399
  %v401 = vpop.f32.mrf.mxu0
  %v402 = vadd.f32 0.0, %v401
  %403 = vmatmul.bf16.gmra.mxu0 %v249
  %v404 = vpop.f32.mrf.mxu0
  %v405 = vadd.f32 0.0, %v404
  %v406 = vpop.f32.mrf.mxu0
  %v407 = vadd.f32 0.0, %v406
  %408 = vdwg.mxu0
  %v410 = vunpack.c.l.b16 %v77
  %v411 = vpack.c.b16 %v146, %v410
  %v412 = vpack.c.b16 %v148, %v147
  %v413 = vpack.c.b16 %v150, %v149
  %v414 = vpack.c.b16 %v152, %v151
  %v415 = vpack.c.b16 %v154, %v153
  %v416 = vpack.c.b16 %v156, %v155
  %v417 = vpack.c.b16 %v158, %v157
  %v418 = vpack.c.b16 %v160, %v159
  %v419 = vpack.c.b16 %v162, %v161
  %v420 = vpack.c.b16 %v164, %v163
  %v421 = vpack.c.b16 %v166, %v165
  %v422 = vpack.c.b16 %v168, %v167
  %v423 = vpack.c.b16 %v170, %v169
  %v424 = vpack.c.b16 %v172, %v171
  %v429 = vunpack.c.l.b16 %v109
  %v430 = vunpack.c.h.b16 %v109
  %v431 = vunpack.c.l.b16 %v110
  %v432 = vunpack.c.h.b16 %v110
  %v433 = vunpack.c.l.b16 %v111
  %v434 = vunpack.c.h.b16 %v111
  %v435 = vunpack.c.l.b16 %v112
  %v436 = vunpack.c.h.b16 %v112
  %v437 = vpack.c.b16 %v431, %v429
  %v438 = vpack.c.b16 %v432, %v430
  %v439 = vpack.c.b16 %v435, %v433
  %v440 = vpack.c.b16 %v436, %v434
  %v446 = vsel %vm208, %v411, 0
  %v449 = vsel %vm208, %v412, 0
  %v452 = vsel %vm208, %v413, 0
  %v455 = vsel %vm208, %v414, 0
  %v458 = vsel %vm208, %v415, 0
  %v461 = vsel %vm208, %v416, 0
  %v464 = vsel %vm208, %v417, 0
  %v467 = vsel %vm208, %v418, 0
  %v470 = vsel %vm208, %v419, 0
  %v473 = vsel %vm208, %v420, 0
  %v476 = vsel %vm208, %v421, 0
  %v479 = vsel %vm208, %v422, 0
  %v482 = vsel %vm208, %v423, 0
  %v485 = vsel %vm208, %v424, 0
  %487 = vmatpush.bf16.msra.mxu0 0
  %488 = vmatpush.bf16.msra.mxu0 0
  %489 = vmatpush.bf16.msra.mxu0 0
  %490 = vmatpush.bf16.msra.mxu0 0
  %491 = vmatpush.bf16.msra.mxu0 0
  %492 = vmatpush.bf16.msra.mxu0 0
  %493 = vmatpush.bf16.msra.mxu0 %v439
  %494 = vmatpush.bf16.msra.mxu0 %v437
  %495 = vmatmul.bf16.gmra.mxu0 %v446
  %v496 = vpop.f32.mrf.mxu0
  %v497 = vadd.f32 %v261, %v496
  %v498 = vpop.f32.mrf.mxu0
  %v499 = vadd.f32 %v263, %v498
  %500 = vmatmul.bf16.gmra.mxu0 %v449
  %v501 = vpop.f32.mrf.mxu0
  %v502 = vadd.f32 %v266, %v501
  %v503 = vpop.f32.mrf.mxu0
  %v504 = vadd.f32 %v268, %v503
  %505 = vmatmul.bf16.gmra.mxu0 %v452
  %v506 = vpop.f32.mrf.mxu0
  %v507 = vadd.f32 %v271, %v506
  %v508 = vpop.f32.mrf.mxu0
  %v509 = vadd.f32 %v273, %v508
  %510 = vmatmul.bf16.gmra.mxu0 %v455
  %v511 = vpop.f32.mrf.mxu0
  %v512 = vadd.f32 %v276, %v511
  %v513 = vpop.f32.mrf.mxu0
  %v514 = vadd.f32 %v278, %v513
  %515 = vmatmul.bf16.gmra.mxu0 %v458
  %v516 = vpop.f32.mrf.mxu0
  %v517 = vadd.f32 %v281, %v516
  %v518 = vpop.f32.mrf.mxu0
  %v519 = vadd.f32 %v283, %v518
  %520 = vmatmul.bf16.gmra.mxu0 %v461
  %v521 = vpop.f32.mrf.mxu0
  %v522 = vadd.f32 %v286, %v521
  %v523 = vpop.f32.mrf.mxu0
  %v524 = vadd.f32 %v288, %v523
  %525 = vmatmul.bf16.gmra.mxu0 %v464
  %v526 = vpop.f32.mrf.mxu0
  %v527 = vadd.f32 %v291, %v526
  %v528 = vpop.f32.mrf.mxu0
  %v529 = vadd.f32 %v293, %v528
  %530 = vmatmul.bf16.gmra.mxu0 %v467
  %v531 = vpop.f32.mrf.mxu0
  %v532 = vadd.f32 %v296, %v531
  %v533 = vpop.f32.mrf.mxu0
  %v534 = vadd.f32 %v298, %v533
  %535 = vmatmul.bf16.gmra.mxu0 %v470
  %v536 = vpop.f32.mrf.mxu0
  %v537 = vadd.f32 %v301, %v536
  %v538 = vpop.f32.mrf.mxu0
  %v539 = vadd.f32 %v303, %v538
  %540 = vmatmul.bf16.gmra.mxu0 %v473
  %v541 = vpop.f32.mrf.mxu0
  %v542 = vadd.f32 %v306, %v541
  %v543 = vpop.f32.mrf.mxu0
  %v544 = vadd.f32 %v308, %v543
  %545 = vmatmul.bf16.gmra.mxu0 %v476
  %v546 = vpop.f32.mrf.mxu0
  %v547 = vadd.f32 %v311, %v546
  %v548 = vpop.f32.mrf.mxu0
  %v549 = vadd.f32 %v313, %v548
  %550 = vmatmul.bf16.gmra.mxu0 %v479
  %v551 = vpop.f32.mrf.mxu0
  %v552 = vadd.f32 %v316, %v551
  %v553 = vpop.f32.mrf.mxu0
  %v554 = vadd.f32 %v318, %v553
  %555 = vmatmul.bf16.gmra.mxu0 %v482
  %v556 = vpop.f32.mrf.mxu0
  %v557 = vadd.f32 %v321, %v556
  %v558 = vpop.f32.mrf.mxu0
  %v559 = vadd.f32 %v323, %v558
  %560 = vmatmul.bf16.gmra.mxu0 %v485
  %v561 = vpop.f32.mrf.mxu0
  %v562 = vadd.f32 %v326, %v561
  %v563 = vpop.f32.mrf.mxu0
  %v564 = vadd.f32 %v328, %v563
  %565 = vdwg.mxu0
  %566 = vmatpush.bf16.msra.mxu0 0
  %567 = vmatpush.bf16.msra.mxu0 0
  %568 = vmatpush.bf16.msra.mxu0 0
  %569 = vmatpush.bf16.msra.mxu0 0
  %570 = vmatpush.bf16.msra.mxu0 0
  %571 = vmatpush.bf16.msra.mxu0 0
  %572 = vmatpush.bf16.msra.mxu0 %v440
  %573 = vmatpush.bf16.msra.mxu0 %v438
  %574 = vmatmul.bf16.gmra.mxu0 %v446
  %v575 = vpop.f32.mrf.mxu0
  %v576 = vadd.f32 %v340, %v575
  %v577 = vpop.f32.mrf.mxu0
  %v578 = vadd.f32 %v342, %v577
  %579 = vmatmul.bf16.gmra.mxu0 %v449
  %v580 = vpop.f32.mrf.mxu0
  %v581 = vadd.f32 %v345, %v580
  %v582 = vpop.f32.mrf.mxu0
  %v583 = vadd.f32 %v347, %v582
  %584 = vmatmul.bf16.gmra.mxu0 %v452
  %v585 = vpop.f32.mrf.mxu0
  %v586 = vadd.f32 %v350, %v585
  %v587 = vpop.f32.mrf.mxu0
  %v588 = vadd.f32 %v352, %v587
  %589 = vmatmul.bf16.gmra.mxu0 %v455
  %v590 = vpop.f32.mrf.mxu0
  %v591 = vadd.f32 %v355, %v590
  %v592 = vpop.f32.mrf.mxu0
  %v593 = vadd.f32 %v357, %v592
  %594 = vmatmul.bf16.gmra.mxu0 %v458
  %v595 = vpop.f32.mrf.mxu0
  %v596 = vadd.f32 %v360, %v595
  %v597 = vpop.f32.mrf.mxu0
  %v598 = vadd.f32 %v362, %v597
  %599 = vmatmul.bf16.gmra.mxu0 %v461
  %v600 = vpop.f32.mrf.mxu0
  %v601 = vadd.f32 %v365, %v600
  %v602 = vpop.f32.mrf.mxu0
  %v603 = vadd.f32 %v367, %v602
  %604 = vmatmul.bf16.gmra.mxu0 %v464
  %v605 = vpop.f32.mrf.mxu0
  %v606 = vadd.f32 %v370, %v605
  %v607 = vpop.f32.mrf.mxu0
  %v608 = vadd.f32 %v372, %v607
  %609 = vmatmul.bf16.gmra.mxu0 %v467
  %v610 = vpop.f32.mrf.mxu0
  %v611 = vadd.f32 %v375, %v610
  %v612 = vpop.f32.mrf.mxu0
  %v613 = vadd.f32 %v377, %v612
  %614 = vmatmul.bf16.gmra.mxu0 %v470
  %v615 = vpop.f32.mrf.mxu0
  %v616 = vadd.f32 %v380, %v615
  %v617 = vpop.f32.mrf.mxu0
  %v618 = vadd.f32 %v382, %v617
  %619 = vmatmul.bf16.gmra.mxu0 %v473
  %v620 = vpop.f32.mrf.mxu0
  %v621 = vadd.f32 %v385, %v620
  %v622 = vpop.f32.mrf.mxu0
  %v623 = vadd.f32 %v387, %v622
  %624 = vmatmul.bf16.gmra.mxu0 %v476
  %v625 = vpop.f32.mrf.mxu0
  %v626 = vadd.f32 %v390, %v625
  %v627 = vpop.f32.mrf.mxu0
  %v628 = vadd.f32 %v392, %v627
  %629 = vmatmul.bf16.gmra.mxu0 %v479
  %v630 = vpop.f32.mrf.mxu0
  %v631 = vadd.f32 %v395, %v630
  %v632 = vpop.f32.mrf.mxu0
  %v633 = vadd.f32 %v397, %v632
  %634 = vmatmul.bf16.gmra.mxu0 %v482
  %v635 = vpop.f32.mrf.mxu0
  %v636 = vadd.f32 %v400, %v635
  %v637 = vpop.f32.mrf.mxu0
  %v638 = vadd.f32 %v402, %v637
  %639 = vmatmul.bf16.gmra.mxu0 %v485
  %v640 = vpop.f32.mrf.mxu0
  %v641 = vadd.f32 %v405, %v640
  %v642 = vpop.f32.mrf.mxu0
  %v643 = vadd.f32 %v407, %v642
  %644 = vdwg.mxu0
  %s645 = scalar_lea.vmem %s1, 64
  %v646 = vld [vmem:[%s645] sm:$0xff]
  %v647 = vld [vmem:[%s645 + $0x8] sm:$0xff]
  %v648 = vld [vmem:[%s645 + $0x10] sm:$0xff]
  %v649 = vld [vmem:[%s645 + $0x18] sm:$0xff]
  %v651 = vunpack.c.l.b16 %v106
  %v652 = vpack.c.b16 %v651, %v173
  %v657 = vunpack.c.l.b16 %v646
  %v658 = vunpack.c.h.b16 %v646
  %v659 = vunpack.c.l.b16 %v647
  %v660 = vunpack.c.h.b16 %v647
  %v661 = vunpack.c.l.b16 %v648
  %v662 = vunpack.c.h.b16 %v648
  %v663 = vunpack.c.l.b16 %v649
  %v664 = vunpack.c.h.b16 %v649
  %v665 = vpack.c.b16 %v659, %v657
  %v666 = vpack.c.b16 %v660, %v658
  %v667 = vpack.c.b16 %v663, %v661
  %v668 = vpack.c.b16 %v664, %v662
  %v674 = vsel %vm208, %v652, 0
  %676 = vmatpush.bf16.msra.mxu0 0
  %677 = vmatpush.bf16.msra.mxu0 0
  %678 = vmatpush.bf16.msra.mxu0 0
  %679 = vmatpush.bf16.msra.mxu0 0
  %680 = vmatpush.bf16.msra.mxu0 0
  %681 = vmatpush.bf16.msra.mxu0 0
  %682 = vmatpush.bf16.msra.mxu0 %v667
  %683 = vmatpush.bf16.msra.mxu0 %v665
  %684 = vmatmul.bf16.gmra.mxu0 %v449
  %v685 = vpop.f32.mrf.mxu0
  %v686 = vadd.f32 0.0, %v685
  %v687 = vpop.f32.mrf.mxu0
  %v688 = vadd.f32 0.0, %v687
  %689 = vmatmul.bf16.gmra.mxu0 %v452
  %v690 = vpop.f32.mrf.mxu0
  %v691 = vadd.f32 0.0, %v690
  %v692 = vpop.f32.mrf.mxu0
  %v693 = vadd.f32 0.0, %v692
  %694 = vmatmul.bf16.gmra.mxu0 %v455
  %v695 = vpop.f32.mrf.mxu0
  %v696 = vadd.f32 0.0, %v695
  %v697 = vpop.f32.mrf.mxu0
  %v698 = vadd.f32 0.0, %v697
  %699 = vmatmul.bf16.gmra.mxu0 %v458
  %v700 = vpop.f32.mrf.mxu0
  %v701 = vadd.f32 0.0, %v700
  %v702 = vpop.f32.mrf.mxu0
  %v703 = vadd.f32 0.0, %v702
  %704 = vmatmul.bf16.gmra.mxu0 %v461
  %v705 = vpop.f32.mrf.mxu0
  %v706 = vadd.f32 0.0, %v705
  %v707 = vpop.f32.mrf.mxu0
  %v708 = vadd.f32 0.0, %v707
  %709 = vmatmul.bf16.gmra.mxu0 %v464
  %v710 = vpop.f32.mrf.mxu0
  %v711 = vadd.f32 0.0, %v710
  %v712 = vpop.f32.mrf.mxu0
  %v713 = vadd.f32 0.0, %v712
  %714 = vmatmul.bf16.gmra.mxu0 %v467
  %v715 = vpop.f32.mrf.mxu0
  %v716 = vadd.f32 0.0, %v715
  %v717 = vpop.f32.mrf.mxu0
  %v718 = vadd.f32 0.0, %v717
  %719 = vmatmul.bf16.gmra.mxu0 %v470
  %v720 = vpop.f32.mrf.mxu0
  %v721 = vadd.f32 0.0, %v720
  %v722 = vpop.f32.mrf.mxu0
  %v723 = vadd.f32 0.0, %v722
  %724 = vmatmul.bf16.gmra.mxu0 %v473
  %v725 = vpop.f32.mrf.mxu0
  %v726 = vadd.f32 0.0, %v725
  %v727 = vpop.f32.mrf.mxu0
  %v728 = vadd.f32 0.0, %v727
  %729 = vmatmul.bf16.gmra.mxu0 %v476
  %v730 = vpop.f32.mrf.mxu0
  %v731 = vadd.f32 0.0, %v730
  %v732 = vpop.f32.mrf.mxu0
  %v733 = vadd.f32 0.0, %v732
  %734 = vmatmul.bf16.gmra.mxu0 %v479
  %v735 = vpop.f32.mrf.mxu0
  %v736 = vadd.f32 0.0, %v735
  %v737 = vpop.f32.mrf.mxu0
  %v738 = vadd.f32 0.0, %v737
  %739 = vmatmul.bf16.gmra.mxu0 %v482
  %v740 = vpop.f32.mrf.mxu0
  %v741 = vadd.f32 0.0, %v740
  %v742 = vpop.f32.mrf.mxu0
  %v743 = vadd.f32 0.0, %v742
  %744 = vmatmul.bf16.gmra.mxu0 %v485
  %v745 = vpop.f32.mrf.mxu0
  %v746 = vadd.f32 0.0, %v745
  %v747 = vpop.f32.mrf.mxu0
  %v748 = vadd.f32 0.0, %v747
  %749 = vmatmul.bf16.gmra.mxu0 %v674
  %v750 = vpop.f32.mrf.mxu0
  %v751 = vadd.f32 0.0, %v750
  %v752 = vpop.f32.mrf.mxu0
  %v753 = vadd.f32 0.0, %v752
  %754 = vdwg.mxu0
  %755 = vmatpush.bf16.msra.mxu0 0
  %756 = vmatpush.bf16.msra.mxu0 0
  %757 = vmatpush.bf16.msra.mxu0 0
  %758 = vmatpush.bf16.msra.mxu0 0
  %759 = vmatpush.bf16.msra.mxu0 0
  %760 = vmatpush.bf16.msra.mxu0 0
  %761 = vmatpush.bf16.msra.mxu0 %v668
  %762 = vmatpush.bf16.msra.mxu0 %v666
  %763 = vmatmul.bf16.gmra.mxu0 %v449
  %v764 = vpop.f32.mrf.mxu0
  %v765 = vadd.f32 0.0, %v764
  %v766 = vpop.f32.mrf.mxu0
  %v767 = vadd.f32 0.0, %v766
  %768 = vmatmul.bf16.gmra.mxu0 %v452
  %v769 = vpop.f32.mrf.mxu0
  %v770 = vadd.f32 0.0, %v769
  %v771 = vpop.f32.mrf.mxu0
  %v772 = vadd.f32 0.0, %v771
  %773 = vmatmul.bf16.gmra.mxu0 %v455
  %v774 = vpop.f32.mrf.mxu0
  %v775 = vadd.f32 0.0, %v774
  %v776 = vpop.f32.mrf.mxu0
  %v777 = vadd.f32 0.0, %v776
  %778 = vmatmul.bf16.gmra.mxu0 %v458
  %v779 = vpop.f32.mrf.mxu0
  %v780 = vadd.f32 0.0, %v779
  %v781 = vpop.f32.mrf.mxu0
  %v782 = vadd.f32 0.0, %v781
  %783 = vmatmul.bf16.gmra.mxu0 %v461
  %v784 = vpop.f32.mrf.mxu0
  %v785 = vadd.f32 0.0, %v784
  %v786 = vpop.f32.mrf.mxu0
  %v787 = vadd.f32 0.0, %v786
  %788 = vmatmul.bf16.gmra.mxu0 %v464
  %v789 = vpop.f32.mrf.mxu0
  %v790 = vadd.f32 0.0, %v789
  %v791 = vpop.f32.mrf.mxu0
  %v792 = vadd.f32 0.0, %v791
  %793 = vmatmul.bf16.gmra.mxu0 %v467
  %v794 = vpop.f32.mrf.mxu0
  %v795 = vadd.f32 0.0, %v794
  %v796 = vpop.f32.mrf.mxu0
  %v797 = vadd.f32 0.0, %v796
  %798 = vmatmul.bf16.gmra.mxu0 %v470
  %v799 = vpop.f32.mrf.mxu0
  %v800 = vadd.f32 0.0, %v799
  %v801 = vpop.f32.mrf.mxu0
  %v802 = vadd.f32 0.0, %v801
  %803 = vmatmul.bf16.gmra.mxu0 %v473
  %v804 = vpop.f32.mrf.mxu0
  %v805 = vadd.f32 0.0, %v804
  %v806 = vpop.f32.mrf.mxu0
  %v807 = vadd.f32 0.0, %v806
  %808 = vmatmul.bf16.gmra.mxu0 %v476
  %v809 = vpop.f32.mrf.mxu0
  %v810 = vadd.f32 0.0, %v809
  %v811 = vpop.f32.mrf.mxu0
  %v812 = vadd.f32 0.0, %v811
  %813 = vmatmul.bf16.gmra.mxu0 %v479
  %v814 = vpop.f32.mrf.mxu0
  %v815 = vadd.f32 0.0, %v814
  %v816 = vpop.f32.mrf.mxu0
  %v817 = vadd.f32 0.0, %v816
  %818 = vmatmul.bf16.gmra.mxu0 %v482
  %v819 = vpop.f32.mrf.mxu0
  %v820 = vadd.f32 0.0, %v819
  %v821 = vpop.f32.mrf.mxu0
  %v822 = vadd.f32 0.0, %v821
  %823 = vmatmul.bf16.gmra.mxu0 %v485
  %v824 = vpop.f32.mrf.mxu0
  %v825 = vadd.f32 0.0, %v824
  %v826 = vpop.f32.mrf.mxu0
  %v827 = vadd.f32 0.0, %v826
  %828 = vmatmul.bf16.gmra.mxu0 %v674
  %v829 = vpop.f32.mrf.mxu0
  %v830 = vadd.f32 0.0, %v829
  %v831 = vpop.f32.mrf.mxu0
  %v832 = vadd.f32 0.0, %v831
  %833 = vdwg.mxu0
  %v834 = vadd.f32 %v497, %v686
  %v835 = vadd.f32 %v576, %v765
  %v836 = vadd.f32 %v499, %v688
  %v837 = vadd.f32 %v578, %v767
  %v838 = vadd.f32 %v502, %v691
  %v839 = vadd.f32 %v581, %v770
  %v840 = vadd.f32 %v504, %v693
  %v841 = vadd.f32 %v583, %v772
  %v842 = vadd.f32 %v507, %v696
  %v843 = vadd.f32 %v586, %v775
  %v844 = vadd.f32 %v509, %v698
  %v845 = vadd.f32 %v588, %v777
  %v846 = vadd.f32 %v512, %v701
  %v847 = vadd.f32 %v591, %v780
  %v848 = vadd.f32 %v514, %v703
  %v849 = vadd.f32 %v593, %v782
  %v850 = vadd.f32 %v517, %v706
  %v851 = vadd.f32 %v596, %v785
  %v852 = vadd.f32 %v519, %v708
  %v853 = vadd.f32 %v598, %v787
  %v854 = vadd.f32 %v522, %v711
  %v855 = vadd.f32 %v601, %v790
  %v856 = vadd.f32 %v524, %v713
  %v857 = vadd.f32 %v603, %v792
  %v858 = vadd.f32 %v527, %v716
  %v859 = vadd.f32 %v606, %v795
  %v860 = vadd.f32 %v529, %v718
  %v861 = vadd.f32 %v608, %v797
  %v862 = vadd.f32 %v532, %v721
  %v863 = vadd.f32 %v611, %v800
  %v864 = vadd.f32 %v534, %v723
  %v865 = vadd.f32 %v613, %v802
  %v866 = vadd.f32 %v537, %v726
  %v867 = vadd.f32 %v616, %v805
  %v868 = vadd.f32 %v539, %v728
  %v869 = vadd.f32 %v618, %v807
  %v870 = vadd.f32 %v542, %v731
  %v871 = vadd.f32 %v621, %v810
  %v872 = vadd.f32 %v544, %v733
  %v873 = vadd.f32 %v623, %v812
  %v874 = vadd.f32 %v547, %v736
  %v875 = vadd.f32 %v626, %v815
  %v876 = vadd.f32 %v549, %v738
  %v877 = vadd.f32 %v628, %v817
  %v878 = vadd.f32 %v552, %v741
  %v879 = vadd.f32 %v631, %v820
  %v880 = vadd.f32 %v554, %v743
  %v881 = vadd.f32 %v633, %v822
  %v882 = vadd.f32 %v557, %v746
  %v883 = vadd.f32 %v636, %v825
  %v884 = vadd.f32 %v559, %v748
  %v885 = vadd.f32 %v638, %v827
  %v886 = vadd.f32 %v562, %v751
  %v887 = vadd.f32 %v641, %v830
  %v888 = vadd.f32 %v564, %v753
  %v889 = vadd.f32 %v643, %v832
  %s890 = scalar_lea.vmem %s1, 96
  %v891 = vld [vmem:[%s890] sm:$0xff]
  %v892 = vld [vmem:[%s890 + $0x8] sm:$0xff]
  %v893 = vld [vmem:[%s890 + $0x10] sm:$0xff]
  %v894 = vld [vmem:[%s890 + $0x18] sm:$0xff]
  %v896 = vunpack.c.l.b16 %v107
  %v897 = vpack.c.b16 %v896, %v651
  %v902 = vunpack.c.l.b16 %v891
  %v903 = vunpack.c.h.b16 %v891
  %v904 = vunpack.c.l.b16 %v892
  %v905 = vunpack.c.h.b16 %v892
  %v906 = vunpack.c.l.b16 %v893
  %v907 = vunpack.c.h.b16 %v893
  %v908 = vunpack.c.l.b16 %v894
  %v909 = vunpack.c.h.b16 %v894
  %v910 = vpack.c.b16 %v904, %v902
  %v911 = vpack.c.b16 %v905, %v903
  %v912 = vpack.c.b16 %v908, %v906
  %v913 = vpack.c.b16 %v909, %v907
  %v919 = vsel %vm208, %v897, 0
  %921 = vmatpush.bf16.msra.mxu0 0
  %922 = vmatpush.bf16.msra.mxu0 0
  %923 = vmatpush.bf16.msra.mxu0 0
  %924 = vmatpush.bf16.msra.mxu0 0
  %925 = vmatpush.bf16.msra.mxu0 0
  %926 = vmatpush.bf16.msra.mxu0 0
  %927 = vmatpush.bf16.msra.mxu0 %v912
  %928 = vmatpush.bf16.msra.mxu0 %v910
  %929 = vmatmul.bf16.gmra.mxu0 %v213
  %v930 = vpop.f32.mrf.mxu0
  %v931 = vadd.f32 0.0, %v930
  %v932 = vpop.f32.mrf.mxu0
  %v933 = vadd.f32 0.0, %v932
  %934 = vmatmul.bf16.gmra.mxu0 %v216
  %v935 = vpop.f32.mrf.mxu0
  %v936 = vadd.f32 0.0, %v935
  %v937 = vpop.f32.mrf.mxu0
  %v938 = vadd.f32 0.0, %v937
  %939 = vmatmul.bf16.gmra.mxu0 %v219
  %v940 = vpop.f32.mrf.mxu0
  %v941 = vadd.f32 0.0, %v940
  %v942 = vpop.f32.mrf.mxu0
  %v943 = vadd.f32 0.0, %v942
  %944 = vmatmul.bf16.gmra.mxu0 %v222
  %v945 = vpop.f32.mrf.mxu0
  %v946 = vadd.f32 0.0, %v945
  %v947 = vpop.f32.mrf.mxu0
  %v948 = vadd.f32 0.0, %v947
  %949 = vmatmul.bf16.gmra.mxu0 %v225
  %v950 = vpop.f32.mrf.mxu0
  %v951 = vadd.f32 0.0, %v950
  %v952 = vpop.f32.mrf.mxu0
  %v953 = vadd.f32 0.0, %v952
  %954 = vmatmul.bf16.gmra.mxu0 %v228
  %v955 = vpop.f32.mrf.mxu0
  %v956 = vadd.f32 0.0, %v955
  %v957 = vpop.f32.mrf.mxu0
  %v958 = vadd.f32 0.0, %v957
  %959 = vmatmul.bf16.gmra.mxu0 %v231
  %v960 = vpop.f32.mrf.mxu0
  %v961 = vadd.f32 0.0, %v960
  %v962 = vpop.f32.mrf.mxu0
  %v963 = vadd.f32 0.0, %v962
  %964 = vmatmul.bf16.gmra.mxu0 %v234
  %v965 = vpop.f32.mrf.mxu0
  %v966 = vadd.f32 0.0, %v965
  %v967 = vpop.f32.mrf.mxu0
  %v968 = vadd.f32 0.0, %v967
  %969 = vmatmul.bf16.gmra.mxu0 %v237
  %v970 = vpop.f32.mrf.mxu0
  %v971 = vadd.f32 0.0, %v970
  %v972 = vpop.f32.mrf.mxu0
  %v973 = vadd.f32 0.0, %v972
  %974 = vmatmul.bf16.gmra.mxu0 %v240
  %v975 = vpop.f32.mrf.mxu0
  %v976 = vadd.f32 0.0, %v975
  %v977 = vpop.f32.mrf.mxu0
  %v978 = vadd.f32 0.0, %v977
  %979 = vmatmul.bf16.gmra.mxu0 %v243
  %v980 = vpop.f32.mrf.mxu0
  %v981 = vadd.f32 0.0, %v980
  %v982 = vpop.f32.mrf.mxu0
  %v983 = vadd.f32 0.0, %v982
  %984 = vmatmul.bf16.gmra.mxu0 %v246
  %v985 = vpop.f32.mrf.mxu0
  %v986 = vadd.f32 0.0, %v985
  %v987 = vpop.f32.mrf.mxu0
  %v988 = vadd.f32 0.0, %v987
  %989 = vmatmul.bf16.gmra.mxu0 %v249
  %v990 = vpop.f32.mrf.mxu0
  %v991 = vadd.f32 0.0, %v990
  %v992 = vpop.f32.mrf.mxu0
  %v993 = vadd.f32 0.0, %v992
  %994 = vmatmul.bf16.gmra.mxu0 %v919
  %v995 = vpop.f32.mrf.mxu0
  %v996 = vadd.f32 0.0, %v995
  %v997 = vpop.f32.mrf.mxu0
  %v998 = vadd.f32 0.0, %v997
  %999 = vdwg.mxu0
  %1000 = vmatpush.bf16.msra.mxu0 0
  %1001 = vmatpush.bf16.msra.mxu0 0
  %1002 = vmatpush.bf16.msra.mxu0 0
  %1003 = vmatpush.bf16.msra.mxu0 0
  %1004 = vmatpush.bf16.msra.mxu0 0
  %1005 = vmatpush.bf16.msra.mxu0 0
  %1006 = vmatpush.bf16.msra.mxu0 %v913
  %1007 = vmatpush.bf16.msra.mxu0 %v911
  %1008 = vmatmul.bf16.gmra.mxu0 %v213
  %v1009 = vpop.f32.mrf.mxu0
  %v1010 = vadd.f32 0.0, %v1009
  %v1011 = vpop.f32.mrf.mxu0
  %v1012 = vadd.f32 0.0, %v1011
  %1013 = vmatmul.bf16.gmra.mxu0 %v216
  %v1014 = vpop.f32.mrf.mxu0
  %v1015 = vadd.f32 0.0, %v1014
  %v1016 = vpop.f32.mrf.mxu0
  %v1017 = vadd.f32 0.0, %v1016
  %1018 = vmatmul.bf16.gmra.mxu0 %v219
  %v1019 = vpop.f32.mrf.mxu0
  %v1020 = vadd.f32 0.0, %v1019
  %v1021 = vpop.f32.mrf.mxu0
  %v1022 = vadd.f32 0.0, %v1021
  %1023 = vmatmul.bf16.gmra.mxu0 %v222
  %v1024 = vpop.f32.mrf.mxu0
  %v1025 = vadd.f32 0.0, %v1024
  %v1026 = vpop.f32.mrf.mxu0
  %v1027 = vadd.f32 0.0, %v1026
  %1028 = vmatmul.bf16.gmra.mxu0 %v225
  %v1029 = vpop.f32.mrf.mxu0
  %v1030 = vadd.f32 0.0, %v1029
  %v1031 = vpop.f32.mrf.mxu0
  %v1032 = vadd.f32 0.0, %v1031
  %1033 = vmatmul.bf16.gmra.mxu0 %v228
  %v1034 = vpop.f32.mrf.mxu0
  %v1035 = vadd.f32 0.0, %v1034
  %v1036 = vpop.f32.mrf.mxu0
  %v1037 = vadd.f32 0.0, %v1036
  %1038 = vmatmul.bf16.gmra.mxu0 %v231
  %v1039 = vpop.f32.mrf.mxu0
  %v1040 = vadd.f32 0.0, %v1039
  %v1041 = vpop.f32.mrf.mxu0
  %v1042 = vadd.f32 0.0, %v1041
  %1043 = vmatmul.bf16.gmra.mxu0 %v234
  %v1044 = vpop.f32.mrf.mxu0
  %v1045 = vadd.f32 0.0, %v1044
  %v1046 = vpop.f32.mrf.mxu0
  %v1047 = vadd.f32 0.0, %v1046
  %1048 = vmatmul.bf16.gmra.mxu0 %v237
  %v1049 = vpop.f32.mrf.mxu0
  %v1050 = vadd.f32 0.0, %v1049
  %v1051 = vpop.f32.mrf.mxu0
  %v1052 = vadd.f32 0.0, %v1051
  %1053 = vmatmul.bf16.gmra.mxu0 %v240
  %v1054 = vpop.f32.mrf.mxu0
  %v1055 = vadd.f32 0.0, %v1054
  %v1056 = vpop.f32.mrf.mxu0
  %v1057 = vadd.f32 0.0, %v1056
  %1058 = vmatmul.bf16.gmra.mxu0 %v243
  %v1059 = vpop.f32.mrf.mxu0
  %v1060 = vadd.f32 0.0, %v1059
  %v1061 = vpop.f32.mrf.mxu0
  %v1062 = vadd.f32 0.0, %v1061
  %1063 = vmatmul.bf16.gmra.mxu0 %v246
  %v1064 = vpop.f32.mrf.mxu0
  %v1065 = vadd.f32 0.0, %v1064
  %v1066 = vpop.f32.mrf.mxu0
  %v1067 = vadd.f32 0.0, %v1066
  %1068 = vmatmul.bf16.gmra.mxu0 %v249
  %v1069 = vpop.f32.mrf.mxu0
  %v1070 = vadd.f32 0.0, %v1069
  %v1071 = vpop.f32.mrf.mxu0
  %v1072 = vadd.f32 0.0, %v1071
  %1073 = vmatmul.bf16.gmra.mxu0 %v919
  %v1074 = vpop.f32.mrf.mxu0
  %v1075 = vadd.f32 0.0, %v1074
  %v1076 = vpop.f32.mrf.mxu0
  %v1077 = vadd.f32 0.0, %v1076
  %1078 = vdwg.mxu0
  %v1079 = vadd.f32 %v834, %v931
  %v1080 = vadd.f32 %v835, %v1010
  %v1081 = vadd.f32 %v836, %v933
  %v1082 = vadd.f32 %v837, %v1012
  %v1083 = vadd.f32 %v838, %v936
  %v1084 = vadd.f32 %v839, %v1015
  %v1085 = vadd.f32 %v840, %v938
  %v1086 = vadd.f32 %v841, %v1017
  %v1087 = vadd.f32 %v842, %v941
  %v1088 = vadd.f32 %v843, %v1020
  %v1089 = vadd.f32 %v844, %v943
  %v1090 = vadd.f32 %v845, %v1022
  %v1091 = vadd.f32 %v846, %v946
  %v1092 = vadd.f32 %v847, %v1025
  %v1093 = vadd.f32 %v848, %v948
  %v1094 = vadd.f32 %v849, %v1027
  %v1095 = vadd.f32 %v850, %v951
  %v1096 = vadd.f32 %v851, %v1030
  %v1097 = vadd.f32 %v852, %v953
  %v1098 = vadd.f32 %v853, %v1032
  %v1099 = vadd.f32 %v854, %v956
  %v1100 = vadd.f32 %v855, %v1035
  %v1101 = vadd.f32 %v856, %v958
  %v1102 = vadd.f32 %v857, %v1037
  %v1103 = vadd.f32 %v858, %v961
  %v1104 = vadd.f32 %v859, %v1040
  %v1105 = vadd.f32 %v860, %v963
  %v1106 = vadd.f32 %v861, %v1042
  %v1107 = vadd.f32 %v862, %v966
  %v1108 = vadd.f32 %v863, %v1045
  %v1109 = vadd.f32 %v864, %v968
  %v1110 = vadd.f32 %v865, %v1047
  %v1111 = vadd.f32 %v866, %v971
  %v1112 = vadd.f32 %v867, %v1050
  %v1113 = vadd.f32 %v868, %v973
  %v1114 = vadd.f32 %v869, %v1052
  %v1115 = vadd.f32 %v870, %v976
  %v1116 = vadd.f32 %v871, %v1055
  %v1117 = vadd.f32 %v872, %v978
  %v1118 = vadd.f32 %v873, %v1057
  %v1119 = vadd.f32 %v874, %v981
  %v1120 = vadd.f32 %v875, %v1060
  %v1121 = vadd.f32 %v876, %v983
  %v1122 = vadd.f32 %v877, %v1062
  %v1123 = vadd.f32 %v878, %v986
  %v1124 = vadd.f32 %v879, %v1065
  %v1125 = vadd.f32 %v880, %v988
  %v1126 = vadd.f32 %v881, %v1067
  %v1127 = vadd.f32 %v882, %v991
  %v1128 = vadd.f32 %v883, %v1070
  %v1129 = vadd.f32 %v884, %v993
  %v1130 = vadd.f32 %v885, %v1072
  %v1131 = vadd.f32 %v886, %v996
  %v1132 = vadd.f32 %v887, %v1075
  %v1133 = vadd.f32 %v888, %v998
  %v1134 = vadd.f32 %v889, %v1077
  %s1135 = scalar_lea.vmem %s1, 128
  %v1136 = vld [vmem:[%s1135] sm:$0xff]
  %v1137 = vld [vmem:[%s1135 + $0x8] sm:$0xff]
  %v1138 = vld [vmem:[%s1135 + $0x10] sm:$0xff]
  %v1139 = vld [vmem:[%s1135 + $0x18] sm:$0xff]
  %v1141 = vunpack.c.l.b16 %v108
  %v1142 = vpack.c.b16 %v1141, %v896
  %v1147 = vunpack.c.l.b16 %v1136
  %v1148 = vunpack.c.h.b16 %v1136
  %v1149 = vunpack.c.l.b16 %v1137
  %v1150 = vunpack.c.h.b16 %v1137
  %v1151 = vunpack.c.l.b16 %v1138
  %v1152 = vunpack.c.h.b16 %v1138
  %v1153 = vunpack.c.l.b16 %v1139
  %v1154 = vunpack.c.h.b16 %v1139
  %v1155 = vpack.c.b16 %v1149, %v1147
  %v1156 = vpack.c.b16 %v1150, %v1148
  %v1157 = vpack.c.b16 %v1153, %v1151
  %v1158 = vpack.c.b16 %v1154, %v1152
  %v1164 = vsel %vm208, %v1142, 0
  %1166 = vmatpush.bf16.msra.mxu0 0
  %1167 = vmatpush.bf16.msra.mxu0 0
  %1168 = vmatpush.bf16.msra.mxu0 0
  %1169 = vmatpush.bf16.msra.mxu0 0
  %1170 = vmatpush.bf16.msra.mxu0 0
  %1171 = vmatpush.bf16.msra.mxu0 0
  %1172 = vmatpush.bf16.msra.mxu0 %v1157
  %1173 = vmatpush.bf16.msra.mxu0 %v1155
  %1174 = vmatmul.bf16.gmra.mxu0 %v452
  %v1175 = vpop.f32.mrf.mxu0
  %v1176 = vadd.f32 0.0, %v1175
  %v1177 = vpop.f32.mrf.mxu0
  %v1178 = vadd.f32 0.0, %v1177
  %1179 = vmatmul.bf16.gmra.mxu0 %v455
  %v1180 = vpop.f32.mrf.mxu0
  %v1181 = vadd.f32 0.0, %v1180
  %v1182 = vpop.f32.mrf.mxu0
  %v1183 = vadd.f32 0.0, %v1182
  %1184 = vmatmul.bf16.gmra.mxu0 %v458
  %v1185 = vpop.f32.mrf.mxu0
  %v1186 = vadd.f32 0.0, %v1185
  %v1187 = vpop.f32.mrf.mxu0
  %v1188 = vadd.f32 0.0, %v1187
  %1189 = vmatmul.bf16.gmra.mxu0 %v461
  %v1190 = vpop.f32.mrf.mxu0
  %v1191 = vadd.f32 0.0, %v1190
  %v1192 = vpop.f32.mrf.mxu0
  %v1193 = vadd.f32 0.0, %v1192
  %1194 = vmatmul.bf16.gmra.mxu0 %v464
  %v1195 = vpop.f32.mrf.mxu0
  %v1196 = vadd.f32 0.0, %v1195
  %v1197 = vpop.f32.mrf.mxu0
  %v1198 = vadd.f32 0.0, %v1197
  %1199 = vmatmul.bf16.gmra.mxu0 %v467
  %v1200 = vpop.f32.mrf.mxu0
  %v1201 = vadd.f32 0.0, %v1200
  %v1202 = vpop.f32.mrf.mxu0
  %v1203 = vadd.f32 0.0, %v1202
  %1204 = vmatmul.bf16.gmra.mxu0 %v470
  %v1205 = vpop.f32.mrf.mxu0
  %v1206 = vadd.f32 0.0, %v1205
  %v1207 = vpop.f32.mrf.mxu0
  %v1208 = vadd.f32 0.0, %v1207
  %1209 = vmatmul.bf16.gmra.mxu0 %v473
  %v1210 = vpop.f32.mrf.mxu0
  %v1211 = vadd.f32 0.0, %v1210
  %v1212 = vpop.f32.mrf.mxu0
  %v1213 = vadd.f32 0.0, %v1212
  %1214 = vmatmul.bf16.gmra.mxu0 %v476
  %v1215 = vpop.f32.mrf.mxu0
  %v1216 = vadd.f32 0.0, %v1215
  %v1217 = vpop.f32.mrf.mxu0
  %v1218 = vadd.f32 0.0, %v1217
  %1219 = vmatmul.bf16.gmra.mxu0 %v479
  %v1220 = vpop.f32.mrf.mxu0
  %v1221 = vadd.f32 0.0, %v1220
  %v1222 = vpop.f32.mrf.mxu0
  %v1223 = vadd.f32 0.0, %v1222
  %1224 = vmatmul.bf16.gmra.mxu0 %v482
  %v1225 = vpop.f32.mrf.mxu0
  %v1226 = vadd.f32 0.0, %v1225
  %v1227 = vpop.f32.mrf.mxu0
  %v1228 = vadd.f32 0.0, %v1227
  %1229 = vmatmul.bf16.gmra.mxu0 %v485
  %v1230 = vpop.f32.mrf.mxu0
  %v1231 = vadd.f32 0.0, %v1230
  %v1232 = vpop.f32.mrf.mxu0
  %v1233 = vadd.f32 0.0, %v1232
  %1234 = vmatmul.bf16.gmra.mxu0 %v674
  %v1235 = vpop.f32.mrf.mxu0
  %v1236 = vadd.f32 0.0, %v1235
  %v1237 = vpop.f32.mrf.mxu0
  %v1238 = vadd.f32 0.0, %v1237
  %1239 = vmatmul.bf16.gmra.mxu0 %v1164
  %v1240 = vpop.f32.mrf.mxu0
  %v1241 = vadd.f32 0.0, %v1240
  %v1242 = vpop.f32.mrf.mxu0
  %v1243 = vadd.f32 0.0, %v1242
  %1244 = vdwg.mxu0
  %1245 = vmatpush.bf16.msra.mxu0 0
  %1246 = vmatpush.bf16.msra.mxu0 0
  %1247 = vmatpush.bf16.msra.mxu0 0
  %1248 = vmatpush.bf16.msra.mxu0 0
  %1249 = vmatpush.bf16.msra.mxu0 0
  %1250 = vmatpush.bf16.msra.mxu0 0
  %1251 = vmatpush.bf16.msra.mxu0 %v1158
  %1252 = vmatpush.bf16.msra.mxu0 %v1156
  %1253 = vmatmul.bf16.gmra.mxu0 %v452
  %v1254 = vpop.f32.mrf.mxu0
  %v1255 = vadd.f32 0.0, %v1254
  %v1256 = vpop.f32.mrf.mxu0
  %v1257 = vadd.f32 0.0, %v1256
  %1258 = vmatmul.bf16.gmra.mxu0 %v455
  %v1259 = vpop.f32.mrf.mxu0
  %v1260 = vadd.f32 0.0, %v1259
  %v1261 = vpop.f32.mrf.mxu0
  %v1262 = vadd.f32 0.0, %v1261
  %1263 = vmatmul.bf16.gmra.mxu0 %v458
  %v1264 = vpop.f32.mrf.mxu0
  %v1265 = vadd.f32 0.0, %v1264
  %v1266 = vpop.f32.mrf.mxu0
  %v1267 = vadd.f32 0.0, %v1266
  %1268 = vmatmul.bf16.gmra.mxu0 %v461
  %v1269 = vpop.f32.mrf.mxu0
  %v1270 = vadd.f32 0.0, %v1269
  %v1271 = vpop.f32.mrf.mxu0
  %v1272 = vadd.f32 0.0, %v1271
  %1273 = vmatmul.bf16.gmra.mxu0 %v464
  %v1274 = vpop.f32.mrf.mxu0
  %v1275 = vadd.f32 0.0, %v1274
  %v1276 = vpop.f32.mrf.mxu0
  %v1277 = vadd.f32 0.0, %v1276
  %1278 = vmatmul.bf16.gmra.mxu0 %v467
  %v1279 = vpop.f32.mrf.mxu0
  %v1280 = vadd.f32 0.0, %v1279
  %v1281 = vpop.f32.mrf.mxu0
  %v1282 = vadd.f32 0.0, %v1281
  %1283 = vmatmul.bf16.gmra.mxu0 %v470
  %v1284 = vpop.f32.mrf.mxu0
  %v1285 = vadd.f32 0.0, %v1284
  %v1286 = vpop.f32.mrf.mxu0
  %v1287 = vadd.f32 0.0, %v1286
  %1288 = vmatmul.bf16.gmra.mxu0 %v473
  %v1289 = vpop.f32.mrf.mxu0
  %v1290 = vadd.f32 0.0, %v1289
  %v1291 = vpop.f32.mrf.mxu0
  %v1292 = vadd.f32 0.0, %v1291
  %1293 = vmatmul.bf16.gmra.mxu0 %v476
  %v1294 = vpop.f32.mrf.mxu0
  %v1295 = vadd.f32 0.0, %v1294
  %v1296 = vpop.f32.mrf.mxu0
  %v1297 = vadd.f32 0.0, %v1296
  %1298 = vmatmul.bf16.gmra.mxu0 %v479
  %v1299 = vpop.f32.mrf.mxu0
  %v1300 = vadd.f32 0.0, %v1299
  %v1301 = vpop.f32.mrf.mxu0
  %v1302 = vadd.f32 0.0, %v1301
  %1303 = vmatmul.bf16.gmra.mxu0 %v482
  %v1304 = vpop.f32.mrf.mxu0
  %v1305 = vadd.f32 0.0, %v1304
  %v1306 = vpop.f32.mrf.mxu0
  %v1307 = vadd.f32 0.0, %v1306
  %1308 = vmatmul.bf16.gmra.mxu0 %v485
  %v1309 = vpop.f32.mrf.mxu0
  %v1310 = vadd.f32 0.0, %v1309
  %v1311 = vpop.f32.mrf.mxu0
  %v1312 = vadd.f32 0.0, %v1311
  %1313 = vmatmul.bf16.gmra.mxu0 %v674
  %v1314 = vpop.f32.mrf.mxu0
  %v1315 = vadd.f32 0.0, %v1314
  %v1316 = vpop.f32.mrf.mxu0
  %v1317 = vadd.f32 0.0, %v1316
  %1318 = vmatmul.bf16.gmra.mxu0 %v1164
  %v1319 = vpop.f32.mrf.mxu0
  %v1320 = vadd.f32 0.0, %v1319
  %v1321 = vpop.f32.mrf.mxu0
  %v1322 = vadd.f32 0.0, %v1321
  %1323 = vdwg.mxu0
  %v1324 = vadd.f32 %v1079, %v1176
  %v1325 = vadd.f32 %v1080, %v1255
  %v1326 = vadd.f32 %v1081, %v1178
  %v1327 = vadd.f32 %v1082, %v1257
  %v1328 = vadd.f32 %v1083, %v1181
  %v1329 = vadd.f32 %v1084, %v1260
  %v1330 = vadd.f32 %v1085, %v1183
  %v1331 = vadd.f32 %v1086, %v1262
  %v1332 = vadd.f32 %v1087, %v1186
  %v1333 = vadd.f32 %v1088, %v1265
  %v1334 = vadd.f32 %v1089, %v1188
  %v1335 = vadd.f32 %v1090, %v1267
  %v1336 = vadd.f32 %v1091, %v1191
  %v1337 = vadd.f32 %v1092, %v1270
  %v1338 = vadd.f32 %v1093, %v1193
  %v1339 = vadd.f32 %v1094, %v1272
  %v1340 = vadd.f32 %v1095, %v1196
  %v1341 = vadd.f32 %v1096, %v1275
  %v1342 = vadd.f32 %v1097, %v1198
  %v1343 = vadd.f32 %v1098, %v1277
  %v1344 = vadd.f32 %v1099, %v1201
  %v1345 = vadd.f32 %v1100, %v1280
  %v1346 = vadd.f32 %v1101, %v1203
  %v1347 = vadd.f32 %v1102, %v1282
  %v1348 = vadd.f32 %v1103, %v1206
  %v1349 = vadd.f32 %v1104, %v1285
  %v1350 = vadd.f32 %v1105, %v1208
  %v1351 = vadd.f32 %v1106, %v1287
  %v1352 = vadd.f32 %v1107, %v1211
  %v1353 = vadd.f32 %v1108, %v1290
  %v1354 = vadd.f32 %v1109, %v1213
  %v1355 = vadd.f32 %v1110, %v1292
  %v1356 = vadd.f32 %v1111, %v1216
  %v1357 = vadd.f32 %v1112, %v1295
  %v1358 = vadd.f32 %v1113, %v1218
  %v1359 = vadd.f32 %v1114, %v1297
  %v1360 = vadd.f32 %v1115, %v1221
  %v1361 = vadd.f32 %v1116, %v1300
  %v1362 = vadd.f32 %v1117, %v1223
  %v1363 = vadd.f32 %v1118, %v1302
  %v1364 = vadd.f32 %v1119, %v1226
  %v1365 = vadd.f32 %v1120, %v1305
  %v1366 = vadd.f32 %v1121, %v1228
  %v1367 = vadd.f32 %v1122, %v1307
  %v1368 = vadd.f32 %v1123, %v1231
  %v1369 = vadd.f32 %v1124, %v1310
  %v1370 = vadd.f32 %v1125, %v1233
  %v1371 = vadd.f32 %v1126, %v1312
  %v1372 = vadd.f32 %v1127, %v1236
  %v1373 = vadd.f32 %v1128, %v1315
  %v1374 = vadd.f32 %v1129, %v1238
  %v1375 = vadd.f32 %v1130, %v1317
  %v1376 = vadd.f32 %v1131, %v1241
  %v1377 = vadd.f32 %v1132, %v1320
  %v1378 = vadd.f32 %v1133, %v1243
  %v1379 = vadd.f32 %v1134, %v1322
  %v1380 = vld [vmem:[%s2] sm:$0x3]
  %v1382 = vperm.slane %v1380, 0
  %v1383 = vperm.slane %v1380, 1
  %v1386 = vadd.f32 %v1324, %v1382
  %v1387 = vadd.f32 %v1325, %v1383
  %v1388 = vadd.f32 %v1326, %v1382
  %v1389 = vadd.f32 %v1327, %v1383
  %v1390 = vadd.f32 %v1328, %v1382
  %v1391 = vadd.f32 %v1329, %v1383
  %v1392 = vadd.f32 %v1330, %v1382
  %v1393 = vadd.f32 %v1331, %v1383
  %v1394 = vadd.f32 %v1332, %v1382
  %v1395 = vadd.f32 %v1333, %v1383
  %v1396 = vadd.f32 %v1334, %v1382
  %v1397 = vadd.f32 %v1335, %v1383
  %v1398 = vadd.f32 %v1336, %v1382
  %v1399 = vadd.f32 %v1337, %v1383
  %v1400 = vadd.f32 %v1338, %v1382
  %v1401 = vadd.f32 %v1339, %v1383
  %v1402 = vadd.f32 %v1340, %v1382
  %v1403 = vadd.f32 %v1341, %v1383
  %v1404 = vadd.f32 %v1342, %v1382
  %v1405 = vadd.f32 %v1343, %v1383
  %v1406 = vadd.f32 %v1344, %v1382
  %v1407 = vadd.f32 %v1345, %v1383
  %v1408 = vadd.f32 %v1346, %v1382
  %v1409 = vadd.f32 %v1347, %v1383
  %v1410 = vadd.f32 %v1348, %v1382
  %v1411 = vadd.f32 %v1349, %v1383
  %v1412 = vadd.f32 %v1350, %v1382
  %v1413 = vadd.f32 %v1351, %v1383
  %v1414 = vadd.f32 %v1352, %v1382
  %v1415 = vadd.f32 %v1353, %v1383
  %v1416 = vadd.f32 %v1354, %v1382
  %v1417 = vadd.f32 %v1355, %v1383
  %v1418 = vadd.f32 %v1356, %v1382
  %v1419 = vadd.f32 %v1357, %v1383
  %v1420 = vadd.f32 %v1358, %v1382
  %v1421 = vadd.f32 %v1359, %v1383
  %v1422 = vadd.f32 %v1360, %v1382
  %v1423 = vadd.f32 %v1361, %v1383
  %v1424 = vadd.f32 %v1362, %v1382
  %v1425 = vadd.f32 %v1363, %v1383
  %v1426 = vadd.f32 %v1364, %v1382
  %v1427 = vadd.f32 %v1365, %v1383
  %v1428 = vadd.f32 %v1366, %v1382
  %v1429 = vadd.f32 %v1367, %v1383
  %v1430 = vadd.f32 %v1368, %v1382
  %v1431 = vadd.f32 %v1369, %v1383
  %v1432 = vadd.f32 %v1370, %v1382
  %v1433 = vadd.f32 %v1371, %v1383
  %v1434 = vadd.f32 %v1372, %v1382
  %v1435 = vadd.f32 %v1373, %v1383
  %v1436 = vadd.f32 %v1374, %v1382
  %v1437 = vadd.f32 %v1375, %v1383
  %v1438 = vadd.f32 %v1376, %v1382
  %v1439 = vadd.f32 %v1377, %v1383
  %v1440 = vadd.f32 %v1378, %v1382
  %v1441 = vadd.f32 %v1379, %v1383
  %v1442 = vtanh.pop %v1386
  %v1443 = vtanh.pop %v1387
  %v1444 = vtanh.pop %v1388
  %v1445 = vtanh.pop %v1389
  %v1446 = vtanh.pop %v1390
  %v1447 = vtanh.pop %v1391
  %v1448 = vtanh.pop %v1392
  %v1449 = vtanh.pop %v1393
  %v1450 = vtanh.pop %v1394
  %v1451 = vtanh.pop %v1395
  %v1452 = vtanh.pop %v1396
  %v1453 = vtanh.pop %v1397
  %v1454 = vtanh.pop %v1398
  %v1455 = vtanh.pop %v1399
  %v1456 = vtanh.pop %v1400
  %v1457 = vtanh.pop %v1401
  %v1458 = vtanh.pop %v1402
  %v1459 = vtanh.pop %v1403
  %v1460 = vtanh.pop %v1404
  %v1461 = vtanh.pop %v1405
  %v1462 = vtanh.pop %v1406
  %v1463 = vtanh.pop %v1407
  %v1464 = vtanh.pop %v1408
  %v1465 = vtanh.pop %v1409
  %v1466 = vtanh.pop %v1410
  %v1467 = vtanh.pop %v1411
  %v1468 = vtanh.pop %v1412
  %v1469 = vtanh.pop %v1413
  %v1470 = vtanh.pop %v1414
  %v1471 = vtanh.pop %v1415
  %v1472 = vtanh.pop %v1416
  %v1473 = vtanh.pop %v1417
  %v1474 = vtanh.pop %v1418
  %v1475 = vtanh.pop %v1419
  %v1476 = vtanh.pop %v1420
  %v1477 = vtanh.pop %v1421
  %v1478 = vtanh.pop %v1422
  %v1479 = vtanh.pop %v1423
  %v1480 = vtanh.pop %v1424
  %v1481 = vtanh.pop %v1425
  %v1482 = vtanh.pop %v1426
  %v1483 = vtanh.pop %v1427
  %v1484 = vtanh.pop %v1428
  %v1485 = vtanh.pop %v1429
  %v1486 = vtanh.pop %v1430
  %v1487 = vtanh.pop %v1431
  %v1488 = vtanh.pop %v1432
  %v1489 = vtanh.pop %v1433
  %v1490 = vtanh.pop %v1434
  %v1491 = vtanh.pop %v1435
  %v1492 = vtanh.pop %v1436
  %v1493 = vtanh.pop %v1437
  %v1494 = vtanh.pop %v1438
  %v1495 = vtanh.pop %v1439
  %v1496 = vtanh.pop %v1440
  %v1497 = vtanh.pop %v1441
  %v1498 = vadd.f32 %v1442, %v1444
  %v1499 = vadd.f32 %v1443, %v1445
  %v1500 = vadd.f32 %v1446, %v1448
  %v1501 = vadd.f32 %v1447, %v1449
  %v1502 = vadd.f32 %v1450, %v1452
  %v1503 = vadd.f32 %v1451, %v1453
  %v1504 = vadd.f32 %v1454, %v1456
  %v1505 = vadd.f32 %v1455, %v1457
  %v1506 = vadd.f32 %v1458, %v1460
  %v1507 = vadd.f32 %v1459, %v1461
  %v1508 = vadd.f32 %v1462, %v1464
  %v1509 = vadd.f32 %v1463, %v1465
  %v1510 = vadd.f32 %v1466, %v1468
  %v1511 = vadd.f32 %v1467, %v1469
  %v1512 = vadd.f32 %v1470, %v1472
  %v1513 = vadd.f32 %v1471, %v1473
  %v1514 = vadd.f32 %v1474, %v1476
  %v1515 = vadd.f32 %v1475, %v1477
  %v1516 = vadd.f32 %v1478, %v1480
  %v1517 = vadd.f32 %v1479, %v1481
  %v1518 = vadd.f32 %v1482, %v1484
  %v1519 = vadd.f32 %v1483, %v1485
  %v1520 = vadd.f32 %v1486, %v1488
  %v1521 = vadd.f32 %v1487, %v1489
  %v1522 = vadd.f32 %v1490, %v1492
  %v1523 = vadd.f32 %v1491, %v1493
  %v1524 = vadd.f32 %v1494, %v1496
  %v1525 = vadd.f32 %v1495, %v1497
  %v1526 = vpack.c.bf16 %v1500, %v1498
  %v1527 = vpack.c.bf16 %v1501, %v1499
  %v1528 = vpack.c.bf16 %v1504, %v1502
  %v1529 = vpack.c.bf16 %v1505, %v1503
  %v1530 = vpack.c.bf16 %v1508, %v1506
  %v1531 = vpack.c.bf16 %v1509, %v1507
  %v1532 = vpack.c.bf16 %v1512, %v1510
  %v1533 = vpack.c.bf16 %v1513, %v1511
  %v1534 = vpack.c.bf16 %v1516, %v1514
  %v1535 = vpack.c.bf16 %v1517, %v1515
  %v1536 = vpack.c.bf16 %v1520, %v1518
  %v1537 = vpack.c.bf16 %v1521, %v1519
  %v1538 = vpack.c.bf16 %v1524, %v1522
  %v1539 = vpack.c.bf16 %v1525, %v1523
  %v1540 = vld [vmem:[%s7] sm:$0xf]
  %v1541 = vld [vmem:[%s7 + $0x4] sm:$0xf]
  %v1542 = vld [vmem:[%s7 + $0x8] sm:$0xf]
  %v1543 = vld [vmem:[%s7 + $0xc] sm:$0xf]
  %v1544 = vld [vmem:[%s7 + $0x10] sm:$0xf]
  %v1545 = vld [vmem:[%s7 + $0x14] sm:$0xf]
  %v1546 = vld [vmem:[%s7 + $0x18] sm:$0xf]
  %v1547 = vld [vmem:[%s7 + $0x1c] sm:$0xf]
  %v1548 = vld [vmem:[%s7 + $0x20] sm:$0xf]
  %v1549 = vld [vmem:[%s7 + $0x24] sm:$0xf]
  %v1550 = vld [vmem:[%s7 + $0x28] sm:$0xf]
  %v1551 = vld [vmem:[%s7 + $0x2c] sm:$0xf]
  %v1552 = vld [vmem:[%s7 + $0x30] sm:$0xf]
  %v1553 = vld [vmem:[%s7 + $0x34] sm:$0xf]
  %v1554 = vld [vmem:[%s7 + $0x38] sm:$0xf]
  %v1555 = vld [vmem:[%s7 + $0x3c] sm:$0xf]
  %v1556 = vld [vmem:[%s7 + $0x40] sm:$0xf]
  %v1557 = vld [vmem:[%s7 + $0x44] sm:$0xf]
  %v1558 = vld [vmem:[%s7 + $0x48] sm:$0xf]
  %v1559 = vld [vmem:[%s7 + $0x4c] sm:$0xf]
  %v1560 = vld [vmem:[%s7 + $0x50] sm:$0xf]
  %v1582 = vunpack.c.l.b16 %v1540
  %v1583 = vunpack.c.l.b16 %v1541
  %v1584 = vunpack.c.l.b16 %v1542
  %v1585 = vunpack.c.l.b16 %v1543
  %v1586 = vunpack.c.l.b16 %v1544
  %v1587 = vunpack.c.l.b16 %v1545
  %v1588 = vunpack.c.l.b16 %v1546
  %v1589 = vunpack.c.l.b16 %v1547
  %v1590 = vunpack.c.l.b16 %v1548
  %v1591 = vunpack.c.l.b16 %v1549
  %v1592 = vunpack.c.l.b16 %v1550
  %v1593 = vunpack.c.l.b16 %v1551
  %v1594 = vunpack.c.l.b16 %v1552
  %v1595 = vunpack.c.l.b16 %v1553
  %v1596 = vunpack.c.l.b16 %v1554
  %v1597 = vunpack.c.l.b16 %v1555
  %v1598 = vunpack.c.l.b16 %v1556
  %v1599 = vunpack.c.l.b16 %v1557
  %v1600 = vunpack.c.l.b16 %v1558
  %v1601 = vunpack.c.l.b16 %v1559
  %v1602 = vunpack.c.l.b16 %v1560
  %v1603 = vpack.c.b16 %v1583, %v1582
  %v1604 = vpack.c.b16 %v1585, %v1584
  %v1605 = vpack.c.b16 %v1587, %v1586
  %v1606 = vpack.c.b16 %v1589, %v1588
  %v1607 = vpack.c.b16 %v1591, %v1590
  %v1608 = vpack.c.b16 %v1593, %v1592
  %v1609 = vpack.c.b16 %v1595, %v1594
  %v1610 = vpack.c.b16 %v1597, %v1596
  %v1611 = vpack.c.b16 %v1599, %v1598
  %v1612 = vpack.c.b16 %v1601, %v1600
  %v1613 = vpack.c.b16 %v1602, %v1602
  %vm1624 = vcmask 326656
  %v1626 = vsel %vm1624, %v1527, 0
  %v1629 = vsel %vm1624, %v1529, 0
  %v1632 = vsel %vm1624, %v1531, 0
  %v1635 = vsel %vm1624, %v1533, 0
  %v1638 = vsel %vm1624, %v1535, 0
  %v1641 = vsel %vm1624, %v1537, 0
  %v1644 = vsel %vm1624, %v1539, 0
  %vm1646 = vcmask 1043456
  %v1648 = vsel %vm1646, %v1613, 0
  %1650 = vmatpush.bf16.msra.mxu0 %v1610
  %1651 = vmatpush.bf16.msra.mxu0 %v1609
  %1652 = vmatpush.bf16.msra.mxu0 %v1608
  %1653 = vmatpush.bf16.msra.mxu0 %v1607
  %1654 = vmatpush.bf16.msra.mxu0 %v1606
  %1655 = vmatpush.bf16.msra.mxu0 %v1605
  %1656 = vmatpush.bf16.msra.mxu0 %v1604
  %1657 = vmatpush.bf16.msra.mxu0 %v1603
  %1658 = vmatmul.bf16.gmra.mxu0 %v1526
  %v1659 = vpop.f32.mrf.mxu0
  %v1660 = vadd.f32 0.0, %v1659
  %v1661 = vpop.f32.mrf.mxu0
  %v1662 = vadd.f32 0.0, %v1661
  %1663 = vmatmul.bf16.gmra.mxu0 %v1528
  %v1664 = vpop.f32.mrf.mxu0
  %v1665 = vadd.f32 0.0, %v1664
  %v1666 = vpop.f32.mrf.mxu0
  %v1667 = vadd.f32 0.0, %v1666
  %1668 = vmatmul.bf16.gmra.mxu0 %v1530
  %v1669 = vpop.f32.mrf.mxu0
  %v1670 = vadd.f32 0.0, %v1669
  %v1671 = vpop.f32.mrf.mxu0
  %v1672 = vadd.f32 0.0, %v1671
  %1673 = vmatmul.bf16.gmra.mxu0 %v1532
  %v1674 = vpop.f32.mrf.mxu0
  %v1675 = vadd.f32 0.0, %v1674
  %v1676 = vpop.f32.mrf.mxu0
  %v1677 = vadd.f32 0.0, %v1676
  %1678 = vmatmul.bf16.gmra.mxu0 %v1534
  %v1679 = vpop.f32.mrf.mxu0
  %v1680 = vadd.f32 0.0, %v1679
  %v1681 = vpop.f32.mrf.mxu0
  %v1682 = vadd.f32 0.0, %v1681
  %1683 = vmatmul.bf16.gmra.mxu0 %v1536
  %v1684 = vpop.f32.mrf.mxu0
  %v1685 = vadd.f32 0.0, %v1684
  %v1686 = vpop.f32.mrf.mxu0
  %v1687 = vadd.f32 0.0, %v1686
  %1688 = vmatmul.bf16.gmra.mxu0 %v1538
  %v1689 = vpop.f32.mrf.mxu0
  %v1690 = vadd.f32 0.0, %v1689
  %v1691 = vpop.f32.mrf.mxu0
  %v1692 = vadd.f32 0.0, %v1691
  %1693 = vdwg.mxu0
  %1694 = vmatpush.bf16.msra.mxu0 0
  %1695 = vmatpush.bf16.msra.mxu0 0
  %1696 = vmatpush.bf16.msra.mxu0 0
  %1697 = vmatpush.bf16.msra.mxu0 0
  %1698 = vmatpush.bf16.msra.mxu0 0
  %1699 = vmatpush.bf16.msra.mxu0 %v1648
  %1700 = vmatpush.bf16.msra.mxu0 %v1612
  %1701 = vmatpush.bf16.msra.mxu0 %v1611
  %1702 = vmatmul.bf16.gmra.mxu0 %v1626
  %v1703 = vpop.f32.mrf.mxu0
  %v1704 = vadd.f32 %v1660, %v1703
  %v1705 = vpop.f32.mrf.mxu0
  %v1706 = vadd.f32 %v1662, %v1705
  %1707 = vmatmul.bf16.gmra.mxu0 %v1629
  %v1708 = vpop.f32.mrf.mxu0
  %v1709 = vadd.f32 %v1665, %v1708
  %v1710 = vpop.f32.mrf.mxu0
  %v1711 = vadd.f32 %v1667, %v1710
  %1712 = vmatmul.bf16.gmra.mxu0 %v1632
  %v1713 = vpop.f32.mrf.mxu0
  %v1714 = vadd.f32 %v1670, %v1713
  %v1715 = vpop.f32.mrf.mxu0
  %v1716 = vadd.f32 %v1672, %v1715
  %1717 = vmatmul.bf16.gmra.mxu0 %v1635
  %v1718 = vpop.f32.mrf.mxu0
  %v1719 = vadd.f32 %v1675, %v1718
  %v1720 = vpop.f32.mrf.mxu0
  %v1721 = vadd.f32 %v1677, %v1720
  %1722 = vmatmul.bf16.gmra.mxu0 %v1638
  %v1723 = vpop.f32.mrf.mxu0
  %v1724 = vadd.f32 %v1680, %v1723
  %v1725 = vpop.f32.mrf.mxu0
  %v1726 = vadd.f32 %v1682, %v1725
  %1727 = vmatmul.bf16.gmra.mxu0 %v1641
  %v1728 = vpop.f32.mrf.mxu0
  %v1729 = vadd.f32 %v1685, %v1728
  %v1730 = vpop.f32.mrf.mxu0
  %v1731 = vadd.f32 %v1687, %v1730
  %1732 = vmatmul.bf16.gmra.mxu0 %v1644
  %v1733 = vpop.f32.mrf.mxu0
  %v1734 = vadd.f32 %v1690, %v1733
  %v1735 = vpop.f32.mrf.mxu0
  %v1736 = vadd.f32 %v1692, %v1735
  %1737 = vdwg.mxu0
  %v1738 = vpack.c.bf16 %v1704, %v1704
  %v1739 = vpack.c.bf16 %v1706, %v1706
  %v1740 = vpack.c.bf16 %v1709, %v1709
  %v1741 = vpack.c.bf16 %v1711, %v1711
  %v1742 = vpack.c.bf16 %v1714, %v1714
  %v1743 = vpack.c.bf16 %v1716, %v1716
  %v1744 = vpack.c.bf16 %v1719, %v1719
  %v1745 = vpack.c.bf16 %v1721, %v1721
  %v1746 = vpack.c.bf16 %v1724, %v1724
  %v1747 = vpack.c.bf16 %v1726, %v1726
  %v1748 = vpack.c.bf16 %v1729, %v1729
  %v1749 = vpack.c.bf16 %v1731, %v1731
  %v1750 = vpack.c.bf16 %v1734, %v1734
  %v1751 = vpack.c.bf16 %v1736, %v1736
  %v1752 = vld [vmem:[%s3] sm:$0xff]
  %v1753 = vld [vmem:[%s3 + $0x8] sm:$0xff]
  %v1754 = vld [vmem:[%s3 + $0x10] sm:$0xff]
  %v1755 = vld [vmem:[%s3 + $0x18] sm:$0xff]
  %v1756 = vld [vmem:[%s3 + $0x20] sm:$0xff]
  %v1757 = vld [vmem:[%s3 + $0x28] sm:$0xff]
  %v1758 = vld [vmem:[%s3 + $0x30] sm:$0xff]
  %v1759 = vld [vmem:[%s3 + $0x38] sm:$0xff]
  %v1760 = vld [vmem:[%s3 + $0x40] sm:$0xff]
  %v1761 = vld [vmem:[%s3 + $0x48] sm:$0xff]
  %v1762 = vld [vmem:[%s3 + $0x50] sm:$0x33]
  %s1763 = scalar_lea.vmem %s3, 88
  %v1764 = vld [vmem:[%s1763] sm:$0xff]
  %v1765 = vld [vmem:[%s1763 + $0x8] sm:$0xff]
  %v1766 = vld [vmem:[%s1763 + $0x10] sm:$0xff]
  %v1767 = vld [vmem:[%s1763 + $0x18] sm:$0xff]
  %v1768 = vld [vmem:[%s1763 + $0x20] sm:$0xff]
  %v1769 = vld [vmem:[%s1763 + $0x28] sm:$0xff]
  %v1770 = vld [vmem:[%s1763 + $0x30] sm:$0xff]
  %v1771 = vld [vmem:[%s1763 + $0x38] sm:$0xff]
  %v1772 = vld [vmem:[%s1763 + $0x40] sm:$0xff]
  %v1773 = vld [vmem:[%s1763 + $0x48] sm:$0xff]
  %v1774 = vld [vmem:[%s1763 + $0x50] sm:$0x33]
  %v1785 = vunpack.c.l.b16 %v1739
  %v1786 = vunpack.c.l.b16 %v1740
  %v1787 = vunpack.c.l.b16 %v1741
  %v1788 = vunpack.c.l.b16 %v1742
  %v1789 = vunpack.c.l.b16 %v1743
  %v1790 = vunpack.c.l.b16 %v1744
  %v1791 = vunpack.c.l.b16 %v1745
  %v1792 = vunpack.c.l.b16 %v1746
  %v1793 = vunpack.c.l.b16 %v1747
  %v1794 = vunpack.c.l.b16 %v1748
  %v1795 = vpack.c.b16 %v1786, %v1785
  %v1796 = vpack.c.b16 %v1788, %v1787
  %v1797 = vpack.c.b16 %v1790, %v1789
  %v1798 = vpack.c.b16 %v1792, %v1791
  %v1799 = vpack.c.b16 %v1794, %v1793
  %v1811 = vunpack.c.l.b16 %v1764
  %v1812 = vunpack.c.h.b16 %v1764
  %v1813 = vunpack.c.l.b16 %v1765
  %v1814 = vunpack.c.h.b16 %v1765
  %v1815 = vunpack.c.l.b16 %v1766
  %v1816 = vunpack.c.h.b16 %v1766
  %v1817 = vunpack.c.l.b16 %v1767
  %v1818 = vunpack.c.h.b16 %v1767
  %v1819 = vunpack.c.l.b16 %v1768
  %v1820 = vunpack.c.h.b16 %v1768
  %v1821 = vunpack.c.l.b16 %v1769
  %v1822 = vunpack.c.h.b16 %v1769
  %v1823 = vunpack.c.l.b16 %v1770
  %v1824 = vunpack.c.h.b16 %v1770
  %v1825 = vunpack.c.l.b16 %v1771
  %v1826 = vunpack.c.h.b16 %v1771
  %v1827 = vunpack.c.l.b16 %v1772
  %v1828 = vunpack.c.h.b16 %v1772
  %v1829 = vunpack.c.l.b16 %v1773
  %v1830 = vunpack.c.h.b16 %v1773
  %v1831 = vunpack.c.l.b16 %v1774
  %v1832 = vunpack.c.h.b16 %v1774
  %v1833 = vpack.c.b16 %v1813, %v1811
  %v1834 = vpack.c.b16 %v1814, %v1812
  %v1835 = vpack.c.b16 %v1817, %v1815
  %v1836 = vpack.c.b16 %v1818, %v1816
  %v1837 = vpack.c.b16 %v1821, %v1819
  %v1838 = vpack.c.b16 %v1822, %v1820
  %v1839 = vpack.c.b16 %v1825, %v1823
  %v1840 = vpack.c.b16 %v1826, %v1824
  %v1841 = vpack.c.b16 %v1829, %v1827
  %v1842 = vpack.c.b16 %v1830, %v1828
  %v1843 = vpack.c.b16 %v1831, %v1831
  %v1844 = vpack.c.b16 %v1832, %v1832
  %vm1855 = vcmask 687104
  %v1857 = vsel %vm1855, %v1795, 0
  %v1860 = vsel %vm1855, %v1796, 0
  %v1863 = vsel %vm1855, %v1797, 0
  %v1866 = vsel %vm1855, %v1798, 0
  %v1869 = vsel %vm1855, %v1799, 0
  %vm1871 = vcmask 1041408
  %v1873 = vsel %vm1871, %v1843, 0
  %v1876 = vsel %vm1871, %v1844, 0
  %1878 = vmatpush.bf16.msra.mxu0 0
  %1879 = vmatpush.bf16.msra.mxu0 0
  %1880 = vmatpush.bf16.msra.mxu0 %v1873
  %1881 = vmatpush.bf16.msra.mxu0 %v1841
  %1882 = vmatpush.bf16.msra.mxu0 %v1839
  %1883 = vmatpush.bf16.msra.mxu0 %v1837
  %1884 = vmatpush.bf16.msra.mxu0 %v1835
  %1885 = vmatpush.bf16.msra.mxu0 %v1833
  %1886 = vmatmul.bf16.gmra.mxu0 %v1857
  %v1887 = vpop.f32.mrf.mxu0
  %v1888 = vadd.f32 0.0, %v1887
  %v1889 = vpop.f32.mrf.mxu0
  %v1890 = vadd.f32 0.0, %v1889
  %1891 = vmatmul.bf16.gmra.mxu0 %v1860
  %v1892 = vpop.f32.mrf.mxu0
  %v1893 = vadd.f32 0.0, %v1892
  %v1894 = vpop.f32.mrf.mxu0
  %v1895 = vadd.f32 0.0, %v1894
  %1896 = vmatmul.bf16.gmra.mxu0 %v1863
  %v1897 = vpop.f32.mrf.mxu0
  %v1898 = vadd.f32 0.0, %v1897
  %v1899 = vpop.f32.mrf.mxu0
  %v1900 = vadd.f32 0.0, %v1899
  %1901 = vmatmul.bf16.gmra.mxu0 %v1866
  %v1902 = vpop.f32.mrf.mxu0
  %v1903 = vadd.f32 0.0, %v1902
  %v1904 = vpop.f32.mrf.mxu0
  %v1905 = vadd.f32 0.0, %v1904
  %1906 = vmatmul.bf16.gmra.mxu0 %v1869
  %v1907 = vpop.f32.mrf.mxu0
  %v1908 = vadd.f32 0.0, %v1907
  %v1909 = vpop.f32.mrf.mxu0
  %v1910 = vadd.f32 0.0, %v1909
  %1911 = vdwg.mxu0
  %1912 = vmatpush.bf16.msra.mxu0 0
  %1913 = vmatpush.bf16.msra.mxu0 0
  %1914 = vmatpush.bf16.msra.mxu0 %v1876
  %1915 = vmatpush.bf16.msra.mxu0 %v1842
  %1916 = vmatpush.bf16.msra.mxu0 %v1840
  %1917 = vmatpush.bf16.msra.mxu0 %v1838
  %1918 = vmatpush.bf16.msra.mxu0 %v1836
  %1919 = vmatpush.bf16.msra.mxu0 %v1834
  %1920 = vmatmul.bf16.gmra.mxu0 %v1857
  %v1921 = vpop.f32.mrf.mxu0
  %v1922 = vadd.f32 0.0, %v1921
  %v1923 = vpop.f32.mrf.mxu0
  %v1924 = vadd.f32 0.0, %v1923
  %1925 = vmatmul.bf16.gmra.mxu0 %v1860
  %v1926 = vpop.f32.mrf.mxu0
  %v1927 = vadd.f32 0.0, %v1926
  %v1928 = vpop.f32.mrf.mxu0
  %v1929 = vadd.f32 0.0, %v1928
  %1930 = vmatmul.bf16.gmra.mxu0 %v1863
  %v1931 = vpop.f32.mrf.mxu0
  %v1932 = vadd.f32 0.0, %v1931
  %v1933 = vpop.f32.mrf.mxu0
  %v1934 = vadd.f32 0.0, %v1933
  %1935 = vmatmul.bf16.gmra.mxu0 %v1866
  %v1936 = vpop.f32.mrf.mxu0
  %v1937 = vadd.f32 0.0, %v1936
  %v1938 = vpop.f32.mrf.mxu0
  %v1939 = vadd.f32 0.0, %v1938
  %1940 = vmatmul.bf16.gmra.mxu0 %v1869
  %v1941 = vpop.f32.mrf.mxu0
  %v1942 = vadd.f32 0.0, %v1941
  %v1943 = vpop.f32.mrf.mxu0
  %v1944 = vadd.f32 0.0, %v1943
  %1945 = vdwg.mxu0
  %v1947 = vunpack.c.l.b16 %v1738
  %v1948 = vpack.c.b16 %v1785, %v1947
  %v1949 = vpack.c.b16 %v1787, %v1786
  %v1950 = vpack.c.b16 %v1789, %v1788
  %v1951 = vpack.c.b16 %v1791, %v1790
  %v1952 = vpack.c.b16 %v1793, %v1792
  %v1964 = vunpack.c.l.b16 %v1752
  %v1965 = vunpack.c.h.b16 %v1752
  %v1966 = vunpack.c.l.b16 %v1753
  %v1967 = vunpack.c.h.b16 %v1753
  %v1968 = vunpack.c.l.b16 %v1754
  %v1969 = vunpack.c.h.b16 %v1754
  %v1970 = vunpack.c.l.b16 %v1755
  %v1971 = vunpack.c.h.b16 %v1755
  %v1972 = vunpack.c.l.b16 %v1756
  %v1973 = vunpack.c.h.b16 %v1756
  %v1974 = vunpack.c.l.b16 %v1757
  %v1975 = vunpack.c.h.b16 %v1757
  %v1976 = vunpack.c.l.b16 %v1758
  %v1977 = vunpack.c.h.b16 %v1758
  %v1978 = vunpack.c.l.b16 %v1759
  %v1979 = vunpack.c.h.b16 %v1759
  %v1980 = vunpack.c.l.b16 %v1760
  %v1981 = vunpack.c.h.b16 %v1760
  %v1982 = vunpack.c.l.b16 %v1761
  %v1983 = vunpack.c.h.b16 %v1761
  %v1984 = vunpack.c.l.b16 %v1762
  %v1985 = vunpack.c.h.b16 %v1762
  %v1986 = vpack.c.b16 %v1966, %v1964
  %v1987 = vpack.c.b16 %v1967, %v1965
  %v1988 = vpack.c.b16 %v1970, %v1968
  %v1989 = vpack.c.b16 %v1971, %v1969
  %v1990 = vpack.c.b16 %v1974, %v1972
  %v1991 = vpack.c.b16 %v1975, %v1973
  %v1992 = vpack.c.b16 %v1978, %v1976
  %v1993 = vpack.c.b16 %v1979, %v1977
  %v1994 = vpack.c.b16 %v1982, %v1980
  %v1995 = vpack.c.b16 %v1983, %v1981
  %v1996 = vpack.c.b16 %v1984, %v1984
  %v1997 = vpack.c.b16 %v1985, %v1985
  %v2009 = vsel %vm1855, %v1948, 0
  %v2012 = vsel %vm1855, %v1949, 0
  %v2015 = vsel %vm1855, %v1950, 0
  %v2018 = vsel %vm1855, %v1951, 0
  %v2021 = vsel %vm1855, %v1952, 0
  %v2024 = vsel %vm1871, %v1996, 0
  %v2027 = vsel %vm1871, %v1997, 0
  %2029 = vmatpush.bf16.msra.mxu0 0
  %2030 = vmatpush.bf16.msra.mxu0 0
  %2031 = vmatpush.bf16.msra.mxu0 %v2024
  %2032 = vmatpush.bf16.msra.mxu0 %v1994
  %2033 = vmatpush.bf16.msra.mxu0 %v1992
  %2034 = vmatpush.bf16.msra.mxu0 %v1990
  %2035 = vmatpush.bf16.msra.mxu0 %v1988
  %2036 = vmatpush.bf16.msra.mxu0 %v1986
  %2037 = vmatmul.bf16.gmra.mxu0 %v2009
  %v2038 = vpop.f32.mrf.mxu0
  %v2039 = vadd.f32 %v1888, %v2038
  %v2040 = vpop.f32.mrf.mxu0
  %v2041 = vadd.f32 %v1890, %v2040
  %2042 = vmatmul.bf16.gmra.mxu0 %v2012
  %v2043 = vpop.f32.mrf.mxu0
  %v2044 = vadd.f32 %v1893, %v2043
  %v2045 = vpop.f32.mrf.mxu0
  %v2046 = vadd.f32 %v1895, %v2045
  %2047 = vmatmul.bf16.gmra.mxu0 %v2015
  %v2048 = vpop.f32.mrf.mxu0
  %v2049 = vadd.f32 %v1898, %v2048
  %v2050 = vpop.f32.mrf.mxu0
  %v2051 = vadd.f32 %v1900, %v2050
  %2052 = vmatmul.bf16.gmra.mxu0 %v2018
  %v2053 = vpop.f32.mrf.mxu0
  %v2054 = vadd.f32 %v1903, %v2053
  %v2055 = vpop.f32.mrf.mxu0
  %v2056 = vadd.f32 %v1905, %v2055
  %2057 = vmatmul.bf16.gmra.mxu0 %v2021
  %v2058 = vpop.f32.mrf.mxu0
  %v2059 = vadd.f32 %v1908, %v2058
  %v2060 = vpop.f32.mrf.mxu0
  %v2061 = vadd.f32 %v1910, %v2060
  %2062 = vdwg.mxu0
  %2063 = vmatpush.bf16.msra.mxu0 0
  %2064 = vmatpush.bf16.msra.mxu0 0
  %2065 = vmatpush.bf16.msra.mxu0 %v2027
  %2066 = vmatpush.bf16.msra.mxu0 %v1995
  %2067 = vmatpush.bf16.msra.mxu0 %v1993
  %2068 = vmatpush.bf16.msra.mxu0 %v1991
  %2069 = vmatpush.bf16.msra.mxu0 %v1989
  %2070 = vmatpush.bf16.msra.mxu0 %v1987
  %2071 = vmatmul.bf16.gmra.mxu0 %v2009
  %v2072 = vpop.f32.mrf.mxu0
  %v2073 = vadd.f32 %v1922, %v2072
  %v2074 = vpop.f32.mrf.mxu0
  %v2075 = vadd.f32 %v1924, %v2074
  %2076 = vmatmul.bf16.gmra.mxu0 %v2012
  %v2077 = vpop.f32.mrf.mxu0
  %v2078 = vadd.f32 %v1927, %v2077
  %v2079 = vpop.f32.mrf.mxu0
  %v2080 = vadd.f32 %v1929, %v2079
  %2081 = vmatmul.bf16.gmra.mxu0 %v2015
  %v2082 = vpop.f32.mrf.mxu0
  %v2083 = vadd.f32 %v1932, %v2082
  %v2084 = vpop.f32.mrf.mxu0
  %v2085 = vadd.f32 %v1934, %v2084
  %2086 = vmatmul.bf16.gmra.mxu0 %v2018
  %v2087 = vpop.f32.mrf.mxu0
  %v2088 = vadd.f32 %v1937, %v2087
  %v2089 = vpop.f32.mrf.mxu0
  %v2090 = vadd.f32 %v1939, %v2089
  %2091 = vmatmul.bf16.gmra.mxu0 %v2021
  %v2092 = vpop.f32.mrf.mxu0
  %v2093 = vadd.f32 %v1942, %v2092
  %v2094 = vpop.f32.mrf.mxu0
  %v2095 = vadd.f32 %v1944, %v2094
  %2096 = vdwg.mxu0
  %s2097 = scalar_lea.vmem %s3, 176
  %v2098 = vld [vmem:[%s2097] sm:$0xff]
  %v2099 = vld [vmem:[%s2097 + $0x8] sm:$0xff]
  %v2100 = vld [vmem:[%s2097 + $0x10] sm:$0xff]
  %v2101 = vld [vmem:[%s2097 + $0x18] sm:$0xff]
  %v2102 = vld [vmem:[%s2097 + $0x20] sm:$0xff]
  %v2103 = vld [vmem:[%s2097 + $0x28] sm:$0xff]
  %v2104 = vld [vmem:[%s2097 + $0x30] sm:$0xff]
  %v2105 = vld [vmem:[%s2097 + $0x38] sm:$0xff]
  %v2106 = vld [vmem:[%s2097 + $0x40] sm:$0xff]
  %v2107 = vld [vmem:[%s2097 + $0x48] sm:$0xff]
  %v2108 = vld [vmem:[%s2097 + $0x50] sm:$0x33]
  %v2110 = vunpack.c.l.b16 %v1749
  %v2111 = vpack.c.b16 %v2110, %v1794
  %v2123 = vunpack.c.l.b16 %v2098
  %v2124 = vunpack.c.h.b16 %v2098
  %v2125 = vunpack.c.l.b16 %v2099
  %v2126 = vunpack.c.h.b16 %v2099
  %v2127 = vunpack.c.l.b16 %v2100
  %v2128 = vunpack.c.h.b16 %v2100
  %v2129 = vunpack.c.l.b16 %v2101
  %v2130 = vunpack.c.h.b16 %v2101
  %v2131 = vunpack.c.l.b16 %v2102
  %v2132 = vunpack.c.h.b16 %v2102
  %v2133 = vunpack.c.l.b16 %v2103
  %v2134 = vunpack.c.h.b16 %v2103
  %v2135 = vunpack.c.l.b16 %v2104
  %v2136 = vunpack.c.h.b16 %v2104
  %v2137 = vunpack.c.l.b16 %v2105
  %v2138 = vunpack.c.h.b16 %v2105
  %v2139 = vunpack.c.l.b16 %v2106
  %v2140 = vunpack.c.h.b16 %v2106
  %v2141 = vunpack.c.l.b16 %v2107
  %v2142 = vunpack.c.h.b16 %v2107
  %v2143 = vunpack.c.l.b16 %v2108
  %v2144 = vunpack.c.h.b16 %v2108
  %v2145 = vpack.c.b16 %v2125, %v2123
  %v2146 = vpack.c.b16 %v2126, %v2124
  %v2147 = vpack.c.b16 %v2129, %v2127
  %v2148 = vpack.c.b16 %v2130, %v2128
  %v2149 = vpack.c.b16 %v2133, %v2131
  %v2150 = vpack.c.b16 %v2134, %v2132
  %v2151 = vpack.c.b16 %v2137, %v2135
  %v2152 = vpack.c.b16 %v2138, %v2136
  %v2153 = vpack.c.b16 %v2141, %v2139
  %v2154 = vpack.c.b16 %v2142, %v2140
  %v2155 = vpack.c.b16 %v2143, %v2143
  %v2156 = vpack.c.b16 %v2144, %v2144
  %v2168 = vsel %vm1855, %v2111, 0
  %v2171 = vsel %vm1871, %v2155, 0
  %v2174 = vsel %vm1871, %v2156, 0
  %2176 = vmatpush.bf16.msra.mxu0 0
  %2177 = vmatpush.bf16.msra.mxu0 0
  %2178 = vmatpush.bf16.msra.mxu0 %v2171
  %2179 = vmatpush.bf16.msra.mxu0 %v2153
  %2180 = vmatpush.bf16.msra.mxu0 %v2151
  %2181 = vmatpush.bf16.msra.mxu0 %v2149
  %2182 = vmatpush.bf16.msra.mxu0 %v2147
  %2183 = vmatpush.bf16.msra.mxu0 %v2145
  %2184 = vmatmul.bf16.gmra.mxu0 %v2012
  %v2185 = vpop.f32.mrf.mxu0
  %v2186 = vadd.f32 0.0, %v2185
  %v2187 = vpop.f32.mrf.mxu0
  %v2188 = vadd.f32 0.0, %v2187
  %2189 = vmatmul.bf16.gmra.mxu0 %v2015
  %v2190 = vpop.f32.mrf.mxu0
  %v2191 = vadd.f32 0.0, %v2190
  %v2192 = vpop.f32.mrf.mxu0
  %v2193 = vadd.f32 0.0, %v2192
  %2194 = vmatmul.bf16.gmra.mxu0 %v2018
  %v2195 = vpop.f32.mrf.mxu0
  %v2196 = vadd.f32 0.0, %v2195
  %v2197 = vpop.f32.mrf.mxu0
  %v2198 = vadd.f32 0.0, %v2197
  %2199 = vmatmul.bf16.gmra.mxu0 %v2021
  %v2200 = vpop.f32.mrf.mxu0
  %v2201 = vadd.f32 0.0, %v2200
  %v2202 = vpop.f32.mrf.mxu0
  %v2203 = vadd.f32 0.0, %v2202
  %2204 = vmatmul.bf16.gmra.mxu0 %v2168
  %v2205 = vpop.f32.mrf.mxu0
  %v2206 = vadd.f32 0.0, %v2205
  %v2207 = vpop.f32.mrf.mxu0
  %v2208 = vadd.f32 0.0, %v2207
  %2209 = vdwg.mxu0
  %2210 = vmatpush.bf16.msra.mxu0 0
  %2211 = vmatpush.bf16.msra.mxu0 0
  %2212 = vmatpush.bf16.msra.mxu0 %v2174
  %2213 = vmatpush.bf16.msra.mxu0 %v2154
  %2214 = vmatpush.bf16.msra.mxu0 %v2152
  %2215 = vmatpush.bf16.msra.mxu0 %v2150
  %2216 = vmatpush.bf16.msra.mxu0 %v2148
  %2217 = vmatpush.bf16.msra.mxu0 %v2146
  %2218 = vmatmul.bf16.gmra.mxu0 %v2012
  %v2219 = vpop.f32.mrf.mxu0
  %v2220 = vadd.f32 0.0, %v2219
  %v2221 = vpop.f32.mrf.mxu0
  %v2222 = vadd.f32 0.0, %v2221
  %2223 = vmatmul.bf16.gmra.mxu0 %v2015
  %v2224 = vpop.f32.mrf.mxu0
  %v2225 = vadd.f32 0.0, %v2224
  %v2226 = vpop.f32.mrf.mxu0
  %v2227 = vadd.f32 0.0, %v2226
  %2228 = vmatmul.bf16.gmra.mxu0 %v2018
  %v2229 = vpop.f32.mrf.mxu0
  %v2230 = vadd.f32 0.0, %v2229
  %v2231 = vpop.f32.mrf.mxu0
  %v2232 = vadd.f32 0.0, %v2231
  %2233 = vmatmul.bf16.gmra.mxu0 %v2021
  %v2234 = vpop.f32.mrf.mxu0
  %v2235 = vadd.f32 0.0, %v2234
  %v2236 = vpop.f32.mrf.mxu0
  %v2237 = vadd.f32 0.0, %v2236
  %2238 = vmatmul.bf16.gmra.mxu0 %v2168
  %v2239 = vpop.f32.mrf.mxu0
  %v2240 = vadd.f32 0.0, %v2239
  %v2241 = vpop.f32.mrf.mxu0
  %v2242 = vadd.f32 0.0, %v2241
  %2243 = vdwg.mxu0
  %v2244 = vadd.f32 %v2039, %v2186
  %v2245 = vadd.f32 %v2073, %v2220
  %v2246 = vadd.f32 %v2041, %v2188
  %v2247 = vadd.f32 %v2075, %v2222
  %v2248 = vadd.f32 %v2044, %v2191
  %v2249 = vadd.f32 %v2078, %v2225
  %v2250 = vadd.f32 %v2046, %v2193
  %v2251 = vadd.f32 %v2080, %v2227
  %v2252 = vadd.f32 %v2049, %v2196
  %v2253 = vadd.f32 %v2083, %v2230
  %v2254 = vadd.f32 %v2051, %v2198
  %v2255 = vadd.f32 %v2085, %v2232
  %v2256 = vadd.f32 %v2054, %v2201
  %v2257 = vadd.f32 %v2088, %v2235
  %v2258 = vadd.f32 %v2056, %v2203
  %v2259 = vadd.f32 %v2090, %v2237
  %v2260 = vadd.f32 %v2059, %v2206
  %v2261 = vadd.f32 %v2093, %v2240
  %v2262 = vadd.f32 %v2061, %v2208
  %v2263 = vadd.f32 %v2095, %v2242
  %s2264 = scalar_lea.vmem %s3, 264
  %v2265 = vld [vmem:[%s2264] sm:$0xff]
  %v2266 = vld [vmem:[%s2264 + $0x8] sm:$0xff]
  %v2267 = vld [vmem:[%s2264 + $0x10] sm:$0xff]
  %v2268 = vld [vmem:[%s2264 + $0x18] sm:$0xff]
  %v2269 = vld [vmem:[%s2264 + $0x20] sm:$0xff]
  %v2270 = vld [vmem:[%s2264 + $0x28] sm:$0xff]
  %v2271 = vld [vmem:[%s2264 + $0x30] sm:$0xff]
  %v2272 = vld [vmem:[%s2264 + $0x38] sm:$0xff]
  %v2273 = vld [vmem:[%s2264 + $0x40] sm:$0xff]
  %v2274 = vld [vmem:[%s2264 + $0x48] sm:$0xff]
  %v2275 = vld [vmem:[%s2264 + $0x50] sm:$0x33]
  %v2277 = vunpack.c.l.b16 %v1750
  %v2278 = vpack.c.b16 %v2277, %v2110
  %v2290 = vunpack.c.l.b16 %v2265
  %v2291 = vunpack.c.h.b16 %v2265
  %v2292 = vunpack.c.l.b16 %v2266
  %v2293 = vunpack.c.h.b16 %v2266
  %v2294 = vunpack.c.l.b16 %v2267
  %v2295 = vunpack.c.h.b16 %v2267
  %v2296 = vunpack.c.l.b16 %v2268
  %v2297 = vunpack.c.h.b16 %v2268
  %v2298 = vunpack.c.l.b16 %v2269
  %v2299 = vunpack.c.h.b16 %v2269
  %v2300 = vunpack.c.l.b16 %v2270
  %v2301 = vunpack.c.h.b16 %v2270
  %v2302 = vunpack.c.l.b16 %v2271
  %v2303 = vunpack.c.h.b16 %v2271
  %v2304 = vunpack.c.l.b16 %v2272
  %v2305 = vunpack.c.h.b16 %v2272
  %v2306 = vunpack.c.l.b16 %v2273
  %v2307 = vunpack.c.h.b16 %v2273
  %v2308 = vunpack.c.l.b16 %v2274
  %v2309 = vunpack.c.h.b16 %v2274
  %v2310 = vunpack.c.l.b16 %v2275
  %v2311 = vunpack.c.h.b16 %v2275
  %v2312 = vpack.c.b16 %v2292, %v2290
  %v2313 = vpack.c.b16 %v2293, %v2291
  %v2314 = vpack.c.b16 %v2296, %v2294
  %v2315 = vpack.c.b16 %v2297, %v2295
  %v2316 = vpack.c.b16 %v2300, %v2298
  %v2317 = vpack.c.b16 %v2301, %v2299
  %v2318 = vpack.c.b16 %v2304, %v2302
  %v2319 = vpack.c.b16 %v2305, %v2303
  %v2320 = vpack.c.b16 %v2308, %v2306
  %v2321 = vpack.c.b16 %v2309, %v2307
  %v2322 = vpack.c.b16 %v2310, %v2310
  %v2323 = vpack.c.b16 %v2311, %v2311
  %v2335 = vsel %vm1855, %v2278, 0
  %v2338 = vsel %vm1871, %v2322, 0
  %v2341 = vsel %vm1871, %v2323, 0
  %2343 = vmatpush.bf16.msra.mxu0 0
  %2344 = vmatpush.bf16.msra.mxu0 0
  %2345 = vmatpush.bf16.msra.mxu0 %v2338
  %2346 = vmatpush.bf16.msra.mxu0 %v2320
  %2347 = vmatpush.bf16.msra.mxu0 %v2318
  %2348 = vmatpush.bf16.msra.mxu0 %v2316
  %2349 = vmatpush.bf16.msra.mxu0 %v2314
  %2350 = vmatpush.bf16.msra.mxu0 %v2312
  %2351 = vmatmul.bf16.gmra.mxu0 %v1860
  %v2352 = vpop.f32.mrf.mxu0
  %v2353 = vadd.f32 0.0, %v2352
  %v2354 = vpop.f32.mrf.mxu0
  %v2355 = vadd.f32 0.0, %v2354
  %2356 = vmatmul.bf16.gmra.mxu0 %v1863
  %v2357 = vpop.f32.mrf.mxu0
  %v2358 = vadd.f32 0.0, %v2357
  %v2359 = vpop.f32.mrf.mxu0
  %v2360 = vadd.f32 0.0, %v2359
  %2361 = vmatmul.bf16.gmra.mxu0 %v1866
  %v2362 = vpop.f32.mrf.mxu0
  %v2363 = vadd.f32 0.0, %v2362
  %v2364 = vpop.f32.mrf.mxu0
  %v2365 = vadd.f32 0.0, %v2364
  %2366 = vmatmul.bf16.gmra.mxu0 %v1869
  %v2367 = vpop.f32.mrf.mxu0
  %v2368 = vadd.f32 0.0, %v2367
  %v2369 = vpop.f32.mrf.mxu0
  %v2370 = vadd.f32 0.0, %v2369
  %2371 = vmatmul.bf16.gmra.mxu0 %v2335
  %v2372 = vpop.f32.mrf.mxu0
  %v2373 = vadd.f32 0.0, %v2372
  %v2374 = vpop.f32.mrf.mxu0
  %v2375 = vadd.f32 0.0, %v2374
  %2376 = vdwg.mxu0
  %2377 = vmatpush.bf16.msra.mxu0 0
  %2378 = vmatpush.bf16.msra.mxu0 0
  %2379 = vmatpush.bf16.msra.mxu0 %v2341
  %2380 = vmatpush.bf16.msra.mxu0 %v2321
  %2381 = vmatpush.bf16.msra.mxu0 %v2319
  %2382 = vmatpush.bf16.msra.mxu0 %v2317
  %2383 = vmatpush.bf16.msra.mxu0 %v2315
  %2384 = vmatpush.bf16.msra.mxu0 %v2313
  %2385 = vmatmul.bf16.gmra.mxu0 %v1860
  %v2386 = vpop.f32.mrf.mxu0
  %v2387 = vadd.f32 0.0, %v2386
  %v2388 = vpop.f32.mrf.mxu0
  %v2389 = vadd.f32 0.0, %v2388
  %2390 = vmatmul.bf16.gmra.mxu0 %v1863
  %v2391 = vpop.f32.mrf.mxu0
  %v2392 = vadd.f32 0.0, %v2391
  %v2393 = vpop.f32.mrf.mxu0
  %v2394 = vadd.f32 0.0, %v2393
  %2395 = vmatmul.bf16.gmra.mxu0 %v1866
  %v2396 = vpop.f32.mrf.mxu0
  %v2397 = vadd.f32 0.0, %v2396
  %v2398 = vpop.f32.mrf.mxu0
  %v2399 = vadd.f32 0.0, %v2398
  %2400 = vmatmul.bf16.gmra.mxu0 %v1869
  %v2401 = vpop.f32.mrf.mxu0
  %v2402 = vadd.f32 0.0, %v2401
  %v2403 = vpop.f32.mrf.mxu0
  %v2404 = vadd.f32 0.0, %v2403
  %2405 = vmatmul.bf16.gmra.mxu0 %v2335
  %v2406 = vpop.f32.mrf.mxu0
  %v2407 = vadd.f32 0.0, %v2406
  %v2408 = vpop.f32.mrf.mxu0
  %v2409 = vadd.f32 0.0, %v2408
  %2410 = vdwg.mxu0
  %v2411 = vadd.f32 %v2244, %v2353
  %v2412 = vadd.f32 %v2245, %v2387
  %v2413 = vadd.f32 %v2246, %v2355
  %v2414 = vadd.f32 %v2247, %v2389
  %v2415 = vadd.f32 %v2248, %v2358
  %v2416 = vadd.f32 %v2249, %v2392
  %v2417 = vadd.f32 %v2250, %v2360
  %v2418 = vadd.f32 %v2251, %v2394
  %v2419 = vadd.f32 %v2252, %v2363
  %v2420 = vadd.f32 %v2253, %v2397
  %v2421 = vadd.f32 %v2254, %v2365
  %v2422 = vadd.f32 %v2255, %v2399
  %v2423 = vadd.f32 %v2256, %v2368
  %v2424 = vadd.f32 %v2257, %v2402
  %v2425 = vadd.f32 %v2258, %v2370
  %v2426 = vadd.f32 %v2259, %v2404
  %v2427 = vadd.f32 %v2260, %v2373
  %v2428 = vadd.f32 %v2261, %v2407
  %v2429 = vadd.f32 %v2262, %v2375
  %v2430 = vadd.f32 %v2263, %v2409
  %s2431 = scalar_lea.vmem %s3, 352
  %v2432 = vld [vmem:[%s2431] sm:$0xff]
  %v2433 = vld [vmem:[%s2431 + $0x8] sm:$0xff]
  %v2434 = vld [vmem:[%s2431 + $0x10] sm:$0xff]
  %v2435 = vld [vmem:[%s2431 + $0x18] sm:$0xff]
  %v2436 = vld [vmem:[%s2431 + $0x20] sm:$0xff]
  %v2437 = vld [vmem:[%s2431 + $0x28] sm:$0xff]
  %v2438 = vld [vmem:[%s2431 + $0x30] sm:$0xff]
  %v2439 = vld [vmem:[%s2431 + $0x38] sm:$0xff]
  %v2440 = vld [vmem:[%s2431 + $0x40] sm:$0xff]
  %v2441 = vld [vmem:[%s2431 + $0x48] sm:$0xff]
  %v2442 = vld [vmem:[%s2431 + $0x50] sm:$0x33]
  %v2444 = vunpack.c.l.b16 %v1751
  %v2445 = vpack.c.b16 %v2444, %v2277
  %v2457 = vunpack.c.l.b16 %v2432
  %v2458 = vunpack.c.h.b16 %v2432
  %v2459 = vunpack.c.l.b16 %v2433
  %v2460 = vunpack.c.h.b16 %v2433
  %v2461 = vunpack.c.l.b16 %v2434
  %v2462 = vunpack.c.h.b16 %v2434
  %v2463 = vunpack.c.l.b16 %v2435
  %v2464 = vunpack.c.h.b16 %v2435
  %v2465 = vunpack.c.l.b16 %v2436
  %v2466 = vunpack.c.h.b16 %v2436
  %v2467 = vunpack.c.l.b16 %v2437
  %v2468 = vunpack.c.h.b16 %v2437
  %v2469 = vunpack.c.l.b16 %v2438
  %v2470 = vunpack.c.h.b16 %v2438
  %v2471 = vunpack.c.l.b16 %v2439
  %v2472 = vunpack.c.h.b16 %v2439
  %v2473 = vunpack.c.l.b16 %v2440
  %v2474 = vunpack.c.h.b16 %v2440
  %v2475 = vunpack.c.l.b16 %v2441
  %v2476 = vunpack.c.h.b16 %v2441
  %v2477 = vunpack.c.l.b16 %v2442
  %v2478 = vunpack.c.h.b16 %v2442
  %v2479 = vpack.c.b16 %v2459, %v2457
  %v2480 = vpack.c.b16 %v2460, %v2458
  %v2481 = vpack.c.b16 %v2463, %v2461
  %v2482 = vpack.c.b16 %v2464, %v2462
  %v2483 = vpack.c.b16 %v2467, %v2465
  %v2484 = vpack.c.b16 %v2468, %v2466
  %v2485 = vpack.c.b16 %v2471, %v2469
  %v2486 = vpack.c.b16 %v2472, %v2470
  %v2487 = vpack.c.b16 %v2475, %v2473
  %v2488 = vpack.c.b16 %v2476, %v2474
  %v2489 = vpack.c.b16 %v2477, %v2477
  %v2490 = vpack.c.b16 %v2478, %v2478
  %v2502 = vsel %vm1855, %v2445, 0
  %v2505 = vsel %vm1871, %v2489, 0
  %v2508 = vsel %vm1871, %v2490, 0
  %2510 = vmatpush.bf16.msra.mxu0 0
  %2511 = vmatpush.bf16.msra.mxu0 0
  %2512 = vmatpush.bf16.msra.mxu0 %v2505
  %2513 = vmatpush.bf16.msra.mxu0 %v2487
  %2514 = vmatpush.bf16.msra.mxu0 %v2485
  %2515 = vmatpush.bf16.msra.mxu0 %v2483
  %2516 = vmatpush.bf16.msra.mxu0 %v2481
  %2517 = vmatpush.bf16.msra.mxu0 %v2479
  %2518 = vmatmul.bf16.gmra.mxu0 %v2015
  %v2519 = vpop.f32.mrf.mxu0
  %v2520 = vadd.f32 0.0, %v2519
  %v2521 = vpop.f32.mrf.mxu0
  %v2522 = vadd.f32 0.0, %v2521
  %2523 = vmatmul.bf16.gmra.mxu0 %v2018
  %v2524 = vpop.f32.mrf.mxu0
  %v2525 = vadd.f32 0.0, %v2524
  %v2526 = vpop.f32.mrf.mxu0
  %v2527 = vadd.f32 0.0, %v2526
  %2528 = vmatmul.bf16.gmra.mxu0 %v2021
  %v2529 = vpop.f32.mrf.mxu0
  %v2530 = vadd.f32 0.0, %v2529
  %v2531 = vpop.f32.mrf.mxu0
  %v2532 = vadd.f32 0.0, %v2531
  %2533 = vmatmul.bf16.gmra.mxu0 %v2168
  %v2534 = vpop.f32.mrf.mxu0
  %v2535 = vadd.f32 0.0, %v2534
  %v2536 = vpop.f32.mrf.mxu0
  %v2537 = vadd.f32 0.0, %v2536
  %2538 = vmatmul.bf16.gmra.mxu0 %v2502
  %v2539 = vpop.f32.mrf.mxu0
  %v2540 = vadd.f32 0.0, %v2539
  %v2541 = vpop.f32.mrf.mxu0
  %v2542 = vadd.f32 0.0, %v2541
  %2543 = vdwg.mxu0
  %2544 = vmatpush.bf16.msra.mxu0 0
  %2545 = vmatpush.bf16.msra.mxu0 0
  %2546 = vmatpush.bf16.msra.mxu0 %v2508
  %2547 = vmatpush.bf16.msra.mxu0 %v2488
  %2548 = vmatpush.bf16.msra.mxu0 %v2486
  %2549 = vmatpush.bf16.msra.mxu0 %v2484
  %2550 = vmatpush.bf16.msra.mxu0 %v2482
  %2551 = vmatpush.bf16.msra.mxu0 %v2480
  %2552 = vmatmul.bf16.gmra.mxu0 %v2015
  %v2553 = vpop.f32.mrf.mxu0
  %v2554 = vadd.f32 0.0, %v2553
  %v2555 = vpop.f32.mrf.mxu0
  %v2556 = vadd.f32 0.0, %v2555
  %2557 = vmatmul.bf16.gmra.mxu0 %v2018
  %v2558 = vpop.f32.mrf.mxu0
  %v2559 = vadd.f32 0.0, %v2558
  %v2560 = vpop.f32.mrf.mxu0
  %v2561 = vadd.f32 0.0, %v2560
  %2562 = vmatmul.bf16.gmra.mxu0 %v2021
  %v2563 = vpop.f32.mrf.mxu0
  %v2564 = vadd.f32 0.0, %v2563
  %v2565 = vpop.f32.mrf.mxu0
  %v2566 = vadd.f32 0.0, %v2565
  %2567 = vmatmul.bf16.gmra.mxu0 %v2168
  %v2568 = vpop.f32.mrf.mxu0
  %v2569 = vadd.f32 0.0, %v2568
  %v2570 = vpop.f32.mrf.mxu0
  %v2571 = vadd.f32 0.0, %v2570
  %2572 = vmatmul.bf16.gmra.mxu0 %v2502
  %v2573 = vpop.f32.mrf.mxu0
  %v2574 = vadd.f32 0.0, %v2573
  %v2575 = vpop.f32.mrf.mxu0
  %v2576 = vadd.f32 0.0, %v2575
  %2577 = vdwg.mxu0
  %v2578 = vadd.f32 %v2411, %v2520
  %v2579 = vadd.f32 %v2412, %v2554
  %v2580 = vadd.f32 %v2413, %v2522
  %v2581 = vadd.f32 %v2414, %v2556
  %v2582 = vadd.f32 %v2415, %v2525
  %v2583 = vadd.f32 %v2416, %v2559
  %v2584 = vadd.f32 %v2417, %v2527
  %v2585 = vadd.f32 %v2418, %v2561
  %v2586 = vadd.f32 %v2419, %v2530
  %v2587 = vadd.f32 %v2420, %v2564
  %v2588 = vadd.f32 %v2421, %v2532
  %v2589 = vadd.f32 %v2422, %v2566
  %v2590 = vadd.f32 %v2423, %v2535
  %v2591 = vadd.f32 %v2424, %v2569
  %v2592 = vadd.f32 %v2425, %v2537
  %v2593 = vadd.f32 %v2426, %v2571
  %v2594 = vadd.f32 %v2427, %v2540
  %v2595 = vadd.f32 %v2428, %v2574
  %v2596 = vadd.f32 %v2429, %v2542
  %v2597 = vadd.f32 %v2430, %v2576
  %v2598 = vld [vmem:[%s4] sm:$0x3]
  %v2600 = vperm.slane %v2598, 0
  %v2601 = vperm.slane %v2598, 1
  %v2604 = vadd.f32 %v2578, %v2600
  %v2605 = vadd.f32 %v2579, %v2601
  %v2606 = vadd.f32 %v2580, %v2600
  %v2607 = vadd.f32 %v2581, %v2601
  %v2608 = vadd.f32 %v2582, %v2600
  %v2609 = vadd.f32 %v2583, %v2601
  %v2610 = vadd.f32 %v2584, %v2600
  %v2611 = vadd.f32 %v2585, %v2601
  %v2612 = vadd.f32 %v2586, %v2600
  %v2613 = vadd.f32 %v2587, %v2601
  %v2614 = vadd.f32 %v2588, %v2600
  %v2615 = vadd.f32 %v2589, %v2601
  %v2616 = vadd.f32 %v2590, %v2600
  %v2617 = vadd.f32 %v2591, %v2601
  %v2618 = vadd.f32 %v2592, %v2600
  %v2619 = vadd.f32 %v2593, %v2601
  %v2620 = vadd.f32 %v2594, %v2600
  %v2621 = vadd.f32 %v2595, %v2601
  %v2622 = vadd.f32 %v2596, %v2600
  %v2623 = vadd.f32 %v2597, %v2601
  %v2624 = vtanh.pop %v2604
  %v2625 = vtanh.pop %v2605
  %v2626 = vtanh.pop %v2606
  %v2627 = vtanh.pop %v2607
  %v2628 = vtanh.pop %v2608
  %v2629 = vtanh.pop %v2609
  %v2630 = vtanh.pop %v2610
  %v2631 = vtanh.pop %v2611
  %v2632 = vtanh.pop %v2612
  %v2633 = vtanh.pop %v2613
  %v2634 = vtanh.pop %v2614
  %v2635 = vtanh.pop %v2615
  %v2636 = vtanh.pop %v2616
  %v2637 = vtanh.pop %v2617
  %v2638 = vtanh.pop %v2618
  %v2639 = vtanh.pop %v2619
  %v2640 = vtanh.pop %v2620
  %v2641 = vtanh.pop %v2621
  %v2642 = vtanh.pop %v2622
  %v2643 = vtanh.pop %v2623
  %v2644 = vadd.f32 %v2624, %v2626
  %v2645 = vadd.f32 %v2625, %v2627
  %v2646 = vadd.f32 %v2628, %v2630
  %v2647 = vadd.f32 %v2629, %v2631
  %v2648 = vadd.f32 %v2632, %v2634
  %v2649 = vadd.f32 %v2633, %v2635
  %v2650 = vadd.f32 %v2636, %v2638
  %v2651 = vadd.f32 %v2637, %v2639
  %v2652 = vadd.f32 %v2640, %v2642
  %v2653 = vadd.f32 %v2641, %v2643
  %v2654 = vpack.c.bf16 %v2646, %v2644
  %v2655 = vpack.c.bf16 %v2647, %v2645
  %v2656 = vpack.c.bf16 %v2650, %v2648
  %v2657 = vpack.c.bf16 %v2651, %v2649
  %v2658 = vpack.c.bf16 %v2652, %v2652
  %v2659 = vpack.c.bf16 %v2653, %v2653
  %v2660 = vld [vmem:[%s8] sm:$0xf]
  %v2661 = vld [vmem:[%s8 + $0x4] sm:$0xf]
  %v2662 = vld [vmem:[%s8 + $0x8] sm:$0xf]
  %v2663 = vld [vmem:[%s8 + $0xc] sm:$0xf]
  %v2664 = vld [vmem:[%s8 + $0x10] sm:$0xf]
  %v2665 = vld [vmem:[%s8 + $0x14] sm:$0xf]
  %v2666 = vld [vmem:[%s8 + $0x18] sm:$0xf]
  %v2667 = vld [vmem:[%s8 + $0x1c] sm:$0xf]
  %v2668 = vld [vmem:[%s8 + $0x20] sm:$0xf]
  %v2669 = vld [vmem:[%s8 + $0x24] sm:$0xf]
  %v2670 = vld [vmem:[%s8 + $0x28] sm:$0xf]
  %v2671 = vld [vmem:[%s8 + $0x2c] sm:$0xf]
  %v2672 = vld [vmem:[%s8 + $0x30] sm:$0xf]
  %v2673 = vld [vmem:[%s8 + $0x34] sm:$0xf]
  %v2674 = vld [vmem:[%s8 + $0x38] sm:$0xf]
  %v2675 = vld [vmem:[%s8 + $0x3c] sm:$0xf]
  %v2676 = vld [vmem:[%s8 + $0x40] sm:$0xf]
  %v2677 = vld [vmem:[%s8 + $0x44] sm:$0xf]
  %v2678 = vld [vmem:[%s8 + $0x48] sm:$0xf]
  %v2679 = vld [vmem:[%s8 + $0x4c] sm:$0xf]
  %v2700 = vunpack.c.l.b16 %v2660
  %v2701 = vunpack.c.l.b16 %v2661
  %v2702 = vunpack.c.l.b16 %v2662
  %v2703 = vunpack.c.l.b16 %v2663
  %v2704 = vunpack.c.l.b16 %v2664
  %v2705 = vunpack.c.l.b16 %v2665
  %v2706 = vunpack.c.l.b16 %v2666
  %v2707 = vunpack.c.l.b16 %v2667
  %v2708 = vunpack.c.l.b16 %v2668
  %v2709 = vunpack.c.l.b16 %v2669
  %v2710 = vunpack.c.l.b16 %v2670
  %v2711 = vunpack.c.l.b16 %v2671
  %v2712 = vunpack.c.l.b16 %v2672
  %v2713 = vunpack.c.l.b16 %v2673
  %v2714 = vunpack.c.l.b16 %v2674
  %v2715 = vunpack.c.l.b16 %v2675
  %v2716 = vunpack.c.l.b16 %v2676
  %v2717 = vunpack.c.l.b16 %v2677
  %v2718 = vunpack.c.l.b16 %v2678
  %v2719 = vunpack.c.l.b16 %v2679
  %v2720 = vpack.c.b16 %v2701, %v2700
  %v2721 = vpack.c.b16 %v2703, %v2702
  %v2722 = vpack.c.b16 %v2705, %v2704
  %v2723 = vpack.c.b16 %v2707, %v2706
  %v2724 = vpack.c.b16 %v2709, %v2708
  %v2725 = vpack.c.b16 %v2711, %v2710
  %v2726 = vpack.c.b16 %v2713, %v2712
  %v2727 = vpack.c.b16 %v2715, %v2714
  %v2728 = vpack.c.b16 %v2717, %v2716
  %v2729 = vpack.c.b16 %v2719, %v2718
  %v2741 = vsel %vm208, %v2655, 0
  %v2744 = vsel %vm208, %v2657, 0
  %v2747 = vsel %vm208, %v2659, 0
  %2749 = vmatpush.bf16.msra.mxu0 %v2727
  %2750 = vmatpush.bf16.msra.mxu0 %v2726
  %2751 = vmatpush.bf16.msra.mxu0 %v2725
  %2752 = vmatpush.bf16.msra.mxu0 %v2724
  %2753 = vmatpush.bf16.msra.mxu0 %v2723
  %2754 = vmatpush.bf16.msra.mxu0 %v2722
  %2755 = vmatpush.bf16.msra.mxu0 %v2721
  %2756 = vmatpush.bf16.msra.mxu0 %v2720
  %2757 = vmatmul.bf16.gmra.mxu0 %v2654
  %v2758 = vpop.f32.mrf.mxu0
  %v2759 = vadd.f32 0.0, %v2758
  %v2760 = vpop.f32.mrf.mxu0
  %v2761 = vadd.f32 0.0, %v2760
  %2762 = vmatmul.bf16.gmra.mxu0 %v2656
  %v2763 = vpop.f32.mrf.mxu0
  %v2764 = vadd.f32 0.0, %v2763
  %v2765 = vpop.f32.mrf.mxu0
  %v2766 = vadd.f32 0.0, %v2765
  %2767 = vmatmul.bf16.gmra.mxu0 %v2658
  %v2768 = vpop.f32.mrf.mxu0
  %v2769 = vadd.f32 0.0, %v2768
  %v2770 = vpop.f32.mrf.mxu0
  %2771 = vdwg.mxu0
  %2772 = vmatpush.bf16.msra.mxu0 0
  %2773 = vmatpush.bf16.msra.mxu0 0
  %2774 = vmatpush.bf16.msra.mxu0 0
  %2775 = vmatpush.bf16.msra.mxu0 0
  %2776 = vmatpush.bf16.msra.mxu0 0
  %2777 = vmatpush.bf16.msra.mxu0 0
  %2778 = vmatpush.bf16.msra.mxu0 %v2729
  %2779 = vmatpush.bf16.msra.mxu0 %v2728
  %2780 = vmatmul.bf16.gmra.mxu0 %v2741
  %v2781 = vpop.f32.mrf.mxu0
  %v2782 = vadd.f32 %v2759, %v2781
  %v2783 = vpop.f32.mrf.mxu0
  %v2784 = vadd.f32 %v2761, %v2783
  %2785 = vmatmul.bf16.gmra.mxu0 %v2744
  %v2786 = vpop.f32.mrf.mxu0
  %v2787 = vadd.f32 %v2764, %v2786
  %v2788 = vpop.f32.mrf.mxu0
  %v2789 = vadd.f32 %v2766, %v2788
  %2790 = vmatmul.bf16.gmra.mxu0 %v2747
  %v2791 = vpop.f32.mrf.mxu0
  %v2792 = vadd.f32 %v2769, %v2791
  %v2793 = vpop.f32.mrf.mxu0
  %2794 = vdwg.mxu0
  %v2795 = vpack.c.bf16 %v2782, %v2782
  %v2796 = vpack.c.bf16 %v2784, %v2784
  %v2797 = vpack.c.bf16 %v2787, %v2787
  %v2798 = vpack.c.bf16 %v2789, %v2789
  %v2799 = vpack.c.bf16 %v2792, %v2792
  %v2800 = vld [vmem:[%s5] sm:$0xf]
  %v2801 = vld [vmem:[%s5 + $0x4] sm:$0xf]
  %v2802 = vld [vmem:[%s5 + $0x8] sm:$0xf]
  %v2803 = vld [vmem:[%s5 + $0xc] sm:$0xf]
  %v2804 = vld [vmem:[%s5 + $0x10] sm:$0xf]
  %v2805 = vld [vmem:[%s5 + $0x14] sm:$0xf]
  %v2806 = vld [vmem:[%s5 + $0x18] sm:$0xf]
  %v2807 = vld [vmem:[%s5 + $0x1c] sm:$0xf]
  %v2808 = vld [vmem:[%s5 + $0x20] sm:$0xf]
  %v2809 = vld [vmem:[%s5 + $0x24] sm:$0xf]
  %s2810 = scalar_lea.vmem %s5, 40
  %v2811 = vld [vmem:[%s2810] sm:$0xf]
  %v2812 = vld [vmem:[%s2810 + $0x4] sm:$0xf]
  %v2813 = vld [vmem:[%s2810 + $0x8] sm:$0xf]
  %v2814 = vld [vmem:[%s2810 + $0xc] sm:$0xf]
  %v2815 = vld [vmem:[%s2810 + $0x10] sm:$0xf]
  %v2816 = vld [vmem:[%s2810 + $0x14] sm:$0xf]
  %v2817 = vld [vmem:[%s2810 + $0x18] sm:$0xf]
  %v2818 = vld [vmem:[%s2810 + $0x1c] sm:$0xf]
  %v2819 = vld [vmem:[%s2810 + $0x20] sm:$0xf]
  %v2820 = vld [vmem:[%s2810 + $0x24] sm:$0xf]
  %v2831 = vunpack.c.l.b16 %v2811
  %v2832 = vunpack.c.l.b16 %v2812
  %v2833 = vunpack.c.l.b16 %v2813
  %v2834 = vunpack.c.l.b16 %v2814
  %v2835 = vunpack.c.l.b16 %v2815
  %v2836 = vunpack.c.l.b16 %v2816
  %v2837 = vunpack.c.l.b16 %v2817
  %v2838 = vunpack.c.l.b16 %v2818
  %v2839 = vunpack.c.l.b16 %v2819
  %v2840 = vunpack.c.l.b16 %v2820
  %v2841 = vpack.c.b16 %v2832, %v2831
  %v2842 = vpack.c.b16 %v2834, %v2833
  %v2843 = vpack.c.b16 %v2836, %v2835
  %v2844 = vpack.c.b16 %v2838, %v2837
  %v2845 = vpack.c.b16 %v2840, %v2839
  %vm2851 = vcmask 654336
  %v2853 = vsel %vm2851, %v2796, 0
  %2855 = vmatpush.bf16.msra.mxu0 0
  %2856 = vmatpush.bf16.msra.mxu0 0
  %2857 = vmatpush.bf16.msra.mxu0 0
  %2858 = vmatpush.bf16.msra.mxu0 %v2845
  %2859 = vmatpush.bf16.msra.mxu0 %v2844
  %2860 = vmatpush.bf16.msra.mxu0 %v2843
  %2861 = vmatpush.bf16.msra.mxu0 %v2842
  %2862 = vmatpush.bf16.msra.mxu0 %v2841
  %2863 = vmatmul.bf16.gmra.mxu0 %v2853
  %v2864 = vpop.f32.mrf.mxu0
  %v2865 = vadd.f32 0.0, %v2864
  %v2866 = vpop.f32.mrf.mxu0
  %2867 = vdwg.mxu0
  %v2878 = vunpack.c.l.b16 %v2800
  %v2879 = vunpack.c.l.b16 %v2801
  %v2880 = vunpack.c.l.b16 %v2802
  %v2881 = vunpack.c.l.b16 %v2803
  %v2882 = vunpack.c.l.b16 %v2804
  %v2883 = vunpack.c.l.b16 %v2805
  %v2884 = vunpack.c.l.b16 %v2806
  %v2885 = vunpack.c.l.b16 %v2807
  %v2886 = vunpack.c.l.b16 %v2808
  %v2887 = vunpack.c.l.b16 %v2809
  %v2888 = vpack.c.b16 %v2879, %v2878
  %v2889 = vpack.c.b16 %v2881, %v2880
  %v2890 = vpack.c.b16 %v2883, %v2882
  %v2891 = vpack.c.b16 %v2885, %v2884
  %v2892 = vpack.c.b16 %v2887, %v2886
  %v2899 = vsel %vm2851, %v2795, 0
  %2901 = vmatpush.bf16.msra.mxu0 0
  %2902 = vmatpush.bf16.msra.mxu0 0
  %2903 = vmatpush.bf16.msra.mxu0 0
  %2904 = vmatpush.bf16.msra.mxu0 %v2892
  %2905 = vmatpush.bf16.msra.mxu0 %v2891
  %2906 = vmatpush.bf16.msra.mxu0 %v2890
  %2907 = vmatpush.bf16.msra.mxu0 %v2889
  %2908 = vmatpush.bf16.msra.mxu0 %v2888
  %2909 = vmatmul.bf16.gmra.mxu0 %v2899
  %v2910 = vpop.f32.mrf.mxu0
  %v2911 = vadd.f32 %v2865, %v2910
  %v2912 = vpop.f32.mrf.mxu0
  %2913 = vdwg.mxu0
  %s2914 = scalar_lea.vmem %s5, 80
  %v2915 = vld [vmem:[%s2914] sm:$0xf]
  %v2916 = vld [vmem:[%s2914 + $0x4] sm:$0xf]
  %v2917 = vld [vmem:[%s2914 + $0x8] sm:$0xf]
  %v2918 = vld [vmem:[%s2914 + $0xc] sm:$0xf]
  %v2919 = vld [vmem:[%s2914 + $0x10] sm:$0xf]
  %v2920 = vld [vmem:[%s2914 + $0x14] sm:$0xf]
  %v2921 = vld [vmem:[%s2914 + $0x18] sm:$0xf]
  %v2922 = vld [vmem:[%s2914 + $0x1c] sm:$0xf]
  %v2923 = vld [vmem:[%s2914 + $0x20] sm:$0xf]
  %v2924 = vld [vmem:[%s2914 + $0x24] sm:$0xf]
  %v2935 = vunpack.c.l.b16 %v2915
  %v2936 = vunpack.c.l.b16 %v2916
  %v2937 = vunpack.c.l.b16 %v2917
  %v2938 = vunpack.c.l.b16 %v2918
  %v2939 = vunpack.c.l.b16 %v2919
  %v2940 = vunpack.c.l.b16 %v2920
  %v2941 = vunpack.c.l.b16 %v2921
  %v2942 = vunpack.c.l.b16 %v2922
  %v2943 = vunpack.c.l.b16 %v2923
  %v2944 = vunpack.c.l.b16 %v2924
  %v2945 = vpack.c.b16 %v2936, %v2935
  %v2946 = vpack.c.b16 %v2938, %v2937
  %v2947 = vpack.c.b16 %v2940, %v2939
  %v2948 = vpack.c.b16 %v2942, %v2941
  %v2949 = vpack.c.b16 %v2944, %v2943
  %v2956 = vsel %vm2851, %v2797, 0
  %2958 = vmatpush.bf16.msra.mxu0 0
  %2959 = vmatpush.bf16.msra.mxu0 0
  %2960 = vmatpush.bf16.msra.mxu0 0
  %2961 = vmatpush.bf16.msra.mxu0 %v2949
  %2962 = vmatpush.bf16.msra.mxu0 %v2948
  %2963 = vmatpush.bf16.msra.mxu0 %v2947
  %2964 = vmatpush.bf16.msra.mxu0 %v2946
  %2965 = vmatpush.bf16.msra.mxu0 %v2945
  %2966 = vmatmul.bf16.gmra.mxu0 %v2956
  %v2967 = vpop.f32.mrf.mxu0
  %v2968 = vadd.f32 0.0, %v2967
  %v2969 = vpop.f32.mrf.mxu0
  %2970 = vdwg.mxu0
  %v2971 = vadd.f32 %v2911, %v2968
  %s2972 = scalar_lea.vmem %s5, 120
  %v2973 = vld [vmem:[%s2972] sm:$0xf]
  %v2974 = vld [vmem:[%s2972 + $0x4] sm:$0xf]
  %v2975 = vld [vmem:[%s2972 + $0x8] sm:$0xf]
  %v2976 = vld [vmem:[%s2972 + $0xc] sm:$0xf]
  %v2977 = vld [vmem:[%s2972 + $0x10] sm:$0xf]
  %v2978 = vld [vmem:[%s2972 + $0x14] sm:$0xf]
  %v2979 = vld [vmem:[%s2972 + $0x18] sm:$0xf]
  %v2980 = vld [vmem:[%s2972 + $0x1c] sm:$0xf]
  %v2981 = vld [vmem:[%s2972 + $0x20] sm:$0xf]
  %v2982 = vld [vmem:[%s2972 + $0x24] sm:$0xf]
  %v2993 = vunpack.c.l.b16 %v2973
  %v2994 = vunpack.c.l.b16 %v2974
  %v2995 = vunpack.c.l.b16 %v2975
  %v2996 = vunpack.c.l.b16 %v2976
  %v2997 = vunpack.c.l.b16 %v2977
  %v2998 = vunpack.c.l.b16 %v2978
  %v2999 = vunpack.c.l.b16 %v2979
  %v3000 = vunpack.c.l.b16 %v2980
  %v3001 = vunpack.c.l.b16 %v2981
  %v3002 = vunpack.c.l.b16 %v2982
  %v3003 = vpack.c.b16 %v2994, %v2993
  %v3004 = vpack.c.b16 %v2996, %v2995
  %v3005 = vpack.c.b16 %v2998, %v2997
  %v3006 = vpack.c.b16 %v3000, %v2999
  %v3007 = vpack.c.b16 %v3002, %v3001
  %v3014 = vsel %vm2851, %v2798, 0
  %3016 = vmatpush.bf16.msra.mxu0 0
  %3017 = vmatpush.bf16.msra.mxu0 0
  %3018 = vmatpush.bf16.msra.mxu0 0
  %3019 = vmatpush.bf16.msra.mxu0 %v3007
  %3020 = vmatpush.bf16.msra.mxu0 %v3006
  %3021 = vmatpush.bf16.msra.mxu0 %v3005
  %3022 = vmatpush.bf16.msra.mxu0 %v3004
  %3023 = vmatpush.bf16.msra.mxu0 %v3003
  %3024 = vmatmul.bf16.gmra.mxu0 %v3014
  %v3025 = vpop.f32.mrf.mxu0
  %v3026 = vadd.f32 0.0, %v3025
  %v3027 = vpop.f32.mrf.mxu0
  %3028 = vdwg.mxu0
  %v3029 = vadd.f32 %v2971, %v3026
  %s3030 = scalar_lea.vmem %s5, 160
  %v3031 = vld [vmem:[%s3030] sm:$0xf]
  %v3032 = vld [vmem:[%s3030 + $0x4] sm:$0xf]
  %v3033 = vld [vmem:[%s3030 + $0x8] sm:$0xf]
  %v3034 = vld [vmem:[%s3030 + $0xc] sm:$0xf]
  %v3035 = vld [vmem:[%s3030 + $0x10] sm:$0xf]
  %v3036 = vld [vmem:[%s3030 + $0x14] sm:$0xf]
  %v3037 = vld [vmem:[%s3030 + $0x18] sm:$0xf]
  %v3038 = vld [vmem:[%s3030 + $0x1c] sm:$0xf]
  %v3039 = vld [vmem:[%s3030 + $0x20] sm:$0xf]
  %v3040 = vld [vmem:[%s3030 + $0x24] sm:$0xf]
  %v3051 = vunpack.c.l.b16 %v3031
  %v3052 = vunpack.c.l.b16 %v3032
  %v3053 = vunpack.c.l.b16 %v3033
  %v3054 = vunpack.c.l.b16 %v3034
  %v3055 = vunpack.c.l.b16 %v3035
  %v3056 = vunpack.c.l.b16 %v3036
  %v3057 = vunpack.c.l.b16 %v3037
  %v3058 = vunpack.c.l.b16 %v3038
  %v3059 = vunpack.c.l.b16 %v3039
  %v3060 = vunpack.c.l.b16 %v3040
  %v3061 = vpack.c.b16 %v3052, %v3051
  %v3062 = vpack.c.b16 %v3054, %v3053
  %v3063 = vpack.c.b16 %v3056, %v3055
  %v3064 = vpack.c.b16 %v3058, %v3057
  %v3065 = vpack.c.b16 %v3060, %v3059
  %v3072 = vsel %vm2851, %v2799, 0
  %3074 = vmatpush.bf16.msra.mxu0 0
  %3075 = vmatpush.bf16.msra.mxu0 0
  %3076 = vmatpush.bf16.msra.mxu0 0
  %3077 = vmatpush.bf16.msra.mxu0 %v3065
  %3078 = vmatpush.bf16.msra.mxu0 %v3064
  %3079 = vmatpush.bf16.msra.mxu0 %v3063
  %3080 = vmatpush.bf16.msra.mxu0 %v3062
  %3081 = vmatpush.bf16.msra.mxu0 %v3061
  %3082 = vmatmul.bf16.gmra.mxu0 %v3072
  %v3083 = vpop.f32.mrf.mxu0
  %v3084 = vadd.f32 0.0, %v3083
  %v3085 = vpop.f32.mrf.mxu0
  %3086 = vdwg.mxu0
  %v3087 = vadd.f32 %v3029, %v3084
  %v3088 = vld [vmem:[%s6] sm:$0x1]
  %v3090 = vperm.slane %v3088, 0
  %v3092 = vadd.f32 %v3087, %v3090
  %v3093 = vtanh.pop %v3092
  %v3094 = vpack.c.bf16 %v3093, %v3093
  %v3095 = vld [vmem:[%s9] sm:$0xf]
  %v3096 = vld [vmem:[%s9 + $0x4] sm:$0xf]
  %v3097 = vld [vmem:[%s9 + $0x8] sm:$0xf]
  %v3098 = vld [vmem:[%s9 + $0xc] sm:$0xf]
  %v3099 = vld [vmem:[%s9 + $0x10] sm:$0xf]
  %v3100 = vld [vmem:[%s9 + $0x14] sm:$0xf]
  %v3101 = vld [vmem:[%s9 + $0x18] sm:$0xf]
  %v3102 = vld [vmem:[%s9 + $0x1c] sm:$0xf]
  %v3103 = vld [vmem:[%s9 + $0x20] sm:$0xf]
  %v3104 = vld [vmem:[%s9 + $0x24] sm:$0xf]
  %v3105 = vld [vmem:[%s9 + $0x28] sm:$0xf]
  %v3106 = vld [vmem:[%s9 + $0x2c] sm:$0xf]
  %v3107 = vld [vmem:[%s9 + $0x30] sm:$0xf]
  %v3108 = vld [vmem:[%s9 + $0x34] sm:$0xf]
  %v3109 = vld [vmem:[%s9 + $0x38] sm:$0xf]
  %v3110 = vld [vmem:[%s10] sm:$0x1]
  %v3112 = vperm.slane %v3110, 0
  %v3129 = vunpack.c.l.b16 %v3095
  %v3130 = vunpack.c.l.b16 %v3096
  %v3131 = vunpack.c.l.b16 %v3097
  %v3132 = vunpack.c.l.b16 %v3098
  %v3133 = vunpack.c.l.b16 %v3099
  %v3134 = vunpack.c.l.b16 %v3100
  %v3135 = vunpack.c.l.b16 %v3101
  %v3136 = vunpack.c.l.b16 %v3102
  %v3137 = vunpack.c.l.b16 %v3103
  %v3138 = vunpack.c.l.b16 %v3104
  %v3139 = vunpack.c.l.b16 %v3105
  %v3140 = vunpack.c.l.b16 %v3106
  %v3141 = vunpack.c.l.b16 %v3107
  %v3142 = vunpack.c.l.b16 %v3108
  %v3143 = vunpack.c.l.b16 %v3109
  %v3144 = vpack.c.b16 %v3130, %v3129
  %v3145 = vpack.c.b16 %v3132, %v3131
  %v3146 = vpack.c.b16 %v3134, %v3133
  %v3147 = vpack.c.b16 %v3136, %v3135
  %v3148 = vpack.c.b16 %v3138, %v3137
  %v3149 = vpack.c.b16 %v3140, %v3139
  %v3150 = vpack.c.b16 %v3142, %v3141
  %v3151 = vpack.c.b16 %v3143, %v3143
  %vm3159 = vcmask 982016
  %v3161 = vsel %vm3159, %v3094, 0
  %v3164 = vsel %vm1646, %v3151, 0
  %3166 = vmatpush.bf16.msra.mxu0 %v3164
  %3167 = vmatpush.bf16.msra.mxu0 %v3150
  %3168 = vmatpush.bf16.msra.mxu0 %v3149
  %3169 = vmatpush.bf16.msra.mxu0 %v3148
  %3170 = vmatpush.bf16.msra.mxu0 %v3147
  %3171 = vmatpush.bf16.msra.mxu0 %v3146
  %3172 = vmatpush.bf16.msra.mxu0 %v3145
  %3173 = vmatpush.bf16.msra.mxu0 %v3144
  %3174 = vmatmul.bf16.gmra.mxu0 %v3161
  %v3175 = vpop.f32.mrf.mxu0
  %v3176 = vadd.f32 %v3112, %v3175
  %v3177 = vpop.f32.mrf.mxu0
  %3178 = vdwg.mxu0
  %v3179 = vtanh.pop %v3176
  %v3180 = vpack.c.bf16 %v3179, %v3179
  %v3181 = vld [vmem:[%s11] sm:$0xf]
  %v3182 = vld [vmem:[%s11 + $0x4] sm:$0xf]
  %v3183 = vld [vmem:[%s11 + $0x8] sm:$0xf]
  %v3184 = vld [vmem:[%s11 + $0xc] sm:$0xf]
  %v3185 = vld [vmem:[%s11 + $0x10] sm:$0xf]
  %v3186 = vld [vmem:[%s11 + $0x14] sm:$0xf]
  %v3187 = vld [vmem:[%s11 + $0x18] sm:$0xf]
  %v3188 = vld [vmem:[%s11 + $0x1c] sm:$0xf]
  %v3189 = vld [vmem:[%s11 + $0x20] sm:$0xf]
  %v3190 = vld [vmem:[%s11 + $0x24] sm:$0xf]
  %v3191 = vld [vmem:[%s11 + $0x28] sm:$0x3]
  %v3192 = vld [vmem:[%s12] sm:$0x1]
  %v3194 = vperm.slane %v3192, 0
  %v3207 = vunpack.c.l.b16 %v3181
  %v3208 = vunpack.c.l.b16 %v3182
  %v3209 = vunpack.c.l.b16 %v3183
  %v3210 = vunpack.c.l.b16 %v3184
  %v3211 = vunpack.c.l.b16 %v3185
  %v3212 = vunpack.c.l.b16 %v3186
  %v3213 = vunpack.c.l.b16 %v3187
  %v3214 = vunpack.c.l.b16 %v3188
  %v3215 = vunpack.c.l.b16 %v3189
  %v3216 = vunpack.c.l.b16 %v3190
  %v3217 = vunpack.c.l.b16 %v3191
  %v3218 = vpack.c.b16 %v3208, %v3207
  %v3219 = vpack.c.b16 %v3210, %v3209
  %v3220 = vpack.c.b16 %v3212, %v3211
  %v3221 = vpack.c.b16 %v3214, %v3213
  %v3222 = vpack.c.b16 %v3216, %v3215
  %v3223 = vpack.c.b16 %v3217, %v3217
  %v3230 = vsel %vm1855, %v3180, 0
  %v3233 = vsel %vm1871, %v3223, 0
  %3235 = vmatpush.bf16.msra.mxu0 0
  %3236 = vmatpush.bf16.msra.mxu0 0
  %3237 = vmatpush.bf16.msra.mxu0 %v3233
  %3238 = vmatpush.bf16.msra.mxu0 %v3222
  %3239 = vmatpush.bf16.msra.mxu0 %v3221
  %3240 = vmatpush.bf16.msra.mxu0 %v3220
  %3241 = vmatpush.bf16.msra.mxu0 %v3219
  %3242 = vmatpush.bf16.msra.mxu0 %v3218
  %3243 = vmatmul.bf16.gmra.mxu0 %v3230
  %v3244 = vpop.f32.mrf.mxu0
  %v3245 = vadd.f32 %v3194, %v3244
  %v3246 = vpop.f32.mrf.mxu0
  %3247 = vdwg.mxu0
  %3248 = vst [vmem:[%s13] sm:$0xff] %v3245
  // Predicated region
  $region54: #{lenet5_forward.1} parent=0 // pred_check
    _
  $region55: #{lenet5_forward.1} parent=0 // pred_check_branch
    %3250 = sbr.rel (0) target = $region57
  $region56: #{lenet5_forward.1} parent=0 // pred_region
    _
  $region57: #{lenet5_forward.1} parent=0 // pred_fallthru
    _
  // Predicated region
  $region58: #{lenet5_forward.1} parent=0 // pred_check
    _
  $region59: #{lenet5_forward.1} parent=0 // pred_check_branch
    %3252 = sbr.rel (0) target = $region61
  $region60: #{lenet5_forward.1} parent=0 // pred_region
    _
  $region61: #{lenet5_forward.1} parent=0 // pred_fallthru
    _

</llo_original>
